<compile_context>
chip_gen: v7x
topology: tpu7x:2x2x1
jax: 0.10.0
libtpu: 0.0.40
codegen_flags: <defaults>
</compile_context>

<pallas_src>
import math
import functools

import jax
import jax.numpy as jnp
from jax.experimental import pallas as pl
from jax.experimental.pallas import tpu as pltpu


def _round_up(x, m):
    return ((x + m - 1) // m) * m


def _idr_mlp_kernel(x_ref, w_in_ref, w_mid_ref, w_last_ref, b_mid_ref, b_last_ref,
                    out_ref, *, n_linear, skip_slot, d_hidden, beta, inv_beta,
                    mid_dtype):
    """Fused IDR MLP forward over one (tile_n, d_in_pad) block of points.

    w_in_ref : (d_in_pad, (1+n_skip)*H) f32 -- [layer-0 | skip inputs-parts],
               with `scale` (and 1/sqrt(2) for skip blocks) pre-folded.
    w_mid_ref: (n_mid, H, H) bf16 stacked hidden weights (skip Wa already /sqrt2).
    w_last_ref: (H, d_out_pad) bf16 lane-dense last layer.
    b_mid_ref: (n_linear-1, 1, H) f32 stacked biases for layers 0..n_linear-2.
    All matmuls accumulate in f32 via preferred_element_type.
    """
    H = d_hidden

    def act(v):
        if beta == 0.0:
            return jnp.maximum(v, 0.0)
        # torch.nn.Softplus(beta, threshold=20): linear above threshold.
        z = beta * v
        return jnp.where(z > 20.0, v,
                         jnp.log1p(jnp.exp(jnp.minimum(z, 20.0))) * inv_beta)

    # One tiny (T, d_in_pad) @ (d_in_pad, (1+n_skip)*H) contraction covers both
    # the first layer and every skip layer's "inputs" part. K = d_in_pad (8),
    # so this is negligible on the MXU; kept f32 operands at default precision.
    feat = jnp.dot(x_ref[...], w_in_ref[...], preferred_element_type=jnp.float32)

    # Layer 0: bias + activation, then drop to bf16 once.
    x = act(feat[:, :H] + b_mid_ref[0]).astype(mid_dtype)

    # Hidden layers: bf16 x bf16 MXU matmuls with f32 accumulation.
    for l in range(1, n_linear - 1):
        y = jnp.dot(x, w_mid_ref[l - 1], preferred_element_type=jnp.float32)
        if l in skip_slot:
            # cat([x, inputs], -1)/sqrt(2) @ W == x @ (Wa/sqrt2) + inputs @ (Wb*scale/sqrt2)
            s = skip_slot[l]
            y = y + feat[:, (1 + s) * H:(2 + s) * H]
        x = act(y + b_mid_ref[l]).astype(mid_dtype)

    # Last layer: bf16 weights, f32 accumulation, lane-dense (128-col) store.
    out = jnp.dot(x, w_last_ref[...], preferred_element_type=jnp.float32) + b_last_ref[...]
    out_ref[...] = out.astype(out_ref.dtype)


class IDRNetPallas:
    def __init__(self, d_in=3, d_out=1, d_hidden=512, n_layers=8, skip_in=(4,),
                 beta=0, multires=0, bias=0.5, scale=1, first=True,
                 geometric_init=True, weight_norm=True, inside_outside=False,
                 mid_dtype=jnp.bfloat16, key=None):
        if multires > 0:
            # TODO(synk): positional embedder (get_embedder) not implemented; default config has multires=0.
            raise NotImplementedError("multires > 0 embedder not implemented")
        dims = [d_in] + [d_hidden for _ in range(n_layers)] + [d_out]
        self.num_layers = len(dims)
        self.n_linear = self.num_layers - 1
        self.skip_in = tuple(skip_in)
        self.scale = float(scale)
        self.beta = float(beta)
        self.inv_beta = (1.0 / float(beta)) if beta != 0 else 0.0
        self.d_in = d_in
        self.d_out = d_out
        self.d_hidden = d_hidden
        self.mid_dtype = mid_dtype
        assert d_hidden % 128 == 0, "d_hidden must be a multiple of 128"
        assert self.n_linear >= 3
        assert 0 not in self.skip_in and (self.n_linear - 1) not in self.skip_in
        self.d_in_pad = _round_up(d_in, 8)       # narrow input lane pad
        self.d_out_pad = _round_up(d_out, 128)   # lane-dense output store
        self._single_buffer_ok = None            # memo: Buffered(1) accepted?

        if key is None:
            key = jax.random.PRNGKey(0)

        inv_s2 = 1.0 / math.sqrt(2.0)
        self._raw = []        # (W[out,in], b[out]) exactly as the torch module holds them
        mid_w = []            # hidden (H, H) weights (transposed; skip Wa already /sqrt2)
        in_cols = [None]      # slot 0 = layer-0 columns; then one block per skip layer
        b_mid = []            # biases for layers 0..n_linear-2 (all width H)
        w_last = None
        b_last = None

        for l in range(self.n_linear):
            in_dim = dims[l]
            if l + 1 in self.skip_in:
                out_dim = dims[l + 1] - dims[0]
            else:
                out_dim = dims[l + 1]

            key, sub = jax.random.split(key)
            if geometric_init and (l != 0 or first is True):
                if l == self.n_linear - 1:
                    mean = math.sqrt(math.pi) / math.sqrt(dims[l])
                    if inside_outside:
                        w = -mean + 1e-6 * jax.random.normal(sub, (out_dim, in_dim), jnp.float32)
                        b = jnp.full((out_dim,), float(bias), jnp.float32)
                    else:
                        w = mean + 1e-6 * jax.random.normal(sub, (out_dim, in_dim), jnp.float32)
                        b = jnp.full((out_dim,), -float(bias), jnp.float32)
                else:
                    std = math.sqrt(2.0) / math.sqrt(out_dim)
                    w = std * jax.random.normal(sub, (out_dim, in_dim), jnp.float32)
                    b = jnp.zeros((out_dim,), jnp.float32)
            else:
                limit = 1.0 / math.sqrt(in_dim)
                kw, kb = jax.random.split(sub)
                w = jax.random.uniform(kw, (out_dim, in_dim), jnp.float32, -limit, limit)
                b = jax.random.uniform(kb, (out_dim,), jnp.float32, -limit, limit)

            # weight_norm(lin) is an identity reparametrization at init
            # (g = ||v|| per row => g * v / ||v|| == v), so fold it directly.
            self._raw.append((w, b))

            wt = jnp.transpose(w)    # (in_dim, out_dim)
            bb = b

            # Layer feeding a skip layer: pad its output width to d_hidden with
            # zero columns; the skip layer's Wa gets matching zero rows, so the
            # padded activations never contribute.
            if l + 1 in self.skip_in and out_dim != dims[l + 1]:
                pad = dims[l + 1] - out_dim
                wt = jnp.pad(wt, ((0, 0), (0, pad)))
                bb = jnp.pad(bb, (0, pad))

            if l == 0:
                # scale folded into the layer-0 weight block.
                in_cols[0] = jnp.pad(wt, ((0, self.d_in_pad - in_dim), (0, 0))) * self.scale
                b_mid.append(bb)
            elif l == self.n_linear - 1:
                w_last = jnp.pad(wt, ((0, 0), (0, self.d_out_pad - wt.shape[1])))
                b_last = jnp.pad(bb, (0, self.d_out_pad - bb.shape[0]))
            elif l in self.skip_in:
                # cat([x, inputs])/sqrt(2) @ W == x @ (Wa/sqrt2) + (scale*raw) @ (Wb/sqrt2)
                k1 = in_dim - d_in
                wa = jnp.pad(wt[:k1, :], ((0, in_dim - k1), (0, 0))) * inv_s2
                wb = jnp.pad(wt[k1:, :], ((0, self.d_in_pad - d_in), (0, 0))) * (self.scale * inv_s2)
                mid_w.append(wa)
                in_cols.append(wb)
                b_mid.append(bb)
            else:
                mid_w.append(wt)
                b_mid.append(bb)

        self.n_skip = len(in_cols) - 1
        # Merged "inputs" weights: layer 0 + every skip layer's inputs part.
        self.w_in = jnp.concatenate(in_cols, axis=1).astype(jnp.float32)      # (d_in_pad, (1+n_skip)*H)
        # Stack the (H, H) hidden weights into one bf16 operand (one DMA, half
        # the VMEM of f32; MXU accumulates in f32).
        self.w_mid = jnp.stack(mid_w, axis=0).astype(mid_dtype)               # (n_mid, H, H)
        self.w_last = w_last.astype(mid_dtype)                                # (H, d_out_pad)
        self.b_mid = jnp.stack([x.reshape(1, -1) for x in b_mid], axis=0)     # (n_linear-1, 1, H)
        self.b_last = b_last.reshape(1, -1).astype(jnp.float32)               # (1, d_out_pad)

        # Map skip layer index -> its column block slot in w_in (layer order).
        self.skip_slot = {}
        slot = 0
        for l in range(1, self.n_linear - 1):
            if l in self.skip_in:
                self.skip_slot[l] = slot
                slot += 1

    # ---- Pallas forward -------------------------------------------------------
    def _run(self, xp, tile_n, single_buffer_weights):
        n_pad = xp.shape[0]

        def const_spec(shape):
            nd = len(shape)
            idx = lambda i, _nd=nd: (0,) * _nd
            if single_buffer_weights:
                # Constant index_map => single-buffer: halves resident weight
                # VMEM and drops redundant descriptors.
                return pl.BlockSpec(shape, idx, pipeline_mode=pl.Buffered(1))
            return pl.BlockSpec(shape, idx)

        in_specs = [
            pl.BlockSpec((tile_n, self.d_in_pad), lambda i: (i, 0)),
            const_spec(self.w_in.shape),
            const_spec(self.w_mid.shape),
            const_spec(self.w_last.shape),
            const_spec(self.b_mid.shape),
            const_spec(self.b_last.shape),
        ]

        kernel = functools.partial(
            _idr_mlp_kernel,
            n_linear=self.n_linear,
            skip_slot=self.skip_slot,
            d_hidden=self.d_hidden,
            beta=self.beta,
            inv_beta=self.inv_beta,
            mid_dtype=self.mid_dtype,
        )
        # 48 MiB scoped VMEM: above the v5e/v6e scoped defaults (big point
        # tiles + weights), and <= 48 MiB so v7x (64 MiB physical per
        # TensorCore) keeps headroom for compiler-internal scratch.
        return pl.pallas_call(
            kernel,
            out_shape=jax.ShapeDtypeStruct((n_pad, self.d_out_pad), jnp.float32),
            grid=(n_pad // tile_n,),
            in_specs=in_specs,
            out_specs=pl.BlockSpec((tile_n, self.d_out_pad), lambda i: (i, 0)),
            compiler_params=pltpu.CompilerParams(
                dimension_semantics=("parallel",),
                vmem_limit_bytes=48 * 1024 * 1024,
            ),
        )(xp, self.w_in, self.w_mid, self.w_last, self.b_mid, self.b_last)

    def _pallas_forward(self, xp, tile_n):
        if self._single_buffer_ok is None:
            try:
                out = jax.block_until_ready(self._run(xp, tile_n, True))
                self._single_buffer_ok = True
                return out
            except Exception:
                # pl.Buffered(1) rejected by this jax/Mosaic version; fall back
                # to default double-buffered weight operands (correctness first).
                self._single_buffer_ok = False
        return self._run(xp, tile_n, self._single_buffer_ok)

    def __call__(self, inputs, tile_n=None):
        inputs = jnp.asarray(inputs, jnp.float32)
        if inputs.shape[0] == 1:                 # matches torch: squeeze batch of 1
            inputs = jnp.squeeze(inputs, axis=0)
        n, din = inputs.shape
        assert din == self.d_in
        if tile_n is None:
            # Large point tiles amortize the ~0.35us/step pipeline overhead and
            # keep the MXU fed; 2048 rows keep the working set well inside the
            # 48 MiB VMEM budget on every generation (incl. v7x 64 MiB/TC).
            tile_n = min(2048, _round_up(n, 128))
            # Guarantee >= 2 grid steps when there is enough work so megacore
            # sharding (v7x: 2 TensorCores) never leaves a core idle.
            if n > 128 and _round_up(n, tile_n) // tile_n < 2:
                tile_n = _round_up((n + 1) // 2, 128)
        n_pad = _round_up(n, tile_n)
        xp = jnp.pad(inputs, ((0, n_pad - n), (0, self.d_in_pad - din)))
        # NOTE: for fused pipelines, prefer consuming the padded (n_pad, 128)
        # kernel output (column 0) under the same jit instead of this slice,
        # which otherwise becomes a standalone HBM-bound op.
        out = self._pallas_forward(xp, tile_n)[:n, :self.d_out]
        if inputs.shape[0] != 1:                 # matches torch: re-add leading batch dim
            out = out[None, ...]
        return out

    # ---- plain-JAX f32 reference (mirrors the torch forward) ------------------
    def reference_forward(self, inputs):
        inputs = jnp.asarray(inputs, jnp.float32)
        if inputs.shape[0] == 1:
            inputs = jnp.squeeze(inputs, axis=0)
        inputs = inputs * self.scale
        x = inputs
        for l in range(self.n_linear):
            w, b = self._raw[l]
            if l in self.skip_in:
                x = jnp.concatenate([x, inputs], axis=-1) / math.sqrt(2.0)
            x = x @ w.T + b
            if l < self.n_linear - 1:
                if self.beta == 0.0:
                    x = jnp.maximum(x, 0.0)
                else:
                    z = self.beta * x
                    x = jnp.where(z > 20.0, x,
                                  jnp.log1p(jnp.exp(jnp.minimum(z, 20.0))) / self.beta)
        if inputs.shape[0] != 1:
            x = x[None, ...]
        return x


if __name__ == "__main__":
    # Small, deterministic example: N=200 points of 3-D coordinates,
    # hidden width 128, 8 hidden layers, skip connection at layer 4, ReLU.
    net = IDRNetPallas(d_in=3, d_out=1, d_hidden=128, n_layers=8, skip_in=(4,),
                       beta=0, multires=0, bias=0.5, scale=1,
                       key=jax.random.PRNGKey(7))

    x = jax.random.normal(jax.random.PRNGKey(0), (1, 200, 3), jnp.float32)

    out = jax.block_until_ready(net(x))
    assert out.shape == (1, 200, 1), out.shape
    assert bool(jnp.all(jnp.isfinite(out)))

    ref = jax.block_until_ready(net.reference_forward(x))
    max_err = float(jnp.max(jnp.abs(out - ref)))
    ref_scale = float(jnp.max(jnp.abs(ref)))
    # Hidden weights AND activations run in bf16 (f32 accumulation): allow
    # bf16-level error relative to the f32 reference.
    assert max_err <= 1e-2 + 4e-2 * ref_scale, (max_err, ref_scale)

    print("KERNEL_OK")
</pallas_src>

<mosaic_0001>
module attributes {stable_mosaic.version = 11 : i64} {
  func.func @_idr_mlp_kernel(%arg0: i32, %arg1: memref<128x8xf32, #tpu.memory_space<vmem>>, %arg2: memref<8x256xf32, #tpu.memory_space<vmem>>, %arg3: memref<7x128x128xbf16, #tpu.memory_space<vmem>>, %arg4: memref<128x128xbf16, #tpu.memory_space<vmem>>, %arg5: memref<8x1x128xf32, #tpu.memory_space<vmem>>, %arg6: memref<1x128xf32, #tpu.memory_space<vmem>>, %arg7: memref<128x128xf32, #tpu.memory_space<vmem>>) attributes {dimension_semantics = [#tpu.dimension_semantics<parallel>], iteration_bounds = array<i64: 2>, scalar_prefetch = 0 : i64, scratch_operands = 0 : i64, tpu.core_type = #tpu.core_type<tc>, window_params = [{transform_indices = @transform_0, window_bounds = array<i64: 128, 8>}, {pipeline_mode = #tpu.pipeline_mode<synchronous>, transform_indices = @transform_1, window_bounds = array<i64: 8, 256>}, {pipeline_mode = #tpu.pipeline_mode<synchronous>, transform_indices = @transform_2, window_bounds = array<i64: 7, 128, 128>}, {pipeline_mode = #tpu.pipeline_mode<synchronous>, transform_indices = @transform_3, window_bounds = array<i64: 128, 128>}, {pipeline_mode = #tpu.pipeline_mode<synchronous>, transform_indices = @transform_4, window_bounds = array<i64: 8, 1, 128>}, {pipeline_mode = #tpu.pipeline_mode<synchronous>, transform_indices = @transform_5, window_bounds = array<i64: 1, 128>}, {transform_indices = @transform_6, window_bounds = array<i64: 128, 128>}]} {
    %c0 = arith.constant 0 : index
    %c0_0 = arith.constant 0 : index
    %0 = vector.load %arg1[%c0, %c0_0] : memref<128x8xf32, #tpu.memory_space<vmem>>, vector<128x8xf32>
    %c0_1 = arith.constant 0 : index
    %c0_2 = arith.constant 0 : index
    %1 = vector.load %arg2[%c0_1, %c0_2] : memref<8x256xf32, #tpu.memory_space<vmem>>, vector<8x256xf32>
    %cst = arith.constant dense<0.000000e+00> : vector<128x256xf32>
    %2 = tpu.matmul %0, %1, %cst {dimension_numbers = #tpu.dot_dimension_numbers<[1], [0], [0], [1], [0, 0, 1, 1], [], []>} : vector<128x8xf32>, vector<8x256xf32>, vector<128x256xf32> -> vector<128x256xf32>
    %3 = vector.extract_strided_slice %2 {offsets = [0, 0], sizes = [128, 128], strides = [1, 1]} : vector<128x256xf32> to vector<128x128xf32>
    %c0_3 = arith.constant 0 : index
    %c0_4 = arith.constant 0 : index
    %c0_5 = arith.constant 0 : index
    %4 = vector.load %arg5[%c0_3, %c0_4, %c0_5] : memref<8x1x128xf32, #tpu.memory_space<vmem>>, vector<1x1x128xf32>
    %5 = vector.shape_cast %4 : vector<1x1x128xf32> to vector<1x128xf32>
    %6 = vector.broadcast %5 : vector<1x128xf32> to vector<128x128xf32>
    %7 = arith.addf %3, %6 : vector<128x128xf32>
    %cst_6 = arith.constant 0.000000e+00 : f32
    %8 = vector.broadcast %cst_6 : f32 to vector<128x128xf32>
    %9 = arith.maximumf %7, %8 : vector<128x128xf32>
    %10 = arith.truncf %9 : vector<128x128xf32> to vector<128x128xbf16>
    %c0_7 = arith.constant 0 : index
    %c0_8 = arith.constant 0 : index
    %c0_9 = arith.constant 0 : index
    %11 = vector.load %arg3[%c0_7, %c0_8, %c0_9] : memref<7x128x128xbf16, #tpu.memory_space<vmem>>, vector<1x128x128xbf16>
    %12 = vector.shape_cast %11 : vector<1x128x128xbf16> to vector<128x128xbf16>
    %cst_10 = arith.constant dense<0.000000e+00> : vector<128x128xf32>
    %13 = tpu.matmul %10, %12, %cst_10 {dimension_numbers = #tpu.dot_dimension_numbers<[1], [0], [0], [1], [0, 0, 1, 1], [], []>} : vector<128x128xbf16>, vector<128x128xbf16>, vector<128x128xf32> -> vector<128x128xf32>
    %c1 = arith.constant 1 : index
    %c0_11 = arith.constant 0 : index
    %c0_12 = arith.constant 0 : index
    %14 = vector.load %arg5[%c1, %c0_11, %c0_12] : memref<8x1x128xf32, #tpu.memory_space<vmem>>, vector<1x1x128xf32>
    %15 = vector.shape_cast %14 : vector<1x1x128xf32> to vector<1x128xf32>
    %16 = vector.broadcast %15 : vector<1x128xf32> to vector<128x128xf32>
    %17 = arith.addf %13, %16 : vector<128x128xf32>
    %cst_13 = arith.constant 0.000000e+00 : f32
    %18 = vector.broadcast %cst_13 : f32 to vector<128x128xf32>
    %19 = arith.maximumf %17, %18 : vector<128x128xf32>
    %20 = arith.truncf %19 : vector<128x128xf32> to vector<128x128xbf16>
    %c1_14 = arith.constant 1 : index
    %c0_15 = arith.constant 0 : index
    %c0_16 = arith.constant 0 : index
    %21 = vector.load %arg3[%c1_14, %c0_15, %c0_16] : memref<7x128x128xbf16, #tpu.memory_space<vmem>>, vector<1x128x128xbf16>
    %22 = vector.shape_cast %21 : vector<1x128x128xbf16> to vector<128x128xbf16>
    %cst_17 = arith.constant dense<0.000000e+00> : vector<128x128xf32>
    %23 = tpu.matmul %20, %22, %cst_17 {dimension_numbers = #tpu.dot_dimension_numbers<[1], [0], [0], [1], [0, 0, 1, 1], [], []>} : vector<128x128xbf16>, vector<128x128xbf16>, vector<128x128xf32> -> vector<128x128xf32>
    %c2 = arith.constant 2 : index
    %c0_18 = arith.constant 0 : index
    %c0_19 = arith.constant 0 : index
    %24 = vector.load %arg5[%c2, %c0_18, %c0_19] : memref<8x1x128xf32, #tpu.memory_space<vmem>>, vector<1x1x128xf32>
    %25 = vector.shape_cast %24 : vector<1x1x128xf32> to vector<1x128xf32>
    %26 = vector.broadcast %25 : vector<1x128xf32> to vector<128x128xf32>
    %27 = arith.addf %23, %26 : vector<128x128xf32>
    %cst_20 = arith.constant 0.000000e+00 : f32
    %28 = vector.broadcast %cst_20 : f32 to vector<128x128xf32>
    %29 = arith.maximumf %27, %28 : vector<128x128xf32>
    %30 = arith.truncf %29 : vector<128x128xf32> to vector<128x128xbf16>
    %c2_21 = arith.constant 2 : index
    %c0_22 = arith.constant 0 : index
    %c0_23 = arith.constant 0 : index
    %31 = vector.load %arg3[%c2_21, %c0_22, %c0_23] : memref<7x128x128xbf16, #tpu.memory_space<vmem>>, vector<1x128x128xbf16>
    %32 = vector.shape_cast %31 : vector<1x128x128xbf16> to vector<128x128xbf16>
    %cst_24 = arith.constant dense<0.000000e+00> : vector<128x128xf32>
    %33 = tpu.matmul %30, %32, %cst_24 {dimension_numbers = #tpu.dot_dimension_numbers<[1], [0], [0], [1], [0, 0, 1, 1], [], []>} : vector<128x128xbf16>, vector<128x128xbf16>, vector<128x128xf32> -> vector<128x128xf32>
    %c3 = arith.constant 3 : index
    %c0_25 = arith.constant 0 : index
    %c0_26 = arith.constant 0 : index
    %34 = vector.load %arg5[%c3, %c0_25, %c0_26] : memref<8x1x128xf32, #tpu.memory_space<vmem>>, vector<1x1x128xf32>
    %35 = vector.shape_cast %34 : vector<1x1x128xf32> to vector<1x128xf32>
    %36 = vector.broadcast %35 : vector<1x128xf32> to vector<128x128xf32>
    %37 = arith.addf %33, %36 : vector<128x128xf32>
    %cst_27 = arith.constant 0.000000e+00 : f32
    %38 = vector.broadcast %cst_27 : f32 to vector<128x128xf32>
    %39 = arith.maximumf %37, %38 : vector<128x128xf32>
    %40 = arith.truncf %39 : vector<128x128xf32> to vector<128x128xbf16>
    %c3_28 = arith.constant 3 : index
    %c0_29 = arith.constant 0 : index
    %c0_30 = arith.constant 0 : index
    %41 = vector.load %arg3[%c3_28, %c0_29, %c0_30] : memref<7x128x128xbf16, #tpu.memory_space<vmem>>, vector<1x128x128xbf16>
    %42 = vector.shape_cast %41 : vector<1x128x128xbf16> to vector<128x128xbf16>
    %cst_31 = arith.constant dense<0.000000e+00> : vector<128x128xf32>
    %43 = tpu.matmul %40, %42, %cst_31 {dimension_numbers = #tpu.dot_dimension_numbers<[1], [0], [0], [1], [0, 0, 1, 1], [], []>} : vector<128x128xbf16>, vector<128x128xbf16>, vector<128x128xf32> -> vector<128x128xf32>
    %44 = vector.extract_strided_slice %2 {offsets = [0, 128], sizes = [128, 128], strides = [1, 1]} : vector<128x256xf32> to vector<128x128xf32>
    %45 = arith.addf %43, %44 : vector<128x128xf32>
    %c4 = arith.constant 4 : index
    %c0_32 = arith.constant 0 : index
    %c0_33 = arith.constant 0 : index
    %46 = vector.load %arg5[%c4, %c0_32, %c0_33] : memref<8x1x128xf32, #tpu.memory_space<vmem>>, vector<1x1x128xf32>
    %47 = vector.shape_cast %46 : vector<1x1x128xf32> to vector<1x128xf32>
    %48 = vector.broadcast %47 : vector<1x128xf32> to vector<128x128xf32>
    %49 = arith.addf %45, %48 : vector<128x128xf32>
    %cst_34 = arith.constant 0.000000e+00 : f32
    %50 = vector.broadcast %cst_34 : f32 to vector<128x128xf32>
    %51 = arith.maximumf %49, %50 : vector<128x128xf32>
    %52 = arith.truncf %51 : vector<128x128xf32> to vector<128x128xbf16>
    %c4_35 = arith.constant 4 : index
    %c0_36 = arith.constant 0 : index
    %c0_37 = arith.constant 0 : index
    %53 = vector.load %arg3[%c4_35, %c0_36, %c0_37] : memref<7x128x128xbf16, #tpu.memory_space<vmem>>, vector<1x128x128xbf16>
    %54 = vector.shape_cast %53 : vector<1x128x128xbf16> to vector<128x128xbf16>
    %cst_38 = arith.constant dense<0.000000e+00> : vector<128x128xf32>
    %55 = tpu.matmul %52, %54, %cst_38 {dimension_numbers = #tpu.dot_dimension_numbers<[1], [0], [0], [1], [0, 0, 1, 1], [], []>} : vector<128x128xbf16>, vector<128x128xbf16>, vector<128x128xf32> -> vector<128x128xf32>
    %c5 = arith.constant 5 : index
    %c0_39 = arith.constant 0 : index
    %c0_40 = arith.constant 0 : index
    %56 = vector.load %arg5[%c5, %c0_39, %c0_40] : memref<8x1x128xf32, #tpu.memory_space<vmem>>, vector<1x1x128xf32>
    %57 = vector.shape_cast %56 : vector<1x1x128xf32> to vector<1x128xf32>
    %58 = vector.broadcast %57 : vector<1x128xf32> to vector<128x128xf32>
    %59 = arith.addf %55, %58 : vector<128x128xf32>
    %cst_41 = arith.constant 0.000000e+00 : f32
    %60 = vector.broadcast %cst_41 : f32 to vector<128x128xf32>
    %61 = arith.maximumf %59, %60 : vector<128x128xf32>
    %62 = arith.truncf %61 : vector<128x128xf32> to vector<128x128xbf16>
    %c5_42 = arith.constant 5 : index
    %c0_43 = arith.constant 0 : index
    %c0_44 = arith.constant 0 : index
    %63 = vector.load %arg3[%c5_42, %c0_43, %c0_44] : memref<7x128x128xbf16, #tpu.memory_space<vmem>>, vector<1x128x128xbf16>
    %64 = vector.shape_cast %63 : vector<1x128x128xbf16> to vector<128x128xbf16>
    %cst_45 = arith.constant dense<0.000000e+00> : vector<128x128xf32>
    %65 = tpu.matmul %62, %64, %cst_45 {dimension_numbers = #tpu.dot_dimension_numbers<[1], [0], [0], [1], [0, 0, 1, 1], [], []>} : vector<128x128xbf16>, vector<128x128xbf16>, vector<128x128xf32> -> vector<128x128xf32>
    %c6 = arith.constant 6 : index
    %c0_46 = arith.constant 0 : index
    %c0_47 = arith.constant 0 : index
    %66 = vector.load %arg5[%c6, %c0_46, %c0_47] : memref<8x1x128xf32, #tpu.memory_space<vmem>>, vector<1x1x128xf32>
    %67 = vector.shape_cast %66 : vector<1x1x128xf32> to vector<1x128xf32>
    %68 = vector.broadcast %67 : vector<1x128xf32> to vector<128x128xf32>
    %69 = arith.addf %65, %68 : vector<128x128xf32>
    %cst_48 = arith.constant 0.000000e+00 : f32
    %70 = vector.broadcast %cst_48 : f32 to vector<128x128xf32>
    %71 = arith.maximumf %69, %70 : vector<128x128xf32>
    %72 = arith.truncf %71 : vector<128x128xf32> to vector<128x128xbf16>
    %c6_49 = arith.constant 6 : index
    %c0_50 = arith.constant 0 : index
    %c0_51 = arith.constant 0 : index
    %73 = vector.load %arg3[%c6_49, %c0_50, %c0_51] : memref<7x128x128xbf16, #tpu.memory_space<vmem>>, vector<1x128x128xbf16>
    %74 = vector.shape_cast %73 : vector<1x128x128xbf16> to vector<128x128xbf16>
    %cst_52 = arith.constant dense<0.000000e+00> : vector<128x128xf32>
    %75 = tpu.matmul %72, %74, %cst_52 {dimension_numbers = #tpu.dot_dimension_numbers<[1], [0], [0], [1], [0, 0, 1, 1], [], []>} : vector<128x128xbf16>, vector<128x128xbf16>, vector<128x128xf32> -> vector<128x128xf32>
    %c7 = arith.constant 7 : index
    %c0_53 = arith.constant 0 : index
    %c0_54 = arith.constant 0 : index
    %76 = vector.load %arg5[%c7, %c0_53, %c0_54] : memref<8x1x128xf32, #tpu.memory_space<vmem>>, vector<1x1x128xf32>
    %77 = vector.shape_cast %76 : vector<1x1x128xf32> to vector<1x128xf32>
    %78 = vector.broadcast %77 : vector<1x128xf32> to vector<128x128xf32>
    %79 = arith.addf %75, %78 : vector<128x128xf32>
    %cst_55 = arith.constant 0.000000e+00 : f32
    %80 = vector.broadcast %cst_55 : f32 to vector<128x128xf32>
    %81 = arith.maximumf %79, %80 : vector<128x128xf32>
    %82 = arith.truncf %81 : vector<128x128xf32> to vector<128x128xbf16>
    %c0_56 = arith.constant 0 : index
    %c0_57 = arith.constant 0 : index
    %83 = vector.load %arg4[%c0_56, %c0_57] : memref<128x128xbf16, #tpu.memory_space<vmem>>, vector<128x128xbf16>
    %cst_58 = arith.constant dense<0.000000e+00> : vector<128x128xf32>
    %84 = tpu.matmul %82, %83, %cst_58 {dimension_numbers = #tpu.dot_dimension_numbers<[1], [0], [0], [1], [0, 0, 1, 1], [], []>} : vector<128x128xbf16>, vector<128x128xbf16>, vector<128x128xf32> -> vector<128x128xf32>
    %c0_59 = arith.constant 0 : index
    %c0_60 = arith.constant 0 : index
    %85 = vector.load %arg6[%c0_59, %c0_60] : memref<1x128xf32, #tpu.memory_space<vmem>>, vector<1x128xf32>
    %86 = vector.broadcast %85 : vector<1x128xf32> to vector<128x128xf32>
    %87 = arith.addf %84, %86 : vector<128x128xf32>
    %c0_61 = arith.constant 0 : index
    %c0_62 = arith.constant 0 : index
    %88 = vector.load %arg7[%c0_61, %c0_62] : memref<128x128xf32, #tpu.memory_space<vmem>>, vector<128x128xf32>
    tpu.vector_store %arg7[%c0_61, %c0_62], %87 {strides = array<i32>} : memref<128x128xf32, #tpu.memory_space<vmem>>, vector<128x128xf32>,
    return
  }
  func.func @transform_0(%arg0: i32) -> (i32, i32) {
    %c0_i32 = arith.constant 0 : i32
    %c0_i32_0 = arith.constant 0 : i32
    return %arg0, %c0_i32 : i32, i32
  }
  func.func @transform_1(%arg0: i32) -> (i32, i32) {
    %c0_i32 = arith.constant 0 : i32
    %c0_i32_0 = arith.constant 0 : i32
    %c0_i32_1 = arith.constant 0 : i32
    return %c0_i32, %c0_i32_0 : i32, i32
  }
  func.func @transform_2(%arg0: i32) -> (i32, i32, i32) {
    %c0_i32 = arith.constant 0 : i32
    %c0_i32_0 = arith.constant 0 : i32
    %c0_i32_1 = arith.constant 0 : i32
    %c0_i32_2 = arith.constant 0 : i32
    return %c0_i32, %c0_i32_0, %c0_i32_1 : i32, i32, i32
  }
  func.func @transform_3(%arg0: i32) -> (i32, i32) {
    %c0_i32 = arith.constant 0 : i32
    %c0_i32_0 = arith.constant 0 : i32
    %c0_i32_1 = arith.constant 0 : i32
    return %c0_i32, %c0_i32_0 : i32, i32
  }
  func.func @transform_4(%arg0: i32) -> (i32, i32, i32) {
    %c0_i32 = arith.constant 0 : i32
    %c0_i32_0 = arith.constant 0 : i32
    %c0_i32_1 = arith.constant 0 : i32
    %c0_i32_2 = arith.constant 0 : i32
    return %c0_i32, %c0_i32_0, %c0_i32_1 : i32, i32, i32
  }
  func.func @transform_5(%arg0: i32) -> (i32, i32) {
    %c0_i32 = arith.constant 0 : i32
    %c0_i32_0 = arith.constant 0 : i32
    %c0_i32_1 = arith.constant 0 : i32
    return %c0_i32, %c0_i32_0 : i32, i32
  }
  func.func @transform_6(%arg0: i32) -> (i32, i32) {
    %c0_i32 = arith.constant 0 : i32
    %c0_i32_0 = arith.constant 0 : i32
    return %arg0, %c0_i32 : i32, i32
  }
}

module attributes {stable_mosaic.version = 11 : i64} {
  func.func @_idr_mlp_kernel(%arg0: i32, %arg1: memref<128x8xf32, #tpu.memory_space<vmem>>, %arg2: memref<8x256xf32, #tpu.memory_space<vmem>>, %arg3: memref<7x128x128xbf16, #tpu.memory_space<vmem>>, %arg4: memref<128x128xbf16, #tpu.memory_space<vmem>>, %arg5: memref<8x1x128xf32, #tpu.memory_space<vmem>>, %arg6: memref<1x128xf32, #tpu.memory_space<vmem>>, %arg7: memref<128x128xf32, #tpu.memory_space<vmem>>) attributes {dimension_semantics = [#tpu.dimension_semantics<parallel>], iteration_bounds = array<i64: 2>, scalar_prefetch = 0 : i64, scratch_operands = 0 : i64, tpu.core_type = #tpu.core_type<tc>, window_params = [{transform_indices = @transform_0, window_bounds = array<i64: 128, 8>}, {pipeline_mode = #tpu.pipeline_mode<synchronous>, transform_indices = @transform_1, window_bounds = array<i64: 8, 256>}, {pipeline_mode = #tpu.pipeline_mode<synchronous>, transform_indices = @transform_2, window_bounds = array<i64: 7, 128, 128>}, {pipeline_mode = #tpu.pipeline_mode<synchronous>, transform_indices = @transform_3, window_bounds = array<i64: 128, 128>}, {pipeline_mode = #tpu.pipeline_mode<synchronous>, transform_indices = @transform_4, window_bounds = array<i64: 8, 1, 128>}, {pipeline_mode = #tpu.pipeline_mode<synchronous>, transform_indices = @transform_5, window_bounds = array<i64: 1, 128>}, {transform_indices = @transform_6, window_bounds = array<i64: 128, 128>}]} {
    %c0 = arith.constant 0 : index
    %c0_0 = arith.constant 0 : index
    %0 = vector.load %arg1[%c0, %c0_0] : memref<128x8xf32, #tpu.memory_space<vmem>>, vector<128x8xf32>
    %c0_1 = arith.constant 0 : index
    %c0_2 = arith.constant 0 : index
    %1 = vector.load %arg2[%c0_1, %c0_2] : memref<8x256xf32, #tpu.memory_space<vmem>>, vector<8x256xf32>
    %cst = arith.constant dense<0.000000e+00> : vector<128x256xf32>
    %2 = tpu.matmul %0, %1, %cst {dimension_numbers = #tpu.dot_dimension_numbers<[1], [0], [0], [1], [0, 0, 1, 1], [], []>} : vector<128x8xf32>, vector<8x256xf32>, vector<128x256xf32> -> vector<128x256xf32>
    %3 = vector.extract_strided_slice %2 {offsets = [0, 0], sizes = [128, 128], strides = [1, 1]} : vector<128x256xf32> to vector<128x128xf32>
    %c0_3 = arith.constant 0 : index
    %c0_4 = arith.constant 0 : index
    %c0_5 = arith.constant 0 : index
    %4 = vector.load %arg5[%c0_3, %c0_4, %c0_5] : memref<8x1x128xf32, #tpu.memory_space<vmem>>, vector<1x1x128xf32>
    %5 = vector.shape_cast %4 : vector<1x1x128xf32> to vector<1x128xf32>
    %6 = vector.broadcast %5 : vector<1x128xf32> to vector<128x128xf32>
    %7 = arith.addf %3, %6 : vector<128x128xf32>
    %cst_6 = arith.constant 0.000000e+00 : f32
    %8 = vector.broadcast %cst_6 : f32 to vector<128x128xf32>
    %9 = arith.maximumf %7, %8 : vector<128x128xf32>
    %10 = arith.truncf %9 : vector<128x128xf32> to vector<128x128xbf16>
    %c0_7 = arith.constant 0 : index
    %c0_8 = arith.constant 0 : index
    %c0_9 = arith.constant 0 : index
    %11 = vector.load %arg3[%c0_7, %c0_8, %c0_9] : memref<7x128x128xbf16, #tpu.memory_space<vmem>>, vector<1x128x128xbf16>
    %12 = vector.shape_cast %11 : vector<1x128x128xbf16> to vector<128x128xbf16>
    %cst_10 = arith.constant dense<0.000000e+00> : vector<128x128xf32>
    %13 = tpu.matmul %10, %12, %cst_10 {dimension_numbers = #tpu.dot_dimension_numbers<[1], [0], [0], [1], [0, 0, 1, 1], [], []>} : vector<128x128xbf16>, vector<128x128xbf16>, vector<128x128xf32> -> vector<128x128xf32>
    %c1 = arith.constant 1 : index
    %c0_11 = arith.constant 0 : index
    %c0_12 = arith.constant 0 : index
    %14 = vector.load %arg5[%c1, %c0_11, %c0_12] : memref<8x1x128xf32, #tpu.memory_space<vmem>>, vector<1x1x128xf32>
    %15 = vector.shape_cast %14 : vector<1x1x128xf32> to vector<1x128xf32>
    %16 = vector.broadcast %15 : vector<1x128xf32> to vector<128x128xf32>
    %17 = arith.addf %13, %16 : vector<128x128xf32>
    %cst_13 = arith.constant 0.000000e+00 : f32
    %18 = vector.broadcast %cst_13 : f32 to vector<128x128xf32>
    %19 = arith.maximumf %17, %18 : vector<128x128xf32>
    %20 = arith.truncf %19 : vector<128x128xf32> to vector<128x128xbf16>
    %c1_14 = arith.constant 1 : index
    %c0_15 = arith.constant 0 : index
    %c0_16 = arith.constant 0 : index
    %21 = vector.load %arg3[%c1_14, %c0_15, %c0_16] : memref<7x128x128xbf16, #tpu.memory_space<vmem>>, vector<1x128x128xbf16>
    %22 = vector.shape_cast %21 : vector<1x128x128xbf16> to vector<128x128xbf16>
    %cst_17 = arith.constant dense<0.000000e+00> : vector<128x128xf32>
    %23 = tpu.matmul %20, %22, %cst_17 {dimension_numbers = #tpu.dot_dimension_numbers<[1], [0], [0], [1], [0, 0, 1, 1], [], []>} : vector<128x128xbf16>, vector<128x128xbf16>, vector<128x128xf32> -> vector<128x128xf32>
    %c2 = arith.constant 2 : index
    %c0_18 = arith.constant 0 : index
    %c0_19 = arith.constant 0 : index
    %24 = vector.load %arg5[%c2, %c0_18, %c0_19] : memref<8x1x128xf32, #tpu.memory_space<vmem>>, vector<1x1x128xf32>
    %25 = vector.shape_cast %24 : vector<1x1x128xf32> to vector<1x128xf32>
    %26 = vector.broadcast %25 : vector<1x128xf32> to vector<128x128xf32>
    %27 = arith.addf %23, %26 : vector<128x128xf32>
    %cst_20 = arith.constant 0.000000e+00 : f32
    %28 = vector.broadcast %cst_20 : f32 to vector<128x128xf32>
    %29 = arith.maximumf %27, %28 : vector<128x128xf32>
    %30 = arith.truncf %29 : vector<128x128xf32> to vector<128x128xbf16>
    %c2_21 = arith.constant 2 : index
    %c0_22 = arith.constant 0 : index
    %c0_23 = arith.constant 0 : index
    %31 = vector.load %arg3[%c2_21, %c0_22, %c0_23] : memref<7x128x128xbf16, #tpu.memory_space<vmem>>, vector<1x128x128xbf16>
    %32 = vector.shape_cast %31 : vector<1x128x128xbf16> to vector<128x128xbf16>
    %cst_24 = arith.constant dense<0.000000e+00> : vector<128x128xf32>
    %33 = tpu.matmul %30, %32, %cst_24 {dimension_numbers = #tpu.dot_dimension_numbers<[1], [0], [0], [1], [0, 0, 1, 1], [], []>} : vector<128x128xbf16>, vector<128x128xbf16>, vector<128x128xf32> -> vector<128x128xf32>
    %c3 = arith.constant 3 : index
    %c0_25 = arith.constant 0 : index
    %c0_26 = arith.constant 0 : index
    %34 = vector.load %arg5[%c3, %c0_25, %c0_26] : memref<8x1x128xf32, #tpu.memory_space<vmem>>, vector<1x1x128xf32>
    %35 = vector.shape_cast %34 : vector<1x1x128xf32> to vector<1x128xf32>
    %36 = vector.broadcast %35 : vector<1x128xf32> to vector<128x128xf32>
    %37 = arith.addf %33, %36 : vector<128x128xf32>
    %cst_27 = arith.constant 0.000000e+00 : f32
    %38 = vector.broadcast %cst_27 : f32 to vector<128x128xf32>
    %39 = arith.maximumf %37, %38 : vector<128x128xf32>
    %40 = arith.truncf %39 : vector<128x128xf32> to vector<128x128xbf16>
    %c3_28 = arith.constant 3 : index
    %c0_29 = arith.constant 0 : index
    %c0_30 = arith.constant 0 : index
    %41 = vector.load %arg3[%c3_28, %c0_29, %c0_30] : memref<7x128x128xbf16, #tpu.memory_space<vmem>>, vector<1x128x128xbf16>
    %42 = vector.shape_cast %41 : vector<1x128x128xbf16> to vector<128x128xbf16>
    %cst_31 = arith.constant dense<0.000000e+00> : vector<128x128xf32>
    %43 = tpu.matmul %40, %42, %cst_31 {dimension_numbers = #tpu.dot_dimension_numbers<[1], [0], [0], [1], [0, 0, 1, 1], [], []>} : vector<128x128xbf16>, vector<128x128xbf16>, vector<128x128xf32> -> vector<128x128xf32>
    %44 = vector.extract_strided_slice %2 {offsets = [0, 128], sizes = [128, 128], strides = [1, 1]} : vector<128x256xf32> to vector<128x128xf32>
    %45 = arith.addf %43, %44 : vector<128x128xf32>
    %c4 = arith.constant 4 : index
    %c0_32 = arith.constant 0 : index
    %c0_33 = arith.constant 0 : index
    %46 = vector.load %arg5[%c4, %c0_32, %c0_33] : memref<8x1x128xf32, #tpu.memory_space<vmem>>, vector<1x1x128xf32>
    %47 = vector.shape_cast %46 : vector<1x1x128xf32> to vector<1x128xf32>
    %48 = vector.broadcast %47 : vector<1x128xf32> to vector<128x128xf32>
    %49 = arith.addf %45, %48 : vector<128x128xf32>
    %cst_34 = arith.constant 0.000000e+00 : f32
    %50 = vector.broadcast %cst_34 : f32 to vector<128x128xf32>
    %51 = arith.maximumf %49, %50 : vector<128x128xf32>
    %52 = arith.truncf %51 : vector<128x128xf32> to vector<128x128xbf16>
    %c4_35 = arith.constant 4 : index
    %c0_36 = arith.constant 0 : index
    %c0_37 = arith.constant 0 : index
    %53 = vector.load %arg3[%c4_35, %c0_36, %c0_37] : memref<7x128x128xbf16, #tpu.memory_space<vmem>>, vector<1x128x128xbf16>
    %54 = vector.shape_cast %53 : vector<1x128x128xbf16> to vector<128x128xbf16>
    %cst_38 = arith.constant dense<0.000000e+00> : vector<128x128xf32>
    %55 = tpu.matmul %52, %54, %cst_38 {dimension_numbers = #tpu.dot_dimension_numbers<[1], [0], [0], [1], [0, 0, 1, 1], [], []>} : vector<128x128xbf16>, vector<128x128xbf16>, vector<128x128xf32> -> vector<128x128xf32>
    %c5 = arith.constant 5 : index
    %c0_39 = arith.constant 0 : index
    %c0_40 = arith.constant 0 : index
    %56 = vector.load %arg5[%c5, %c0_39, %c0_40] : memref<8x1x128xf32, #tpu.memory_space<vmem>>, vector<1x1x128xf32>
    %57 = vector.shape_cast %56 : vector<1x1x128xf32> to vector<1x128xf32>
    %58 = vector.broadcast %57 : vector<1x128xf32> to vector<128x128xf32>
    %59 = arith.addf %55, %58 : vector<128x128xf32>
    %cst_41 = arith.constant 0.000000e+00 : f32
    %60 = vector.broadcast %cst_41 : f32 to vector<128x128xf32>
    %61 = arith.maximumf %59, %60 : vector<128x128xf32>
    %62 = arith.truncf %61 : vector<128x128xf32> to vector<128x128xbf16>
    %c5_42 = arith.constant 5 : index
    %c0_43 = arith.constant 0 : index
    %c0_44 = arith.constant 0 : index
    %63 = vector.load %arg3[%c5_42, %c0_43, %c0_44] : memref<7x128x128xbf16, #tpu.memory_space<vmem>>, vector<1x128x128xbf16>
    %64 = vector.shape_cast %63 : vector<1x128x128xbf16> to vector<128x128xbf16>
    %cst_45 = arith.constant dense<0.000000e+00> : vector<128x128xf32>
    %65 = tpu.matmul %62, %64, %cst_45 {dimension_numbers = #tpu.dot_dimension_numbers<[1], [0], [0], [1], [0, 0, 1, 1], [], []>} : vector<128x128xbf16>, vector<128x128xbf16>, vector<128x128xf32> -> vector<128x128xf32>
    %c6 = arith.constant 6 : index
    %c0_46 = arith.constant 0 : index
    %c0_47 = arith.constant 0 : index
    %66 = vector.load %arg5[%c6, %c0_46, %c0_47] : memref<8x1x128xf32, #tpu.memory_space<vmem>>, vector<1x1x128xf32>
    %67 = vector.shape_cast %66 : vector<1x1x128xf32> to vector<1x128xf32>
    %68 = vector.broadcast %67 : vector<1x128xf32> to vector<128x128xf32>
    %69 = arith.addf %65, %68 : vector<128x128xf32>
    %cst_48 = arith.constant 0.000000e+00 : f32
    %70 = vector.broadcast %cst_48 : f32 to vector<128x128xf32>
    %71 = arith.maximumf %69, %70 : vector<128x128xf32>
    %72 = arith.truncf %71 : vector<128x128xf32> to vector<128x128xbf16>
    %c6_49 = arith.constant 6 : index
    %c0_50 = arith.constant 0 : index
    %c0_51 = arith.constant 0 : index
    %73 = vector.load %arg3[%c6_49, %c0_50, %c0_51] : memref<7x128x128xbf16, #tpu.memory_space<vmem>>, vector<1x128x128xbf16>
    %74 = vector.shape_cast %73 : vector<1x128x128xbf16> to vector<128x128xbf16>
    %cst_52 = arith.constant dense<0.000000e+00> : vector<128x128xf32>
    %75 = tpu.matmul %72, %74, %cst_52 {dimension_numbers = #tpu.dot_dimension_numbers<[1], [0], [0], [1], [0, 0, 1, 1], [], []>} : vector<128x128xbf16>, vector<128x128xbf16>, vector<128x128xf32> -> vector<128x128xf32>
    %c7 = arith.constant 7 : index
    %c0_53 = arith.constant 0 : index
    %c0_54 = arith.constant 0 : index
    %76 = vector.load %arg5[%c7, %c0_53, %c0_54] : memref<8x1x128xf32, #tpu.memory_space<vmem>>, vector<1x1x128xf32>
    %77 = vector.shape_cast %76 : vector<1x1x128xf32> to vector<1x128xf32>
    %78 = vector.broadcast %77 : vector<1x128xf32> to vector<128x128xf32>
    %79 = arith.addf %75, %78 : vector<128x128xf32>
    %cst_55 = arith.constant 0.000000e+00 : f32
    %80 = vector.broadcast %cst_55 : f32 to vector<128x128xf32>
    %81 = arith.maximumf %79, %80 : vector<128x128xf32>
    %82 = arith.truncf %81 : vector<128x128xf32> to vector<128x128xbf16>
    %c0_56 = arith.constant 0 : index
    %c0_57 = arith.constant 0 : index
    %83 = vector.load %arg4[%c0_56, %c0_57] : memref<128x128xbf16, #tpu.memory_space<vmem>>, vector<128x128xbf16>
    %cst_58 = arith.constant dense<0.000000e+00> : vector<128x128xf32>
    %84 = tpu.matmul %82, %83, %cst_58 {dimension_numbers = #tpu.dot_dimension_numbers<[1], [0], [0], [1], [0, 0, 1, 1], [], []>} : vector<128x128xbf16>, vector<128x128xbf16>, vector<128x128xf32> -> vector<128x128xf32>
    %c0_59 = arith.constant 0 : index
    %c0_60 = arith.constant 0 : index
    %85 = vector.load %arg6[%c0_59, %c0_60] : memref<1x128xf32, #tpu.memory_space<vmem>>, vector<1x128xf32>
    %86 = vector.broadcast %85 : vector<1x128xf32> to vector<128x128xf32>
    %87 = arith.addf %84, %86 : vector<128x128xf32>
    %c0_61 = arith.constant 0 : index
    %c0_62 = arith.constant 0 : index
    %88 = vector.load %arg7[%c0_61, %c0_62] : memref<128x128xf32, #tpu.memory_space<vmem>>, vector<128x128xf32>
    tpu.vector_store %arg7[%c0_61, %c0_62], %87 {strides = array<i32>} : memref<128x128xf32, #tpu.memory_space<vmem>>, vector<128x128xf32>,
    return
  }
  func.func @transform_0(%arg0: i32) -> (i32, i32) {
    %c0_i32 = arith.constant 0 : i32
    %c0_i32_0 = arith.constant 0 : i32
    return %arg0, %c0_i32 : i32, i32
  }
  func.func @transform_1(%arg0: i32) -> (i32, i32) {
    %c0_i32 = arith.constant 0 : i32
    %c0_i32_0 = arith.constant 0 : i32
    %c0_i32_1 = arith.constant 0 : i32
    return %c0_i32, %c0_i32_0 : i32, i32
  }
  func.func @transform_2(%arg0: i32) -> (i32, i32, i32) {
    %c0_i32 = arith.constant 0 : i32
    %c0_i32_0 = arith.constant 0 : i32
    %c0_i32_1 = arith.constant 0 : i32
    %c0_i32_2 = arith.constant 0 : i32
    return %c0_i32, %c0_i32_0, %c0_i32_1 : i32, i32, i32
  }
  func.func @transform_3(%arg0: i32) -> (i32, i32) {
    %c0_i32 = arith.constant 0 : i32
    %c0_i32_0 = arith.constant 0 : i32
    %c0_i32_1 = arith.constant 0 : i32
    return %c0_i32, %c0_i32_0 : i32, i32
  }
  func.func @transform_4(%arg0: i32) -> (i32, i32, i32) {
    %c0_i32 = arith.constant 0 : i32
    %c0_i32_0 = arith.constant 0 : i32
    %c0_i32_1 = arith.constant 0 : i32
    %c0_i32_2 = arith.constant 0 : i32
    return %c0_i32, %c0_i32_0, %c0_i32_1 : i32, i32, i32
  }
  func.func @transform_5(%arg0: i32) -> (i32, i32) {
    %c0_i32 = arith.constant 0 : i32
    %c0_i32_0 = arith.constant 0 : i32
    %c0_i32_1 = arith.constant 0 : i32
    return %c0_i32, %c0_i32_0 : i32, i32
  }
  func.func @transform_6(%arg0: i32) -> (i32, i32) {
    %c0_i32 = arith.constant 0 : i32
    %c0_i32_0 = arith.constant 0 : i32
    return %arg0, %c0_i32 : i32, i32
  }
}

</mosaic_0001>

<llo_original>
// kernel: tpu_custom_call.1
$region0: #{tpu_custom_call.1}
  #allocation0 [shape = 'u32[]', space=smem, size = 0x4, offset = 0x4, fixed_abs, tag = 'smem constant byte address 0x4 - core index']
  #allocation1 [shape = 'u32[144,128]{1,0:T(1,128)}', space=vmem, size = 0x12000, scoped, tag = 'internal scratch']
  %s0 = inlined_call_operand.vmem [shape: f32[256,8], index: 0, kind: input, shape index: {}]
  %s1 = inlined_call_operand.vmem [shape: f32[8,256], index: 1, kind: input, shape index: {}]
  %s2 = inlined_call_operand.hbm [shape: bf16[7,128,128], index: 2, kind: input, shape index: {}]
  %s3 = inlined_call_operand.vmem [shape: bf16[128,128], index: 3, kind: input, shape index: {}]
  %s4 = inlined_call_operand.vmem [shape: f32[8,1,128], index: 4, kind: input, shape index: {}]
  %s5 = inlined_call_operand.vmem [shape: f32[1,128], index: 5, kind: input, shape index: {}]
  %s6 = inlined_call_operand.hbm [shape: f32[256,128], index: 6, kind: output, shape index: {}]
  %s7 = sld [smem:[#allocation0]]
  $region61: #{tpu_custom_call.1} parent=0
    _
  %s9 = ssub.s32 1, %s7
  %s10 = scalar_select 0, %s9, %s7
  $region1: #{tpu_custom_call.1} parent=0
    #allocation2 [shape = 'u8[229376]{0}', space=vmem, size = 0x38000, scoped, tag = 'input window, operand 2, single buffered']
    #allocation3 [shape = 's32[2]{0}', space=sflag, size = 0x8, scoped, tag = 'scoped memory for tpu_custom_call.1']
    #allocation4 [shape = 's32[2]{0}', space=sflag, size = 0x8, scoped, tag = 'scoped memory for tpu_custom_call.1']
    #allocation5 [shape = 'u8[131072]{0}', space=vmem, size = 0x20000, scoped, tag = 'output window, operand 0']
    %11 = vsyncpa [#allocation3], 0
    %12 = vsyncpa [#allocation4], 0
    %s13 = scalar_lea.sflag [#allocation4], 1
    %14 = vsyncpa %s13, 0
    loop: start=0, step=1, limit=4
    $region2: #{tpu_custom_call.1} parent=1 // loop_pre_header
      _
    $region3: #{tpu_custom_call.1} parent=1 // loop_header
      %s16 = sphi 0, %s20
      %p17 = scmp.ge.s32.totalorder %s16, 4
      %s26 = sphi 0, %s28
      %s29 = sphi 0, %s26
      %s30 = sphi 0, %s29
      %s46 = sphi 0, %s30
      %s50 = sphi 0, %s50
      %s52 = sphi 0, %s50
      %s53 = sphi 0, %s52
      %s67 = sphi 0, %s53
      %s71 = sphi 0, %s71
      %s73 = sphi 0, %s71
      %s74 = sphi 0, %s73
      %s88 = sphi 0, %s74
      %s92 = sphi 0, %s92
      %s94 = sphi 0, %s92
      %s95 = sphi 0, %s94
      %s109 = sphi 0, %s95
      %s113 = sphi 0, %s113
      %s115 = sphi 0, %s113
      %s116 = sphi 0, %s115
      %s130 = sphi 0, %s116
      %s134 = sphi 0, %s134
      %s136 = sphi 0, %s134
      %s137 = sphi 0, %s136
      %s151 = sphi 0, %s137
      %s157 = sphi 0, %s159
      %s160 = sphi 0, %s157
      %s161 = sphi 0, %s160
      %s177 = sphi 0, %s161
    $region4: #{tpu_custom_call.1} parent=1 // loop_header_branch
      %19 = sbr.rel (%p17) target = $region8
    $region5: #{tpu_custom_call.1} parent=1 // loop_body
      %s21 = ssub.s32 %s16, 1
      %s22 = ssub.s32 %s16, 2
      %s23 = sadd.s32 %s16, 1
      %s24 = ssub.s32 %s16, %s23
      %p25 = scmp.eq.s32.totalorder %s24, 0
      %s27 = sadd.s32 %s26, 1
      %s28 = scalar_select %p25, %s26, %s27
      %p31 = pneg %p25
      %p32 = scmp.eq.s32.totalorder %s16, 1
      %p33 = por %p31, %p32
      %p34 = scmp.ne.s32.totalorder %s26, %s29
      %p35 = scmp.eq.s32.totalorder %s16, 0
      %p36 = por %p34, %p35
      %p37 = scmp.ne.s32.totalorder %s26, %s29
      %p38 = scmp.eq.s32.totalorder %s21, 1
      %p39 = por %p37, %p38
      %p40 = scmp.ne.s32.totalorder %s29, %s30
      %p41 = scmp.eq.s32.totalorder %s21, 0
      %p42 = por %p40, %p41
      %p43 = scmp.ne.s32.totalorder %s29, %s30
      %p44 = scmp.eq.s32.totalorder %s22, 1
      %p45 = por %p43, %p44
      %p47 = scmp.ne.s32.totalorder %s30, %s46
      %p48 = scmp.eq.s32.totalorder %s22, 0
      %p49 = por %p47, %p48
      %s51 = sadd.s32 %s50, 1
      %p54 = scmp.eq.s32.totalorder %s16, 1
      %p55 = scmp.ne.s32.totalorder %s50, %s52
      %p56 = scmp.eq.s32.totalorder %s16, 0
      %p57 = por %p55, %p56
      %p58 = scmp.ne.s32.totalorder %s50, %s52
      %p59 = scmp.eq.s32.totalorder %s21, 1
      %p60 = por %p58, %p59
      %p61 = scmp.ne.s32.totalorder %s52, %s53
      %p62 = scmp.eq.s32.totalorder %s21, 0
      %p63 = por %p61, %p62
      %p64 = scmp.ne.s32.totalorder %s52, %s53
      %p65 = scmp.eq.s32.totalorder %s22, 1
      %p66 = por %p64, %p65
      %p68 = scmp.ne.s32.totalorder %s53, %s67
      %p69 = scmp.eq.s32.totalorder %s22, 0
      %p70 = por %p68, %p69
      %s72 = sadd.s32 %s71, 1
      %p75 = scmp.eq.s32.totalorder %s16, 1
      %p76 = scmp.ne.s32.totalorder %s71, %s73
      %p77 = scmp.eq.s32.totalorder %s16, 0
      %p78 = por %p76, %p77
      %p79 = scmp.ne.s32.totalorder %s71, %s73
      %p80 = scmp.eq.s32.totalorder %s21, 1
      %p81 = por %p79, %p80
      %p82 = scmp.ne.s32.totalorder %s73, %s74
      %p83 = scmp.eq.s32.totalorder %s21, 0
      %p84 = por %p82, %p83
      %p85 = scmp.ne.s32.totalorder %s73, %s74
      %p86 = scmp.eq.s32.totalorder %s22, 1
      %p87 = por %p85, %p86
      %p89 = scmp.ne.s32.totalorder %s74, %s88
      %p90 = scmp.eq.s32.totalorder %s22, 0
      %p91 = por %p89, %p90
      %s93 = sadd.s32 %s92, 1
      %p96 = scmp.eq.s32.totalorder %s16, 1
      %p97 = scmp.ne.s32.totalorder %s92, %s94
      %p98 = scmp.eq.s32.totalorder %s16, 0
      %p99 = por %p97, %p98
      %p100 = scmp.ne.s32.totalorder %s92, %s94
      %p101 = scmp.eq.s32.totalorder %s21, 1
      %p102 = por %p100, %p101
      %p103 = scmp.ne.s32.totalorder %s94, %s95
      %p104 = scmp.eq.s32.totalorder %s21, 0
      %p105 = por %p103, %p104
      %p106 = scmp.ne.s32.totalorder %s94, %s95
      %p107 = scmp.eq.s32.totalorder %s22, 1
      %p108 = por %p106, %p107
      %p110 = scmp.ne.s32.totalorder %s95, %s109
      %p111 = scmp.eq.s32.totalorder %s22, 0
      %p112 = por %p110, %p111
      %s114 = sadd.s32 %s113, 1
      %p117 = scmp.eq.s32.totalorder %s16, 1
      %p118 = scmp.ne.s32.totalorder %s113, %s115
      %p119 = scmp.eq.s32.totalorder %s16, 0
      %p120 = por %p118, %p119
      %p121 = scmp.ne.s32.totalorder %s113, %s115
      %p122 = scmp.eq.s32.totalorder %s21, 1
      %p123 = por %p121, %p122
      %p124 = scmp.ne.s32.totalorder %s115, %s116
      %p125 = scmp.eq.s32.totalorder %s21, 0
      %p126 = por %p124, %p125
      %p127 = scmp.ne.s32.totalorder %s115, %s116
      %p128 = scmp.eq.s32.totalorder %s22, 1
      %p129 = por %p127, %p128
      %p131 = scmp.ne.s32.totalorder %s116, %s130
      %p132 = scmp.eq.s32.totalorder %s22, 0
      %p133 = por %p131, %p132
      %s135 = sadd.s32 %s134, 1
      %p138 = scmp.eq.s32.totalorder %s16, 1
      %p139 = scmp.ne.s32.totalorder %s134, %s136
      %p140 = scmp.eq.s32.totalorder %s16, 0
      %p141 = por %p139, %p140
      %p142 = scmp.ne.s32.totalorder %s134, %s136
      %p143 = scmp.eq.s32.totalorder %s21, 1
      %p144 = por %p142, %p143
      %p145 = scmp.ne.s32.totalorder %s136, %s137
      %p146 = scmp.eq.s32.totalorder %s21, 0
      %p147 = por %p145, %p146
      %p148 = scmp.ne.s32.totalorder %s136, %s137
      %p149 = scmp.eq.s32.totalorder %s22, 1
      %p150 = por %p148, %p149
      %p152 = scmp.ne.s32.totalorder %s137, %s151
      %p153 = scmp.eq.s32.totalorder %s22, 0
      %p154 = por %p152, %p153
      %s155 = ssub.s32 %s16, %s23
      %p156 = scmp.eq.s32.totalorder %s155, 0
      %s158 = sadd.s32 %s157, 1
      %s159 = scalar_select %p156, %s157, %s158
      %p162 = pneg %p156
      %p163 = scmp.eq.s32.totalorder %s16, 1
      %p164 = por %p162, %p163
      %p165 = scmp.ne.s32.totalorder %s157, %s160
      %p166 = scmp.eq.s32.totalorder %s16, 0
      %p167 = por %p165, %p166
      %p168 = scmp.ne.s32.totalorder %s157, %s160
      %p169 = scmp.eq.s32.totalorder %s21, 1
      %p170 = por %p168, %p169
      %p171 = scmp.ne.s32.totalorder %s160, %s161
      %p172 = scmp.eq.s32.totalorder %s21, 0
      %p173 = por %p171, %p172
      %p174 = scmp.ne.s32.totalorder %s160, %s161
      %p175 = scmp.eq.s32.totalorder %s22, 1
      %p176 = por %p174, %p175
      %p178 = scmp.ne.s32.totalorder %s161, %s177
      %p179 = scmp.eq.s32.totalorder %s22, 0
      %p180 = por %p178, %p179
      %p181 = scmp.le.s32.totalorder 1, %s16
      %p182 = scmp.lt.s32.totalorder %s16, 3
      %p183 = pnand %p181, %p182
      %p184 = pneg %p183
      // Predicated region
      $region9: #{tpu_custom_call.1} parent=5 // pred_check
        _
      $region10: #{tpu_custom_call.1} parent=5 // pred_check_branch
        %186 = sbr.rel (%p183) target = $region12
      $region11: #{tpu_custom_call.1} parent=5 // pred_region
        %s187 = ssub.s32 %s16, 1
        // Predicated region
        $region13: #{tpu_custom_call.1} parent=11 // pred_check
          %p188 = pneg %p63
        $region14: #{tpu_custom_call.1} parent=11 // pred_check_branch
          %190 = sbr.rel (%p188) target = $region16
        $region15: #{tpu_custom_call.1} parent=11 // pred_region
          _
        $region16: #{tpu_custom_call.1} parent=11 // pred_fallthru
          _
        // Predicated region
        $region17: #{tpu_custom_call.1} parent=11 // pred_check
          %p191 = pneg %p84
        $region18: #{tpu_custom_call.1} parent=11 // pred_check_branch
          %193 = sbr.rel (%p191) target = $region20
        $region19: #{tpu_custom_call.1} parent=11 // pred_region
          %s195 = ssub.s32 7168, 7168
          %196 = vsyncadd [#allocation3], %s195
          %s197 = sshll.u32 [#allocation2], 4
          %s198 = int_to_ptr.vmem [resolvable:$true] %s197
          %203 = dma.hbm_to_vmem [thread:$0]  %s2, 7168, %s198, [#allocation3], 64, 64, 4
        $region20: #{tpu_custom_call.1} parent=11 // pred_fallthru
          _
        // Predicated region
        $region21: #{tpu_custom_call.1} parent=11 // pred_check
          %p204 = pneg %p105
        $region22: #{tpu_custom_call.1} parent=11 // pred_check_branch
          %206 = sbr.rel (%p204) target = $region24
        $region23: #{tpu_custom_call.1} parent=11 // pred_region
          _
        $region24: #{tpu_custom_call.1} parent=11 // pred_fallthru
          _
        // Predicated region
        $region25: #{tpu_custom_call.1} parent=11 // pred_check
          %p207 = pneg %p126
        $region26: #{tpu_custom_call.1} parent=11 // pred_check_branch
          %209 = sbr.rel (%p207) target = $region28
        $region27: #{tpu_custom_call.1} parent=11 // pred_region
          _
        $region28: #{tpu_custom_call.1} parent=11 // pred_fallthru
          _
        // Predicated region
        $region29: #{tpu_custom_call.1} parent=11 // pred_check
          %p210 = pneg %p147
        $region30: #{tpu_custom_call.1} parent=11 // pred_check_branch
          %212 = sbr.rel (%p210) target = $region32
        $region31: #{tpu_custom_call.1} parent=11 // pred_region
          _
        $region32: #{tpu_custom_call.1} parent=11 // pred_fallthru
          _
      $region12: #{tpu_custom_call.1} parent=5 // pred_fallthru
        _
      %p213 = scmp.lt.s32.totalorder %s16, 2
      // Predicated region
      $region33: #{tpu_custom_call.1} parent=5 // pred_check
        %p214 = pneg %p213
      $region34: #{tpu_custom_call.1} parent=5 // pred_check_branch
        %216 = sbr.rel (%p214) target = $region36
      $region35: #{tpu_custom_call.1} parent=5 // pred_region
        // Predicated region
        $region37: #{tpu_custom_call.1} parent=35 // pred_check
          %p217 = pneg %p36
        $region38: #{tpu_custom_call.1} parent=35 // pred_check_branch
          %219 = sbr.rel (%p217) target = $region40
        $region39: #{tpu_custom_call.1} parent=35 // pred_region
          %s220 = smul.u32 16, %s16
          %p221 = scmp.lt.s32.totalorder %s220, 31
          %s222 = scalar_select %p221, %s220, 31
          %s223 = smul.addr %s222, 8
          %s224 = scalar_lea.vmem %s0, %s223
          %s225 = smul.u32 16, %s16
        $region40: #{tpu_custom_call.1} parent=35 // pred_fallthru
          _
      $region36: #{tpu_custom_call.1} parent=5 // pred_fallthru
        _
      %p226 = scmp.le.s32.totalorder 1, %s16
      %p227 = scmp.lt.s32.totalorder %s16, 3
      %p228 = pnand %p226, %p227
      %p229 = pneg %p228
      // Predicated region
      $region41: #{tpu_custom_call.1} parent=5 // pred_check
        _
      $region42: #{tpu_custom_call.1} parent=5 // pred_check_branch
        %231 = sbr.rel (%p228) target = $region44
      $region43: #{tpu_custom_call.1} parent=5 // pred_region
        %s232 = ssub.s32 %s16, 1
        // Predicated region
        $region45: #{tpu_custom_call.1} parent=43 // pred_check
          %p233 = pneg %p84
        $region46: #{tpu_custom_call.1} parent=43 // pred_check_branch
          %235 = sbr.rel (%p233) target = $region48
        $region47: #{tpu_custom_call.1} parent=43 // pred_region
          %236 = dma.done [#allocation3], 7168
        $region48: #{tpu_custom_call.1} parent=43 // pred_fallthru
          _
        %s237 = smul.u32 16, %s21
        %p238 = scmp.lt.s32.totalorder %s237, 31
        %s239 = scalar_select %p238, %s237, 31
        %s240 = smul.addr %s239, 8
        %s241 = scalar_lea.vmem %s0, %s240
        %p242 = pneg %p42
        %p243 = pneg %p39
        %p244 = pneg %p63
        %p245 = pneg %p60
        %p246 = pneg %p84
        %p247 = pneg %p81
        %p248 = pneg %p105
        %p249 = pneg %p102
        %p250 = pneg %p126
        %p251 = pneg %p123
        %p252 = pneg %p147
        %p253 = pneg %p144
        %p254 = pneg %p173
        %p255 = pneg %p170
        %s256 = sand.u32 %s160, 1
        %s257 = scalar_lea.sflag [#allocation4], %s256
        %s258 = sand.u32 %s160, 1
        %s259 = smul.addr %s258, 128
        %s260 = scalar_lea.vmem [#allocation5], %s259
        %s261 = smul.u32 16, %s21
        %p262 = scmp.lt.s32.totalorder %s261, 31
        %s263 = scalar_select %p262, %s261, 31
        %s264 = smul.addr %s263, 8
        %s265 = scalar_lea.vmem %s0, %s264
        %s266 = smul.u32 16, %s21
        %s267 = smul.u32 16, %s21
        %v269 = vld [vmem:[%s265] sm:$0xff]
        %v270 = vld [vmem:[%s265 + $0x8] sm:$0xff]
        %v271 = vld [vmem:[%s265 + $0x10] sm:$0xff]
        %v272 = vld [vmem:[%s265 + $0x18] sm:$0xff]
        %v273 = vld [vmem:[%s265 + $0x20] sm:$0xff]
        %v274 = vld [vmem:[%s265 + $0x28] sm:$0xff]
        %v275 = vld [vmem:[%s265 + $0x30] sm:$0xff]
        %v276 = vld [vmem:[%s265 + $0x38] sm:$0xff]
        %v277 = vld [vmem:[%s265 + $0x40] sm:$0xff]
        %v278 = vld [vmem:[%s265 + $0x48] sm:$0xff]
        %v279 = vld [vmem:[%s265 + $0x50] sm:$0xff]
        %v280 = vld [vmem:[%s265 + $0x58] sm:$0xff]
        %v281 = vld [vmem:[%s265 + $0x60] sm:$0xff]
        %v282 = vld [vmem:[%s265 + $0x68] sm:$0xff]
        %v283 = vld [vmem:[%s265 + $0x70] sm:$0xff]
        %v284 = vld [vmem:[%s265 + $0x78] sm:$0xff]
        %v285 = vld [vmem:[%s1] sm:$0xff]
        %v286 = vld [vmem:[%s1 + $0x8] sm:$0xff]
        %vm287 = vcmask 64512
        %v289 = vsel %vm287, %v269, 0
        %v292 = vsel %vm287, %v270, 0
        %v295 = vsel %vm287, %v271, 0
        %v298 = vsel %vm287, %v272, 0
        %v301 = vsel %vm287, %v273, 0
        %v304 = vsel %vm287, %v274, 0
        %v307 = vsel %vm287, %v275, 0
        %v310 = vsel %vm287, %v276, 0
        %v313 = vsel %vm287, %v277, 0
        %v316 = vsel %vm287, %v278, 0
        %v319 = vsel %vm287, %v279, 0
        %v322 = vsel %vm287, %v280, 0
        %v325 = vsel %vm287, %v281, 0
        %v328 = vsel %vm287, %v282, 0
        %v331 = vsel %vm287, %v283, 0
        %v334 = vsel %vm287, %v284, 0
        %336 = vmatprep.subr.mxu0 %v286
        %337 = vmatpush1.msra.mxu0 %v285
        %338 = vmatprep.subr.mxu0 0.0
        %339 = vmatpush1.msra.mxu0 0.0
        %340 = vmatprep.subr.mxu0 0.0
        %341 = vmatpush1.msra.mxu0 0.0
        %342 = vmatprep.subr.mxu0 0.0
        %343 = vmatpush1.msra.mxu0 0.0
        %344 = vmatprep.subr.mxu0 0.0
        %345 = vmatpush1.msra.mxu0 0.0
        %346 = vmatprep.subr.mxu0 0.0
        %347 = vmatpush1.msra.mxu0 0.0
        %348 = vmatprep.subr.mxu0 0.0
        %349 = vmatpush1.msra.mxu0 0.0
        %350 = vmatprep.subr.mxu0 0.0
        %351 = vmatpush1.msra.mxu0 0.0
        %352 = vmatprep.subr.mxu0 0.0
        %353 = vmatpush1.msra.mxu0 0.0
        %354 = vmatprep.subr.mxu0 0.0
        %355 = vmatpush1.msra.mxu0 0.0
        %356 = vmatprep.subr.mxu0 0.0
        %357 = vmatpush1.msra.mxu0 0.0
        %358 = vmatprep.subr.mxu0 0.0
        %359 = vmatpush1.msra.mxu0 0.0
        %360 = vmatprep.subr.mxu0 0.0
        %361 = vmatpush1.msra.mxu0 0.0
        %362 = vmatprep.subr.mxu0 0.0
        %363 = vmatpush1.msra.mxu0 0.0
        %364 = vmatprep.subr.mxu0 0.0
        %365 = vmatpush1.msra.mxu0 0.0
        %366 = vmatprep.subr.mxu0 0.0
        %367 = vmatpush1.msra.mxu0 0.0
        %368 = vmatprep.subr.mxu0 0.0
        %369 = vmatpush1.msra.mxu0 0.0
        %370 = vmatprep.subr.mxu0 0.0
        %371 = vmatpush1.msra.mxu0 0.0
        %372 = vmatprep.subr.mxu0 0.0
        %373 = vmatpush1.msra.mxu0 0.0
        %374 = vmatprep.subr.mxu0 0.0
        %375 = vmatpush1.msra.mxu0 0.0
        %376 = vmatprep.subr.mxu0 0.0
        %377 = vmatpush1.msra.mxu0 0.0
        %378 = vmatprep.subr.mxu0 0.0
        %379 = vmatpush1.msra.mxu0 0.0
        %380 = vmatprep.subr.mxu0 0.0
        %381 = vmatpush1.msra.mxu0 0.0
        %382 = vmatprep.subr.mxu0 0.0
        %383 = vmatpush1.msra.mxu0 0.0
        %384 = vmatprep.subr.mxu0 0.0
        %385 = vmatpush1.msra.mxu0 0.0
        %386 = vmatprep.subr.mxu0 0.0
        %387 = vmatpush1.msra.mxu0 0.0
        %388 = vmatprep.subr.mxu0 0.0
        %389 = vmatpush1.msra.mxu0 0.0
        %390 = vmatprep.subr.mxu0 0.0
        %391 = vmatpush1.msra.mxu0 0.0
        %392 = vmatprep.subr.mxu0 0.0
        %393 = vmatpush1.msra.mxu0 0.0
        %394 = vmatprep.subr.mxu0 0.0
        %395 = vmatpush1.msra.mxu0 0.0
        %396 = vmatprep.subr.mxu0 0.0
        %397 = vmatpush1.msra.mxu0 0.0
        %398 = vmatprep.subr.mxu0 0.0
        %399 = vmatpush1.msra.mxu0 0.0
        %400 = vmatprep.mubr.f32.mxu0 0.0
        %401 = vmatmul.mubr.f32.gmra.mrb[0].mxu0 %v289
        %v402 = vpop.f32.mrb[0].mxu0
        %v403 = vadd.f32 0.0, %v402
        %v404 = vpop.f32.mrb[0].mxu0
        %v405 = vadd.f32 0.0, %v404
        %406 = vmatprep.mubr.f32.mxu0 0.0
        %407 = vmatmul.mubr.f32.gmra.mrb[0].mxu0 %v292
        %v408 = vpop.f32.mrb[0].mxu0
        %v409 = vadd.f32 0.0, %v408
        %v410 = vpop.f32.mrb[0].mxu0
        %v411 = vadd.f32 0.0, %v410
        %412 = vmatprep.mubr.f32.mxu0 0.0
        %413 = vmatmul.mubr.f32.gmra.mrb[0].mxu0 %v295
        %v414 = vpop.f32.mrb[0].mxu0
        %v415 = vadd.f32 0.0, %v414
        %v416 = vpop.f32.mrb[0].mxu0
        %v417 = vadd.f32 0.0, %v416
        %418 = vmatprep.mubr.f32.mxu0 0.0
        %419 = vmatmul.mubr.f32.gmra.mrb[0].mxu0 %v298
        %v420 = vpop.f32.mrb[0].mxu0
        %v421 = vadd.f32 0.0, %v420
        %v422 = vpop.f32.mrb[0].mxu0
        %v423 = vadd.f32 0.0, %v422
        %424 = vmatprep.mubr.f32.mxu0 0.0
        %425 = vmatmul.mubr.f32.gmra.mrb[0].mxu0 %v301
        %v426 = vpop.f32.mrb[0].mxu0
        %v427 = vadd.f32 0.0, %v426
        %v428 = vpop.f32.mrb[0].mxu0
        %v429 = vadd.f32 0.0, %v428
        %430 = vmatprep.mubr.f32.mxu0 0.0
        %431 = vmatmul.mubr.f32.gmra.mrb[0].mxu0 %v304
        %v432 = vpop.f32.mrb[0].mxu0
        %v433 = vadd.f32 0.0, %v432
        %v434 = vpop.f32.mrb[0].mxu0
        %v435 = vadd.f32 0.0, %v434
        %436 = vmatprep.mubr.f32.mxu0 0.0
        %437 = vmatmul.mubr.f32.gmra.mrb[0].mxu0 %v307
        %v438 = vpop.f32.mrb[0].mxu0
        %v439 = vadd.f32 0.0, %v438
        %v440 = vpop.f32.mrb[0].mxu0
        %v441 = vadd.f32 0.0, %v440
        %442 = vmatprep.mubr.f32.mxu0 0.0
        %443 = vmatmul.mubr.f32.gmra.mrb[0].mxu0 %v310
        %v444 = vpop.f32.mrb[0].mxu0
        %v445 = vadd.f32 0.0, %v444
        %v446 = vpop.f32.mrb[0].mxu0
        %v447 = vadd.f32 0.0, %v446
        %448 = vmatprep.mubr.f32.mxu0 0.0
        %449 = vmatmul.mubr.f32.gmra.mrb[0].mxu0 %v313
        %v450 = vpop.f32.mrb[0].mxu0
        %v451 = vadd.f32 0.0, %v450
        %v452 = vpop.f32.mrb[0].mxu0
        %v453 = vadd.f32 0.0, %v452
        %454 = vmatprep.mubr.f32.mxu0 0.0
        %455 = vmatmul.mubr.f32.gmra.mrb[0].mxu0 %v316
        %v456 = vpop.f32.mrb[0].mxu0
        %v457 = vadd.f32 0.0, %v456
        %v458 = vpop.f32.mrb[0].mxu0
        %v459 = vadd.f32 0.0, %v458
        %460 = vmatprep.mubr.f32.mxu0 0.0
        %461 = vmatmul.mubr.f32.gmra.mrb[0].mxu0 %v319
        %v462 = vpop.f32.mrb[0].mxu0
        %v463 = vadd.f32 0.0, %v462
        %v464 = vpop.f32.mrb[0].mxu0
        %v465 = vadd.f32 0.0, %v464
        %466 = vmatprep.mubr.f32.mxu0 0.0
        %467 = vmatmul.mubr.f32.gmra.mrb[0].mxu0 %v322
        %v468 = vpop.f32.mrb[0].mxu0
        %v469 = vadd.f32 0.0, %v468
        %v470 = vpop.f32.mrb[0].mxu0
        %v471 = vadd.f32 0.0, %v470
        %472 = vmatprep.mubr.f32.mxu0 0.0
        %473 = vmatmul.mubr.f32.gmra.mrb[0].mxu0 %v325
        %v474 = vpop.f32.mrb[0].mxu0
        %v475 = vadd.f32 0.0, %v474
        %v476 = vpop.f32.mrb[0].mxu0
        %v477 = vadd.f32 0.0, %v476
        %478 = vmatprep.mubr.f32.mxu0 0.0
        %479 = vmatmul.mubr.f32.gmra.mrb[0].mxu0 %v328
        %v480 = vpop.f32.mrb[0].mxu0
        %v481 = vadd.f32 0.0, %v480
        %v482 = vpop.f32.mrb[0].mxu0
        %v483 = vadd.f32 0.0, %v482
        %484 = vmatprep.mubr.f32.mxu0 0.0
        %485 = vmatmul.mubr.f32.gmra.mrb[0].mxu0 %v331
        %v486 = vpop.f32.mrb[0].mxu0
        %v487 = vadd.f32 0.0, %v486
        %v488 = vpop.f32.mrb[0].mxu0
        %v489 = vadd.f32 0.0, %v488
        %490 = vmatprep.mubr.f32.mxu0 0.0
        %491 = vmatmul.mubr.f32.gmra.mrb[0].mxu0 %v334
        %v492 = vpop.f32.mrb[0].mxu0
        %v493 = vadd.f32 0.0, %v492
        %v494 = vpop.f32.mrb[0].mxu0
        %v495 = vadd.f32 0.0, %v494
        %496 = vdwg.mxu0
        %v497 = vld [vmem:[%s4] sm:$0x1]
        %v499 = vlaneseq
        %v500 = vshrl.u32 %v499, 7
        %v501 = vsub.s32 0, %v500
        %v502 = vrot.slane %v497, %v501
        %v504 = vadd.f32 %v403, %v502
        %v505 = vadd.f32 %v409, %v502
        %v506 = vadd.f32 %v415, %v502
        %v507 = vadd.f32 %v421, %v502
        %v508 = vadd.f32 %v427, %v502
        %v509 = vadd.f32 %v433, %v502
        %v510 = vadd.f32 %v439, %v502
        %v511 = vadd.f32 %v445, %v502
        %v512 = vadd.f32 %v451, %v502
        %v513 = vadd.f32 %v457, %v502
        %v514 = vadd.f32 %v463, %v502
        %v515 = vadd.f32 %v469, %v502
        %v516 = vadd.f32 %v475, %v502
        %v517 = vadd.f32 %v481, %v502
        %v518 = vadd.f32 %v487, %v502
        %v519 = vadd.f32 %v493, %v502
        %v520 = vmax.f32 %v504, 0.0
        %v521 = vmax.f32 %v505, 0.0
        %v522 = vmax.f32 %v506, 0.0
        %v523 = vmax.f32 %v507, 0.0
        %v524 = vmax.f32 %v508, 0.0
        %v525 = vmax.f32 %v509, 0.0
        %v526 = vmax.f32 %v510, 0.0
        %v527 = vmax.f32 %v511, 0.0
        %v528 = vmax.f32 %v512, 0.0
        %v529 = vmax.f32 %v513, 0.0
        %v530 = vmax.f32 %v514, 0.0
        %v531 = vmax.f32 %v515, 0.0
        %v532 = vmax.f32 %v516, 0.0
        %v533 = vmax.f32 %v517, 0.0
        %v534 = vmax.f32 %v518, 0.0
        %v535 = vmax.f32 %v519, 0.0
        %v536 = vpack.c.bf16 %v521, %v520
        %v537 = vpack.c.bf16 %v523, %v522
        %v538 = vpack.c.bf16 %v525, %v524
        %v539 = vpack.c.bf16 %v527, %v526
        %v540 = vpack.c.bf16 %v529, %v528
        %v541 = vpack.c.bf16 %v531, %v530
        %v542 = vpack.c.bf16 %v533, %v532
        %v543 = vpack.c.bf16 %v535, %v534
        %v544 = vld [vmem:[#allocation2] sm:$0xf]
        %v545 = vld [vmem:[#allocation2 + $0x4] sm:$0xf]
        %v546 = vld [vmem:[#allocation2 + $0x8] sm:$0xf]
        %v547 = vld [vmem:[#allocation2 + $0xc] sm:$0xf]
        %v548 = vld [vmem:[#allocation2 + $0x10] sm:$0xf]
        %v549 = vld [vmem:[#allocation2 + $0x14] sm:$0xf]
        %v550 = vld [vmem:[#allocation2 + $0x18] sm:$0xf]
        %v551 = vld [vmem:[#allocation2 + $0x1c] sm:$0xf]
        %v552 = vld [vmem:[#allocation2 + $0x20] sm:$0xf]
        %v553 = vld [vmem:[#allocation2 + $0x24] sm:$0xf]
        %v554 = vld [vmem:[#allocation2 + $0x28] sm:$0xf]
        %v555 = vld [vmem:[#allocation2 + $0x2c] sm:$0xf]
        %v556 = vld [vmem:[#allocation2 + $0x30] sm:$0xf]
        %v557 = vld [vmem:[#allocation2 + $0x34] sm:$0xf]
        %v558 = vld [vmem:[#allocation2 + $0x38] sm:$0xf]
        %v559 = vld [vmem:[#allocation2 + $0x3c] sm:$0xf]
        %s560 = scalar_lea.vmem %s4, 1
        %v561 = vld [vmem:[%s560] sm:$0x1]
        %v563 = vlaneseq
        %v564 = vshrl.u32 %v563, 7
        %v565 = vsub.s32 0, %v564
        %v566 = vrot.slane %v561, %v565
        %v584 = vunpack.c.l.b16 %v544
        %v585 = vunpack.c.l.b16 %v545
        %v586 = vunpack.c.l.b16 %v546
        %v587 = vunpack.c.l.b16 %v547
        %v588 = vunpack.c.l.b16 %v548
        %v589 = vunpack.c.l.b16 %v549
        %v590 = vunpack.c.l.b16 %v550
        %v591 = vunpack.c.l.b16 %v551
        %v592 = vunpack.c.l.b16 %v552
        %v593 = vunpack.c.l.b16 %v553
        %v594 = vunpack.c.l.b16 %v554
        %v595 = vunpack.c.l.b16 %v555
        %v596 = vunpack.c.l.b16 %v556
        %v597 = vunpack.c.l.b16 %v557
        %v598 = vunpack.c.l.b16 %v558
        %v599 = vunpack.c.l.b16 %v559
        %v600 = vpack.c.b16 %v585, %v584
        %v601 = vpack.c.b16 %v587, %v586
        %v602 = vpack.c.b16 %v589, %v588
        %v603 = vpack.c.b16 %v591, %v590
        %v604 = vpack.c.b16 %v593, %v592
        %v605 = vpack.c.b16 %v595, %v594
        %v606 = vpack.c.b16 %v597, %v596
        %v607 = vpack.c.b16 %v599, %v598
        %616 = vmatprep.subr.bf16.mxu0 0
        %617 = vmatpush1.bf16.msra.mxu0 %v600
        %618 = vmatprep.subr.bf16.mxu0 0
        %619 = vmatpush1.bf16.msra.mxu0 %v601
        %620 = vmatprep.subr.bf16.mxu0 0
        %621 = vmatpush1.bf16.msra.mxu0 %v602
        %622 = vmatprep.subr.bf16.mxu0 0
        %623 = vmatpush1.bf16.msra.mxu0 %v603
        %624 = vmatprep.subr.bf16.mxu0 0
        %625 = vmatpush1.bf16.msra.mxu0 %v604
        %626 = vmatprep.subr.bf16.mxu0 0
        %627 = vmatpush1.bf16.msra.mxu0 %v605
        %628 = vmatprep.subr.bf16.mxu0 0
        %629 = vmatpush1.bf16.msra.mxu0 %v606
        %630 = vmatprep.subr.bf16.mxu0 0
        %631 = vmatpush1.bf16.msra.mxu0 %v607
        %632 = vmatprep.subr.bf16.mxu0 0
        %633 = vmatpush1.bf16.msra.mxu0 0
        %634 = vmatprep.subr.bf16.mxu0 0
        %635 = vmatpush1.bf16.msra.mxu0 0
        %636 = vmatprep.subr.bf16.mxu0 0
        %637 = vmatpush1.bf16.msra.mxu0 0
        %638 = vmatprep.subr.bf16.mxu0 0
        %639 = vmatpush1.bf16.msra.mxu0 0
        %640 = vmatprep.subr.bf16.mxu0 0
        %641 = vmatpush1.bf16.msra.mxu0 0
        %642 = vmatprep.subr.bf16.mxu0 0
        %643 = vmatpush1.bf16.msra.mxu0 0
        %644 = vmatprep.subr.bf16.mxu0 0
        %645 = vmatpush1.bf16.msra.mxu0 0
        %646 = vmatprep.subr.bf16.mxu0 0
        %647 = vmatpush1.bf16.msra.mxu0 0
        %648 = vmatprep.mubr.bf16.mxu0 0
        %649 = vmatmul.mubr.bf16.gmra.mrb[0].mxu0 %v536
        %v650 = vpop.f32.mrb[0].mxu0
        %v651 = vadd.f32 %v566, %v650
        %v652 = vpop.f32.mrb[0].mxu0
        %v653 = vpop.f32.mrb[0].mxu0
        %v654 = vadd.f32 %v566, %v653
        %v655 = vpop.f32.mrb[0].mxu0
        %656 = vmatprep.mubr.bf16.mxu0 0
        %657 = vmatmul.mubr.bf16.gmra.mrb[0].mxu0 %v537
        %v658 = vpop.f32.mrb[0].mxu0
        %v659 = vadd.f32 %v566, %v658
        %v660 = vpop.f32.mrb[0].mxu0
        %v661 = vpop.f32.mrb[0].mxu0
        %v662 = vadd.f32 %v566, %v661
        %v663 = vpop.f32.mrb[0].mxu0
        %664 = vmatprep.mubr.bf16.mxu0 0
        %665 = vmatmul.mubr.bf16.gmra.mrb[0].mxu0 %v538
        %v666 = vpop.f32.mrb[0].mxu0
        %v667 = vadd.f32 %v566, %v666
        %v668 = vpop.f32.mrb[0].mxu0
        %v669 = vpop.f32.mrb[0].mxu0
        %v670 = vadd.f32 %v566, %v669
        %v671 = vpop.f32.mrb[0].mxu0
        %672 = vmatprep.mubr.bf16.mxu0 0
        %673 = vmatmul.mubr.bf16.gmra.mrb[0].mxu0 %v539
        %v674 = vpop.f32.mrb[0].mxu0
        %v675 = vadd.f32 %v566, %v674
        %v676 = vpop.f32.mrb[0].mxu0
        %v677 = vpop.f32.mrb[0].mxu0
        %v678 = vadd.f32 %v566, %v677
        %v679 = vpop.f32.mrb[0].mxu0
        %680 = vmatprep.mubr.bf16.mxu0 0
        %681 = vmatmul.mubr.bf16.gmra.mrb[0].mxu0 %v540
        %v682 = vpop.f32.mrb[0].mxu0
        %v683 = vadd.f32 %v566, %v682
        %v684 = vpop.f32.mrb[0].mxu0
        %v685 = vpop.f32.mrb[0].mxu0
        %v686 = vadd.f32 %v566, %v685
        %v687 = vpop.f32.mrb[0].mxu0
        %688 = vmatprep.mubr.bf16.mxu0 0
        %689 = vmatmul.mubr.bf16.gmra.mrb[0].mxu0 %v541
        %v690 = vpop.f32.mrb[0].mxu0
        %v691 = vadd.f32 %v566, %v690
        %v692 = vpop.f32.mrb[0].mxu0
        %v693 = vpop.f32.mrb[0].mxu0
        %v694 = vadd.f32 %v566, %v693
        %v695 = vpop.f32.mrb[0].mxu0
        %696 = vmatprep.mubr.bf16.mxu0 0
        %697 = vmatmul.mubr.bf16.gmra.mrb[0].mxu0 %v542
        %v698 = vpop.f32.mrb[0].mxu0
        %v699 = vadd.f32 %v566, %v698
        %v700 = vpop.f32.mrb[0].mxu0
        %v701 = vpop.f32.mrb[0].mxu0
        %v702 = vadd.f32 %v566, %v701
        %v703 = vpop.f32.mrb[0].mxu0
        %704 = vmatprep.mubr.bf16.mxu0 0
        %705 = vmatmul.mubr.bf16.gmra.mrb[0].mxu0 %v543
        %v706 = vpop.f32.mrb[0].mxu0
        %v707 = vadd.f32 %v566, %v706
        %v708 = vpop.f32.mrb[0].mxu0
        %v709 = vpop.f32.mrb[0].mxu0
        %v710 = vadd.f32 %v566, %v709
        %v711 = vpop.f32.mrb[0].mxu0
        %712 = vdwg.mxu0
        %v713 = vmax.f32 %v651, 0.0
        %v714 = vmax.f32 %v654, 0.0
        %v715 = vmax.f32 %v659, 0.0
        %v716 = vmax.f32 %v662, 0.0
        %v717 = vmax.f32 %v667, 0.0
        %v718 = vmax.f32 %v670, 0.0
        %v719 = vmax.f32 %v675, 0.0
        %v720 = vmax.f32 %v678, 0.0
        %v721 = vmax.f32 %v683, 0.0
        %v722 = vmax.f32 %v686, 0.0
        %v723 = vmax.f32 %v691, 0.0
        %v724 = vmax.f32 %v694, 0.0
        %v725 = vmax.f32 %v699, 0.0
        %v726 = vmax.f32 %v702, 0.0
        %v727 = vmax.f32 %v707, 0.0
        %v728 = vmax.f32 %v710, 0.0
        %v729 = vpack.c.bf16 %v714, %v713
        %v730 = vpack.c.bf16 %v716, %v715
        %v731 = vpack.c.bf16 %v718, %v717
        %v732 = vpack.c.bf16 %v720, %v719
        %v733 = vpack.c.bf16 %v722, %v721
        %v734 = vpack.c.bf16 %v724, %v723
        %v735 = vpack.c.bf16 %v726, %v725
        %v736 = vpack.c.bf16 %v728, %v727
        %s737 = scalar_lea.vmem [#allocation2], 64
        %v738 = vld [vmem:[%s737] sm:$0xf]
        %v739 = vld [vmem:[%s737 + $0x4] sm:$0xf]
        %v740 = vld [vmem:[%s737 + $0x8] sm:$0xf]
        %v741 = vld [vmem:[%s737 + $0xc] sm:$0xf]
        %v742 = vld [vmem:[%s737 + $0x10] sm:$0xf]
        %v743 = vld [vmem:[%s737 + $0x14] sm:$0xf]
        %v744 = vld [vmem:[%s737 + $0x18] sm:$0xf]
        %v745 = vld [vmem:[%s737 + $0x1c] sm:$0xf]
        %v746 = vld [vmem:[%s737 + $0x20] sm:$0xf]
        %v747 = vld [vmem:[%s737 + $0x24] sm:$0xf]
        %v748 = vld [vmem:[%s737 + $0x28] sm:$0xf]
        %v749 = vld [vmem:[%s737 + $0x2c] sm:$0xf]
        %v750 = vld [vmem:[%s737 + $0x30] sm:$0xf]
        %v751 = vld [vmem:[%s737 + $0x34] sm:$0xf]
        %v752 = vld [vmem:[%s737 + $0x38] sm:$0xf]
        %v753 = vld [vmem:[%s737 + $0x3c] sm:$0xf]
        %s754 = scalar_lea.vmem %s4, 2
        %v755 = vld [vmem:[%s754] sm:$0x1]
        %v757 = vlaneseq
        %v758 = vshrl.u32 %v757, 7
        %v759 = vsub.s32 0, %v758
        %v760 = vrot.slane %v755, %v759
        %v778 = vunpack.c.l.b16 %v738
        %v779 = vunpack.c.l.b16 %v739
        %v780 = vunpack.c.l.b16 %v740
        %v781 = vunpack.c.l.b16 %v741
        %v782 = vunpack.c.l.b16 %v742
        %v783 = vunpack.c.l.b16 %v743
        %v784 = vunpack.c.l.b16 %v744
        %v785 = vunpack.c.l.b16 %v745
        %v786 = vunpack.c.l.b16 %v746
        %v787 = vunpack.c.l.b16 %v747
        %v788 = vunpack.c.l.b16 %v748
        %v789 = vunpack.c.l.b16 %v749
        %v790 = vunpack.c.l.b16 %v750
        %v791 = vunpack.c.l.b16 %v751
        %v792 = vunpack.c.l.b16 %v752
        %v793 = vunpack.c.l.b16 %v753
        %v794 = vpack.c.b16 %v779, %v778
        %v795 = vpack.c.b16 %v781, %v780
        %v796 = vpack.c.b16 %v783, %v782
        %v797 = vpack.c.b16 %v785, %v784
        %v798 = vpack.c.b16 %v787, %v786
        %v799 = vpack.c.b16 %v789, %v788
        %v800 = vpack.c.b16 %v791, %v790
        %v801 = vpack.c.b16 %v793, %v792
        %810 = vmatprep.subr.bf16.mxu0 0
        %811 = vmatpush1.bf16.msra.mxu0 %v794
        %812 = vmatprep.subr.bf16.mxu0 0
        %813 = vmatpush1.bf16.msra.mxu0 %v795
        %814 = vmatprep.subr.bf16.mxu0 0
        %815 = vmatpush1.bf16.msra.mxu0 %v796
        %816 = vmatprep.subr.bf16.mxu0 0
        %817 = vmatpush1.bf16.msra.mxu0 %v797
        %818 = vmatprep.subr.bf16.mxu0 0
        %819 = vmatpush1.bf16.msra.mxu0 %v798
        %820 = vmatprep.subr.bf16.mxu0 0
        %821 = vmatpush1.bf16.msra.mxu0 %v799
        %822 = vmatprep.subr.bf16.mxu0 0
        %823 = vmatpush1.bf16.msra.mxu0 %v800
        %824 = vmatprep.subr.bf16.mxu0 0
        %825 = vmatpush1.bf16.msra.mxu0 %v801
        %826 = vmatprep.subr.bf16.mxu0 0
        %827 = vmatpush1.bf16.msra.mxu0 0
        %828 = vmatprep.subr.bf16.mxu0 0
        %829 = vmatpush1.bf16.msra.mxu0 0
        %830 = vmatprep.subr.bf16.mxu0 0
        %831 = vmatpush1.bf16.msra.mxu0 0
        %832 = vmatprep.subr.bf16.mxu0 0
        %833 = vmatpush1.bf16.msra.mxu0 0
        %834 = vmatprep.subr.bf16.mxu0 0
        %835 = vmatpush1.bf16.msra.mxu0 0
        %836 = vmatprep.subr.bf16.mxu0 0
        %837 = vmatpush1.bf16.msra.mxu0 0
        %838 = vmatprep.subr.bf16.mxu0 0
        %839 = vmatpush1.bf16.msra.mxu0 0
        %840 = vmatprep.subr.bf16.mxu0 0
        %841 = vmatpush1.bf16.msra.mxu0 0
        %842 = vmatprep.mubr.bf16.mxu0 0
        %843 = vmatmul.mubr.bf16.gmra.mrb[0].mxu0 %v729
        %v844 = vpop.f32.mrb[0].mxu0
        %v845 = vadd.f32 %v760, %v844
        %v846 = vpop.f32.mrb[0].mxu0
        %v847 = vpop.f32.mrb[0].mxu0
        %v848 = vadd.f32 %v760, %v847
        %v849 = vpop.f32.mrb[0].mxu0
        %850 = vmatprep.mubr.bf16.mxu0 0
        %851 = vmatmul.mubr.bf16.gmra.mrb[0].mxu0 %v730
        %v852 = vpop.f32.mrb[0].mxu0
        %v853 = vadd.f32 %v760, %v852
        %v854 = vpop.f32.mrb[0].mxu0
        %v855 = vpop.f32.mrb[0].mxu0
        %v856 = vadd.f32 %v760, %v855
        %v857 = vpop.f32.mrb[0].mxu0
        %858 = vmatprep.mubr.bf16.mxu0 0
        %859 = vmatmul.mubr.bf16.gmra.mrb[0].mxu0 %v731
        %v860 = vpop.f32.mrb[0].mxu0
        %v861 = vadd.f32 %v760, %v860
        %v862 = vpop.f32.mrb[0].mxu0
        %v863 = vpop.f32.mrb[0].mxu0
        %v864 = vadd.f32 %v760, %v863
        %v865 = vpop.f32.mrb[0].mxu0
        %866 = vmatprep.mubr.bf16.mxu0 0
        %867 = vmatmul.mubr.bf16.gmra.mrb[0].mxu0 %v732
        %v868 = vpop.f32.mrb[0].mxu0
        %v869 = vadd.f32 %v760, %v868
        %v870 = vpop.f32.mrb[0].mxu0
        %v871 = vpop.f32.mrb[0].mxu0
        %v872 = vadd.f32 %v760, %v871
        %v873 = vpop.f32.mrb[0].mxu0
        %874 = vmatprep.mubr.bf16.mxu0 0
        %875 = vmatmul.mubr.bf16.gmra.mrb[0].mxu0 %v733
        %v876 = vpop.f32.mrb[0].mxu0
        %v877 = vadd.f32 %v760, %v876
        %v878 = vpop.f32.mrb[0].mxu0
        %v879 = vpop.f32.mrb[0].mxu0
        %v880 = vadd.f32 %v760, %v879
        %v881 = vpop.f32.mrb[0].mxu0
        %882 = vmatprep.mubr.bf16.mxu0 0
        %883 = vmatmul.mubr.bf16.gmra.mrb[0].mxu0 %v734
        %v884 = vpop.f32.mrb[0].mxu0
        %v885 = vadd.f32 %v760, %v884
        %v886 = vpop.f32.mrb[0].mxu0
        %v887 = vpop.f32.mrb[0].mxu0
        %v888 = vadd.f32 %v760, %v887
        %v889 = vpop.f32.mrb[0].mxu0
        %890 = vmatprep.mubr.bf16.mxu0 0
        %891 = vmatmul.mubr.bf16.gmra.mrb[0].mxu0 %v735
        %v892 = vpop.f32.mrb[0].mxu0
        %v893 = vadd.f32 %v760, %v892
        %v894 = vpop.f32.mrb[0].mxu0
        %v895 = vpop.f32.mrb[0].mxu0
        %v896 = vadd.f32 %v760, %v895
        %v897 = vpop.f32.mrb[0].mxu0
        %898 = vmatprep.mubr.bf16.mxu0 0
        %899 = vmatmul.mubr.bf16.gmra.mrb[0].mxu0 %v736
        %v900 = vpop.f32.mrb[0].mxu0
        %v901 = vadd.f32 %v760, %v900
        %v902 = vpop.f32.mrb[0].mxu0
        %v903 = vpop.f32.mrb[0].mxu0
        %v904 = vadd.f32 %v760, %v903
        %v905 = vpop.f32.mrb[0].mxu0
        %906 = vdwg.mxu0
        %v907 = vmax.f32 %v845, 0.0
        %v908 = vmax.f32 %v848, 0.0
        %v909 = vmax.f32 %v853, 0.0
        %v910 = vmax.f32 %v856, 0.0
        %v911 = vmax.f32 %v861, 0.0
        %v912 = vmax.f32 %v864, 0.0
        %v913 = vmax.f32 %v869, 0.0
        %v914 = vmax.f32 %v872, 0.0
        %v915 = vmax.f32 %v877, 0.0
        %v916 = vmax.f32 %v880, 0.0
        %v917 = vmax.f32 %v885, 0.0
        %v918 = vmax.f32 %v888, 0.0
        %v919 = vmax.f32 %v893, 0.0
        %v920 = vmax.f32 %v896, 0.0
        %v921 = vmax.f32 %v901, 0.0
        %v922 = vmax.f32 %v904, 0.0
        %v923 = vpack.c.bf16 %v908, %v907
        %v924 = vpack.c.bf16 %v910, %v909
        %v925 = vpack.c.bf16 %v912, %v911
        %v926 = vpack.c.bf16 %v914, %v913
        %v927 = vpack.c.bf16 %v916, %v915
        %v928 = vpack.c.bf16 %v918, %v917
        %v929 = vpack.c.bf16 %v920, %v919
        %v930 = vpack.c.bf16 %v922, %v921
        %s931 = scalar_lea.vmem [#allocation2], 128
        %v932 = vld [vmem:[%s931] sm:$0xf]
        %v933 = vld [vmem:[%s931 + $0x4] sm:$0xf]
        %v934 = vld [vmem:[%s931 + $0x8] sm:$0xf]
        %v935 = vld [vmem:[%s931 + $0xc] sm:$0xf]
        %v936 = vld [vmem:[%s931 + $0x10] sm:$0xf]
        %v937 = vld [vmem:[%s931 + $0x14] sm:$0xf]
        %v938 = vld [vmem:[%s931 + $0x18] sm:$0xf]
        %v939 = vld [vmem:[%s931 + $0x1c] sm:$0xf]
        %v940 = vld [vmem:[%s931 + $0x20] sm:$0xf]
        %v941 = vld [vmem:[%s931 + $0x24] sm:$0xf]
        %v942 = vld [vmem:[%s931 + $0x28] sm:$0xf]
        %v943 = vld [vmem:[%s931 + $0x2c] sm:$0xf]
        %v944 = vld [vmem:[%s931 + $0x30] sm:$0xf]
        %v945 = vld [vmem:[%s931 + $0x34] sm:$0xf]
        %v946 = vld [vmem:[%s931 + $0x38] sm:$0xf]
        %v947 = vld [vmem:[%s931 + $0x3c] sm:$0xf]
        %s948 = scalar_lea.vmem %s4, 3
        %v949 = vld [vmem:[%s948] sm:$0x1]
        %v951 = vlaneseq
        %v952 = vshrl.u32 %v951, 7
        %v953 = vsub.s32 0, %v952
        %v954 = vrot.slane %v949, %v953
        %v972 = vunpack.c.l.b16 %v932
        %v973 = vunpack.c.l.b16 %v933
        %v974 = vunpack.c.l.b16 %v934
        %v975 = vunpack.c.l.b16 %v935
        %v976 = vunpack.c.l.b16 %v936
        %v977 = vunpack.c.l.b16 %v937
        %v978 = vunpack.c.l.b16 %v938
        %v979 = vunpack.c.l.b16 %v939
        %v980 = vunpack.c.l.b16 %v940
        %v981 = vunpack.c.l.b16 %v941
        %v982 = vunpack.c.l.b16 %v942
        %v983 = vunpack.c.l.b16 %v943
        %v984 = vunpack.c.l.b16 %v944
        %v985 = vunpack.c.l.b16 %v945
        %v986 = vunpack.c.l.b16 %v946
        %v987 = vunpack.c.l.b16 %v947
        %v988 = vpack.c.b16 %v973, %v972
        %v989 = vpack.c.b16 %v975, %v974
        %v990 = vpack.c.b16 %v977, %v976
        %v991 = vpack.c.b16 %v979, %v978
        %v992 = vpack.c.b16 %v981, %v980
        %v993 = vpack.c.b16 %v983, %v982
        %v994 = vpack.c.b16 %v985, %v984
        %v995 = vpack.c.b16 %v987, %v986
        %1004 = vmatprep.subr.bf16.mxu0 0
        %1005 = vmatpush1.bf16.msra.mxu0 %v988
        %1006 = vmatprep.subr.bf16.mxu0 0
        %1007 = vmatpush1.bf16.msra.mxu0 %v989
        %1008 = vmatprep.subr.bf16.mxu0 0
        %1009 = vmatpush1.bf16.msra.mxu0 %v990
        %1010 = vmatprep.subr.bf16.mxu0 0
        %1011 = vmatpush1.bf16.msra.mxu0 %v991
        %1012 = vmatprep.subr.bf16.mxu0 0
        %1013 = vmatpush1.bf16.msra.mxu0 %v992
        %1014 = vmatprep.subr.bf16.mxu0 0
        %1015 = vmatpush1.bf16.msra.mxu0 %v993
        %1016 = vmatprep.subr.bf16.mxu0 0
        %1017 = vmatpush1.bf16.msra.mxu0 %v994
        %1018 = vmatprep.subr.bf16.mxu0 0
        %1019 = vmatpush1.bf16.msra.mxu0 %v995
        %1020 = vmatprep.subr.bf16.mxu0 0
        %1021 = vmatpush1.bf16.msra.mxu0 0
        %1022 = vmatprep.subr.bf16.mxu0 0
        %1023 = vmatpush1.bf16.msra.mxu0 0
        %1024 = vmatprep.subr.bf16.mxu0 0
        %1025 = vmatpush1.bf16.msra.mxu0 0
        %1026 = vmatprep.subr.bf16.mxu0 0
        %1027 = vmatpush1.bf16.msra.mxu0 0
        %1028 = vmatprep.subr.bf16.mxu0 0
        %1029 = vmatpush1.bf16.msra.mxu0 0
        %1030 = vmatprep.subr.bf16.mxu0 0
        %1031 = vmatpush1.bf16.msra.mxu0 0
        %1032 = vmatprep.subr.bf16.mxu0 0
        %1033 = vmatpush1.bf16.msra.mxu0 0
        %1034 = vmatprep.subr.bf16.mxu0 0
        %1035 = vmatpush1.bf16.msra.mxu0 0
        %1036 = vmatprep.mubr.bf16.mxu0 0
        %1037 = vmatmul.mubr.bf16.gmra.mrb[0].mxu0 %v923
        %v1038 = vpop.f32.mrb[0].mxu0
        %v1039 = vadd.f32 %v954, %v1038
        %v1040 = vpop.f32.mrb[0].mxu0
        %v1041 = vpop.f32.mrb[0].mxu0
        %v1042 = vadd.f32 %v954, %v1041
        %v1043 = vpop.f32.mrb[0].mxu0
        %1044 = vmatprep.mubr.bf16.mxu0 0
        %1045 = vmatmul.mubr.bf16.gmra.mrb[0].mxu0 %v924
        %v1046 = vpop.f32.mrb[0].mxu0
        %v1047 = vadd.f32 %v954, %v1046
        %v1048 = vpop.f32.mrb[0].mxu0
        %v1049 = vpop.f32.mrb[0].mxu0
        %v1050 = vadd.f32 %v954, %v1049
        %v1051 = vpop.f32.mrb[0].mxu0
        %1052 = vmatprep.mubr.bf16.mxu0 0
        %1053 = vmatmul.mubr.bf16.gmra.mrb[0].mxu0 %v925
        %v1054 = vpop.f32.mrb[0].mxu0
        %v1055 = vadd.f32 %v954, %v1054
        %v1056 = vpop.f32.mrb[0].mxu0
        %v1057 = vpop.f32.mrb[0].mxu0
        %v1058 = vadd.f32 %v954, %v1057
        %v1059 = vpop.f32.mrb[0].mxu0
        %1060 = vmatprep.mubr.bf16.mxu0 0
        %1061 = vmatmul.mubr.bf16.gmra.mrb[0].mxu0 %v926
        %v1062 = vpop.f32.mrb[0].mxu0
        %v1063 = vadd.f32 %v954, %v1062
        %v1064 = vpop.f32.mrb[0].mxu0
        %v1065 = vpop.f32.mrb[0].mxu0
        %v1066 = vadd.f32 %v954, %v1065
        %v1067 = vpop.f32.mrb[0].mxu0
        %1068 = vmatprep.mubr.bf16.mxu0 0
        %1069 = vmatmul.mubr.bf16.gmra.mrb[0].mxu0 %v927
        %v1070 = vpop.f32.mrb[0].mxu0
        %v1071 = vadd.f32 %v954, %v1070
        %v1072 = vpop.f32.mrb[0].mxu0
        %v1073 = vpop.f32.mrb[0].mxu0
        %v1074 = vadd.f32 %v954, %v1073
        %v1075 = vpop.f32.mrb[0].mxu0
        %1076 = vmatprep.mubr.bf16.mxu0 0
        %1077 = vmatmul.mubr.bf16.gmra.mrb[0].mxu0 %v928
        %v1078 = vpop.f32.mrb[0].mxu0
        %v1079 = vadd.f32 %v954, %v1078
        %v1080 = vpop.f32.mrb[0].mxu0
        %v1081 = vpop.f32.mrb[0].mxu0
        %v1082 = vadd.f32 %v954, %v1081
        %v1083 = vpop.f32.mrb[0].mxu0
        %1084 = vmatprep.mubr.bf16.mxu0 0
        %1085 = vmatmul.mubr.bf16.gmra.mrb[0].mxu0 %v929
        %v1086 = vpop.f32.mrb[0].mxu0
        %v1087 = vadd.f32 %v954, %v1086
        %v1088 = vpop.f32.mrb[0].mxu0
        %v1089 = vpop.f32.mrb[0].mxu0
        %v1090 = vadd.f32 %v954, %v1089
        %v1091 = vpop.f32.mrb[0].mxu0
        %1092 = vmatprep.mubr.bf16.mxu0 0
        %1093 = vmatmul.mubr.bf16.gmra.mrb[0].mxu0 %v930
        %v1094 = vpop.f32.mrb[0].mxu0
        %v1095 = vadd.f32 %v954, %v1094
        %v1096 = vpop.f32.mrb[0].mxu0
        %v1097 = vpop.f32.mrb[0].mxu0
        %v1098 = vadd.f32 %v954, %v1097
        %v1099 = vpop.f32.mrb[0].mxu0
        %1100 = vdwg.mxu0
        %v1101 = vmax.f32 %v1039, 0.0
        %v1102 = vmax.f32 %v1042, 0.0
        %v1103 = vmax.f32 %v1047, 0.0
        %v1104 = vmax.f32 %v1050, 0.0
        %v1105 = vmax.f32 %v1055, 0.0
        %v1106 = vmax.f32 %v1058, 0.0
        %v1107 = vmax.f32 %v1063, 0.0
        %v1108 = vmax.f32 %v1066, 0.0
        %v1109 = vmax.f32 %v1071, 0.0
        %v1110 = vmax.f32 %v1074, 0.0
        %v1111 = vmax.f32 %v1079, 0.0
        %v1112 = vmax.f32 %v1082, 0.0
        %v1113 = vmax.f32 %v1087, 0.0
        %v1114 = vmax.f32 %v1090, 0.0
        %v1115 = vmax.f32 %v1095, 0.0
        %v1116 = vmax.f32 %v1098, 0.0
        %v1117 = vpack.c.bf16 %v1102, %v1101
        %v1118 = vpack.c.bf16 %v1104, %v1103
        %v1119 = vpack.c.bf16 %v1106, %v1105
        %v1120 = vpack.c.bf16 %v1108, %v1107
        %v1121 = vpack.c.bf16 %v1110, %v1109
        %v1122 = vpack.c.bf16 %v1112, %v1111
        %v1123 = vpack.c.bf16 %v1114, %v1113
        %v1124 = vpack.c.bf16 %v1116, %v1115
        %s1125 = scalar_lea.vmem [#allocation2], 192
        %v1126 = vld [vmem:[%s1125] sm:$0xf]
        %v1127 = vld [vmem:[%s1125 + $0x4] sm:$0xf]
        %v1128 = vld [vmem:[%s1125 + $0x8] sm:$0xf]
        %v1129 = vld [vmem:[%s1125 + $0xc] sm:$0xf]
        %v1130 = vld [vmem:[%s1125 + $0x10] sm:$0xf]
        %v1131 = vld [vmem:[%s1125 + $0x14] sm:$0xf]
        %v1132 = vld [vmem:[%s1125 + $0x18] sm:$0xf]
        %v1133 = vld [vmem:[%s1125 + $0x1c] sm:$0xf]
        %v1134 = vld [vmem:[%s1125 + $0x20] sm:$0xf]
        %v1135 = vld [vmem:[%s1125 + $0x24] sm:$0xf]
        %v1136 = vld [vmem:[%s1125 + $0x28] sm:$0xf]
        %v1137 = vld [vmem:[%s1125 + $0x2c] sm:$0xf]
        %v1138 = vld [vmem:[%s1125 + $0x30] sm:$0xf]
        %v1139 = vld [vmem:[%s1125 + $0x34] sm:$0xf]
        %v1140 = vld [vmem:[%s1125 + $0x38] sm:$0xf]
        %v1141 = vld [vmem:[%s1125 + $0x3c] sm:$0xf]
        %v1158 = vunpack.c.l.b16 %v1126
        %v1159 = vunpack.c.l.b16 %v1127
        %v1160 = vunpack.c.l.b16 %v1128
        %v1161 = vunpack.c.l.b16 %v1129
        %v1162 = vunpack.c.l.b16 %v1130
        %v1163 = vunpack.c.l.b16 %v1131
        %v1164 = vunpack.c.l.b16 %v1132
        %v1165 = vunpack.c.l.b16 %v1133
        %v1166 = vunpack.c.l.b16 %v1134
        %v1167 = vunpack.c.l.b16 %v1135
        %v1168 = vunpack.c.l.b16 %v1136
        %v1169 = vunpack.c.l.b16 %v1137
        %v1170 = vunpack.c.l.b16 %v1138
        %v1171 = vunpack.c.l.b16 %v1139
        %v1172 = vunpack.c.l.b16 %v1140
        %v1173 = vunpack.c.l.b16 %v1141
        %v1174 = vpack.c.b16 %v1159, %v1158
        %v1175 = vpack.c.b16 %v1161, %v1160
        %v1176 = vpack.c.b16 %v1163, %v1162
        %v1177 = vpack.c.b16 %v1165, %v1164
        %v1178 = vpack.c.b16 %v1167, %v1166
        %v1179 = vpack.c.b16 %v1169, %v1168
        %v1180 = vpack.c.b16 %v1171, %v1170
        %v1181 = vpack.c.b16 %v1173, %v1172
        %1190 = vmatprep.subr.bf16.mxu0 0
        %1191 = vmatpush1.bf16.msra.mxu0 %v1174
        %1192 = vmatprep.subr.bf16.mxu0 0
        %1193 = vmatpush1.bf16.msra.mxu0 %v1175
        %1194 = vmatprep.subr.bf16.mxu0 0
        %1195 = vmatpush1.bf16.msra.mxu0 %v1176
        %1196 = vmatprep.subr.bf16.mxu0 0
        %1197 = vmatpush1.bf16.msra.mxu0 %v1177
        %1198 = vmatprep.subr.bf16.mxu0 0
        %1199 = vmatpush1.bf16.msra.mxu0 %v1178
        %1200 = vmatprep.subr.bf16.mxu0 0
        %1201 = vmatpush1.bf16.msra.mxu0 %v1179
        %1202 = vmatprep.subr.bf16.mxu0 0
        %1203 = vmatpush1.bf16.msra.mxu0 %v1180
        %1204 = vmatprep.subr.bf16.mxu0 0
        %1205 = vmatpush1.bf16.msra.mxu0 %v1181
        %1206 = vmatprep.subr.bf16.mxu0 0
        %1207 = vmatpush1.bf16.msra.mxu0 0
        %1208 = vmatprep.subr.bf16.mxu0 0
        %1209 = vmatpush1.bf16.msra.mxu0 0
        %1210 = vmatprep.subr.bf16.mxu0 0
        %1211 = vmatpush1.bf16.msra.mxu0 0
        %1212 = vmatprep.subr.bf16.mxu0 0
        %1213 = vmatpush1.bf16.msra.mxu0 0
        %1214 = vmatprep.subr.bf16.mxu0 0
        %1215 = vmatpush1.bf16.msra.mxu0 0
        %1216 = vmatprep.subr.bf16.mxu0 0
        %1217 = vmatpush1.bf16.msra.mxu0 0
        %1218 = vmatprep.subr.bf16.mxu0 0
        %1219 = vmatpush1.bf16.msra.mxu0 0
        %1220 = vmatprep.subr.bf16.mxu0 0
        %1221 = vmatpush1.bf16.msra.mxu0 0
        %1222 = vmatprep.mubr.bf16.mxu0 0
        %1223 = vmatmul.mubr.bf16.gmra.mrb[0].mxu0 %v1117
        %v1224 = vpop.f32.mrb[0].mxu0
        %v1225 = vadd.f32 %v405, %v1224
        %v1226 = vpop.f32.mrb[0].mxu0
        %v1227 = vpop.f32.mrb[0].mxu0
        %v1228 = vadd.f32 %v411, %v1227
        %v1229 = vpop.f32.mrb[0].mxu0
        %1230 = vmatprep.mubr.bf16.mxu0 0
        %1231 = vmatmul.mubr.bf16.gmra.mrb[0].mxu0 %v1118
        %v1232 = vpop.f32.mrb[0].mxu0
        %v1233 = vadd.f32 %v417, %v1232
        %v1234 = vpop.f32.mrb[0].mxu0
        %v1235 = vpop.f32.mrb[0].mxu0
        %v1236 = vadd.f32 %v423, %v1235
        %v1237 = vpop.f32.mrb[0].mxu0
        %1238 = vmatprep.mubr.bf16.mxu0 0
        %1239 = vmatmul.mubr.bf16.gmra.mrb[0].mxu0 %v1119
        %v1240 = vpop.f32.mrb[0].mxu0
        %v1241 = vadd.f32 %v429, %v1240
        %v1242 = vpop.f32.mrb[0].mxu0
        %v1243 = vpop.f32.mrb[0].mxu0
        %v1244 = vadd.f32 %v435, %v1243
        %v1245 = vpop.f32.mrb[0].mxu0
        %1246 = vmatprep.mubr.bf16.mxu0 0
        %1247 = vmatmul.mubr.bf16.gmra.mrb[0].mxu0 %v1120
        %v1248 = vpop.f32.mrb[0].mxu0
        %v1249 = vadd.f32 %v441, %v1248
        %v1250 = vpop.f32.mrb[0].mxu0
        %v1251 = vpop.f32.mrb[0].mxu0
        %v1252 = vadd.f32 %v447, %v1251
        %v1253 = vpop.f32.mrb[0].mxu0
        %1254 = vmatprep.mubr.bf16.mxu0 0
        %1255 = vmatmul.mubr.bf16.gmra.mrb[0].mxu0 %v1121
        %v1256 = vpop.f32.mrb[0].mxu0
        %v1257 = vadd.f32 %v453, %v1256
        %v1258 = vpop.f32.mrb[0].mxu0
        %v1259 = vpop.f32.mrb[0].mxu0
        %v1260 = vadd.f32 %v459, %v1259
        %v1261 = vpop.f32.mrb[0].mxu0
        %1262 = vmatprep.mubr.bf16.mxu0 0
        %1263 = vmatmul.mubr.bf16.gmra.mrb[0].mxu0 %v1122
        %v1264 = vpop.f32.mrb[0].mxu0
        %v1265 = vadd.f32 %v465, %v1264
        %v1266 = vpop.f32.mrb[0].mxu0
        %v1267 = vpop.f32.mrb[0].mxu0
        %v1268 = vadd.f32 %v471, %v1267
        %v1269 = vpop.f32.mrb[0].mxu0
        %1270 = vmatprep.mubr.bf16.mxu0 0
        %1271 = vmatmul.mubr.bf16.gmra.mrb[0].mxu0 %v1123
        %v1272 = vpop.f32.mrb[0].mxu0
        %v1273 = vadd.f32 %v477, %v1272
        %v1274 = vpop.f32.mrb[0].mxu0
        %v1275 = vpop.f32.mrb[0].mxu0
        %v1276 = vadd.f32 %v483, %v1275
        %v1277 = vpop.f32.mrb[0].mxu0
        %1278 = vmatprep.mubr.bf16.mxu0 0
        %1279 = vmatmul.mubr.bf16.gmra.mrb[0].mxu0 %v1124
        %v1280 = vpop.f32.mrb[0].mxu0
        %v1281 = vadd.f32 %v489, %v1280
        %v1282 = vpop.f32.mrb[0].mxu0
        %v1283 = vpop.f32.mrb[0].mxu0
        %v1284 = vadd.f32 %v495, %v1283
        %v1285 = vpop.f32.mrb[0].mxu0
        %1286 = vdwg.mxu0
        %s1287 = scalar_lea.vmem %s4, 4
        %v1288 = vld [vmem:[%s1287] sm:$0x1]
        %v1290 = vlaneseq
        %v1291 = vshrl.u32 %v1290, 7
        %v1292 = vsub.s32 0, %v1291
        %v1293 = vrot.slane %v1288, %v1292
        %v1295 = vadd.f32 %v1225, %v1293
        %v1296 = vadd.f32 %v1228, %v1293
        %v1297 = vadd.f32 %v1233, %v1293
        %v1298 = vadd.f32 %v1236, %v1293
        %v1299 = vadd.f32 %v1241, %v1293
        %v1300 = vadd.f32 %v1244, %v1293
        %v1301 = vadd.f32 %v1249, %v1293
        %v1302 = vadd.f32 %v1252, %v1293
        %v1303 = vadd.f32 %v1257, %v1293
        %v1304 = vadd.f32 %v1260, %v1293
        %v1305 = vadd.f32 %v1265, %v1293
        %v1306 = vadd.f32 %v1268, %v1293
        %v1307 = vadd.f32 %v1273, %v1293
        %v1308 = vadd.f32 %v1276, %v1293
        %v1309 = vadd.f32 %v1281, %v1293
        %v1310 = vadd.f32 %v1284, %v1293
        %v1311 = vmax.f32 %v1295, 0.0
        %v1312 = vmax.f32 %v1296, 0.0
        %v1313 = vmax.f32 %v1297, 0.0
        %v1314 = vmax.f32 %v1298, 0.0
        %v1315 = vmax.f32 %v1299, 0.0
        %v1316 = vmax.f32 %v1300, 0.0
        %v1317 = vmax.f32 %v1301, 0.0
        %v1318 = vmax.f32 %v1302, 0.0
        %v1319 = vmax.f32 %v1303, 0.0
        %v1320 = vmax.f32 %v1304, 0.0
        %v1321 = vmax.f32 %v1305, 0.0
        %v1322 = vmax.f32 %v1306, 0.0
        %v1323 = vmax.f32 %v1307, 0.0
        %v1324 = vmax.f32 %v1308, 0.0
        %v1325 = vmax.f32 %v1309, 0.0
        %v1326 = vmax.f32 %v1310, 0.0
        %v1327 = vpack.c.bf16 %v1312, %v1311
        %v1328 = vpack.c.bf16 %v1314, %v1313
        %v1329 = vpack.c.bf16 %v1316, %v1315
        %v1330 = vpack.c.bf16 %v1318, %v1317
        %v1331 = vpack.c.bf16 %v1320, %v1319
        %v1332 = vpack.c.bf16 %v1322, %v1321
        %v1333 = vpack.c.bf16 %v1324, %v1323
        %v1334 = vpack.c.bf16 %v1326, %v1325
        %s1335 = scalar_lea.vmem [#allocation2], 256
        %v1336 = vld [vmem:[%s1335] sm:$0xf]
        %v1337 = vld [vmem:[%s1335 + $0x4] sm:$0xf]
        %v1338 = vld [vmem:[%s1335 + $0x8] sm:$0xf]
        %v1339 = vld [vmem:[%s1335 + $0xc] sm:$0xf]
        %v1340 = vld [vmem:[%s1335 + $0x10] sm:$0xf]
        %v1341 = vld [vmem:[%s1335 + $0x14] sm:$0xf]
        %v1342 = vld [vmem:[%s1335 + $0x18] sm:$0xf]
        %v1343 = vld [vmem:[%s1335 + $0x1c] sm:$0xf]
        %v1344 = vld [vmem:[%s1335 + $0x20] sm:$0xf]
        %v1345 = vld [vmem:[%s1335 + $0x24] sm:$0xf]
        %v1346 = vld [vmem:[%s1335 + $0x28] sm:$0xf]
        %v1347 = vld [vmem:[%s1335 + $0x2c] sm:$0xf]
        %v1348 = vld [vmem:[%s1335 + $0x30] sm:$0xf]
        %v1349 = vld [vmem:[%s1335 + $0x34] sm:$0xf]
        %v1350 = vld [vmem:[%s1335 + $0x38] sm:$0xf]
        %v1351 = vld [vmem:[%s1335 + $0x3c] sm:$0xf]
        %s1352 = scalar_lea.vmem %s4, 5
        %v1353 = vld [vmem:[%s1352] sm:$0x1]
        %v1355 = vlaneseq
        %v1356 = vshrl.u32 %v1355, 7
        %v1357 = vsub.s32 0, %v1356
        %v1358 = vrot.slane %v1353, %v1357
        %v1376 = vunpack.c.l.b16 %v1336
        %v1377 = vunpack.c.l.b16 %v1337
        %v1378 = vunpack.c.l.b16 %v1338
        %v1379 = vunpack.c.l.b16 %v1339
        %v1380 = vunpack.c.l.b16 %v1340
        %v1381 = vunpack.c.l.b16 %v1341
        %v1382 = vunpack.c.l.b16 %v1342
        %v1383 = vunpack.c.l.b16 %v1343
        %v1384 = vunpack.c.l.b16 %v1344
        %v1385 = vunpack.c.l.b16 %v1345
        %v1386 = vunpack.c.l.b16 %v1346
        %v1387 = vunpack.c.l.b16 %v1347
        %v1388 = vunpack.c.l.b16 %v1348
        %v1389 = vunpack.c.l.b16 %v1349
        %v1390 = vunpack.c.l.b16 %v1350
        %v1391 = vunpack.c.l.b16 %v1351
        %v1392 = vpack.c.b16 %v1377, %v1376
        %v1393 = vpack.c.b16 %v1379, %v1378
        %v1394 = vpack.c.b16 %v1381, %v1380
        %v1395 = vpack.c.b16 %v1383, %v1382
        %v1396 = vpack.c.b16 %v1385, %v1384
        %v1397 = vpack.c.b16 %v1387, %v1386
        %v1398 = vpack.c.b16 %v1389, %v1388
        %v1399 = vpack.c.b16 %v1391, %v1390
        %1408 = vmatprep.subr.bf16.mxu0 0
        %1409 = vmatpush1.bf16.msra.mxu0 %v1392
        %1410 = vmatprep.subr.bf16.mxu0 0
        %1411 = vmatpush1.bf16.msra.mxu0 %v1393
        %1412 = vmatprep.subr.bf16.mxu0 0
        %1413 = vmatpush1.bf16.msra.mxu0 %v1394
        %1414 = vmatprep.subr.bf16.mxu0 0
        %1415 = vmatpush1.bf16.msra.mxu0 %v1395
        %1416 = vmatprep.subr.bf16.mxu0 0
        %1417 = vmatpush1.bf16.msra.mxu0 %v1396
        %1418 = vmatprep.subr.bf16.mxu0 0
        %1419 = vmatpush1.bf16.msra.mxu0 %v1397
        %1420 = vmatprep.subr.bf16.mxu0 0
        %1421 = vmatpush1.bf16.msra.mxu0 %v1398
        %1422 = vmatprep.subr.bf16.mxu0 0
        %1423 = vmatpush1.bf16.msra.mxu0 %v1399
        %1424 = vmatprep.subr.bf16.mxu0 0
        %1425 = vmatpush1.bf16.msra.mxu0 0
        %1426 = vmatprep.subr.bf16.mxu0 0
        %1427 = vmatpush1.bf16.msra.mxu0 0
        %1428 = vmatprep.subr.bf16.mxu0 0
        %1429 = vmatpush1.bf16.msra.mxu0 0
        %1430 = vmatprep.subr.bf16.mxu0 0
        %1431 = vmatpush1.bf16.msra.mxu0 0
        %1432 = vmatprep.subr.bf16.mxu0 0
        %1433 = vmatpush1.bf16.msra.mxu0 0
        %1434 = vmatprep.subr.bf16.mxu0 0
        %1435 = vmatpush1.bf16.msra.mxu0 0
        %1436 = vmatprep.subr.bf16.mxu0 0
        %1437 = vmatpush1.bf16.msra.mxu0 0
        %1438 = vmatprep.subr.bf16.mxu0 0
        %1439 = vmatpush1.bf16.msra.mxu0 0
        %1440 = vmatprep.mubr.bf16.mxu0 0
        %1441 = vmatmul.mubr.bf16.gmra.mrb[0].mxu0 %v1327
        %v1442 = vpop.f32.mrb[0].mxu0
        %v1443 = vadd.f32 %v1358, %v1442
        %v1444 = vpop.f32.mrb[0].mxu0
        %v1445 = vpop.f32.mrb[0].mxu0
        %v1446 = vadd.f32 %v1358, %v1445
        %v1447 = vpop.f32.mrb[0].mxu0
        %1448 = vmatprep.mubr.bf16.mxu0 0
        %1449 = vmatmul.mubr.bf16.gmra.mrb[0].mxu0 %v1328
        %v1450 = vpop.f32.mrb[0].mxu0
        %v1451 = vadd.f32 %v1358, %v1450
        %v1452 = vpop.f32.mrb[0].mxu0
        %v1453 = vpop.f32.mrb[0].mxu0
        %v1454 = vadd.f32 %v1358, %v1453
        %v1455 = vpop.f32.mrb[0].mxu0
        %1456 = vmatprep.mubr.bf16.mxu0 0
        %1457 = vmatmul.mubr.bf16.gmra.mrb[0].mxu0 %v1329
        %v1458 = vpop.f32.mrb[0].mxu0
        %v1459 = vadd.f32 %v1358, %v1458
        %v1460 = vpop.f32.mrb[0].mxu0
        %v1461 = vpop.f32.mrb[0].mxu0
        %v1462 = vadd.f32 %v1358, %v1461
        %v1463 = vpop.f32.mrb[0].mxu0
        %1464 = vmatprep.mubr.bf16.mxu0 0
        %1465 = vmatmul.mubr.bf16.gmra.mrb[0].mxu0 %v1330
        %v1466 = vpop.f32.mrb[0].mxu0
        %v1467 = vadd.f32 %v1358, %v1466
        %v1468 = vpop.f32.mrb[0].mxu0
        %v1469 = vpop.f32.mrb[0].mxu0
        %v1470 = vadd.f32 %v1358, %v1469
        %v1471 = vpop.f32.mrb[0].mxu0
        %1472 = vmatprep.mubr.bf16.mxu0 0
        %1473 = vmatmul.mubr.bf16.gmra.mrb[0].mxu0 %v1331
        %v1474 = vpop.f32.mrb[0].mxu0
        %v1475 = vadd.f32 %v1358, %v1474
        %v1476 = vpop.f32.mrb[0].mxu0
        %v1477 = vpop.f32.mrb[0].mxu0
        %v1478 = vadd.f32 %v1358, %v1477
        %v1479 = vpop.f32.mrb[0].mxu0
        %1480 = vmatprep.mubr.bf16.mxu0 0
        %1481 = vmatmul.mubr.bf16.gmra.mrb[0].mxu0 %v1332
        %v1482 = vpop.f32.mrb[0].mxu0
        %v1483 = vadd.f32 %v1358, %v1482
        %v1484 = vpop.f32.mrb[0].mxu0
        %v1485 = vpop.f32.mrb[0].mxu0
        %v1486 = vadd.f32 %v1358, %v1485
        %v1487 = vpop.f32.mrb[0].mxu0
        %1488 = vmatprep.mubr.bf16.mxu0 0
        %1489 = vmatmul.mubr.bf16.gmra.mrb[0].mxu0 %v1333
        %v1490 = vpop.f32.mrb[0].mxu0
        %v1491 = vadd.f32 %v1358, %v1490
        %v1492 = vpop.f32.mrb[0].mxu0
        %v1493 = vpop.f32.mrb[0].mxu0
        %v1494 = vadd.f32 %v1358, %v1493
        %v1495 = vpop.f32.mrb[0].mxu0
        %1496 = vmatprep.mubr.bf16.mxu0 0
        %1497 = vmatmul.mubr.bf16.gmra.mrb[0].mxu0 %v1334
        %v1498 = vpop.f32.mrb[0].mxu0
        %v1499 = vadd.f32 %v1358, %v1498
        %v1500 = vpop.f32.mrb[0].mxu0
        %v1501 = vpop.f32.mrb[0].mxu0
        %v1502 = vadd.f32 %v1358, %v1501
        %v1503 = vpop.f32.mrb[0].mxu0
        %1504 = vdwg.mxu0
        %v1505 = vmax.f32 %v1443, 0.0
        %v1506 = vmax.f32 %v1446, 0.0
        %v1507 = vmax.f32 %v1451, 0.0
        %v1508 = vmax.f32 %v1454, 0.0
        %v1509 = vmax.f32 %v1459, 0.0
        %v1510 = vmax.f32 %v1462, 0.0
        %v1511 = vmax.f32 %v1467, 0.0
        %v1512 = vmax.f32 %v1470, 0.0
        %v1513 = vmax.f32 %v1475, 0.0
        %v1514 = vmax.f32 %v1478, 0.0
        %v1515 = vmax.f32 %v1483, 0.0
        %v1516 = vmax.f32 %v1486, 0.0
        %v1517 = vmax.f32 %v1491, 0.0
        %v1518 = vmax.f32 %v1494, 0.0
        %v1519 = vmax.f32 %v1499, 0.0
        %v1520 = vmax.f32 %v1502, 0.0
        %v1521 = vpack.c.bf16 %v1506, %v1505
        %v1522 = vpack.c.bf16 %v1508, %v1507
        %v1523 = vpack.c.bf16 %v1510, %v1509
        %v1524 = vpack.c.bf16 %v1512, %v1511
        %v1525 = vpack.c.bf16 %v1514, %v1513
        %v1526 = vpack.c.bf16 %v1516, %v1515
        %v1527 = vpack.c.bf16 %v1518, %v1517
        %v1528 = vpack.c.bf16 %v1520, %v1519
        %s1529 = scalar_lea.vmem [#allocation2], 320
        %v1530 = vld [vmem:[%s1529] sm:$0xf]
        %v1531 = vld [vmem:[%s1529 + $0x4] sm:$0xf]
        %v1532 = vld [vmem:[%s1529 + $0x8] sm:$0xf]
        %v1533 = vld [vmem:[%s1529 + $0xc] sm:$0xf]
        %v1534 = vld [vmem:[%s1529 + $0x10] sm:$0xf]
        %v1535 = vld [vmem:[%s1529 + $0x14] sm:$0xf]
        %v1536 = vld [vmem:[%s1529 + $0x18] sm:$0xf]
        %v1537 = vld [vmem:[%s1529 + $0x1c] sm:$0xf]
        %v1538 = vld [vmem:[%s1529 + $0x20] sm:$0xf]
        %v1539 = vld [vmem:[%s1529 + $0x24] sm:$0xf]
        %v1540 = vld [vmem:[%s1529 + $0x28] sm:$0xf]
        %v1541 = vld [vmem:[%s1529 + $0x2c] sm:$0xf]
        %v1542 = vld [vmem:[%s1529 + $0x30] sm:$0xf]
        %v1543 = vld [vmem:[%s1529 + $0x34] sm:$0xf]
        %v1544 = vld [vmem:[%s1529 + $0x38] sm:$0xf]
        %v1545 = vld [vmem:[%s1529 + $0x3c] sm:$0xf]
        %s1546 = scalar_lea.vmem %s4, 6
        %v1547 = vld [vmem:[%s1546] sm:$0x1]
        %v1549 = vlaneseq
        %v1550 = vshrl.u32 %v1549, 7
        %v1551 = vsub.s32 0, %v1550
        %v1552 = vrot.slane %v1547, %v1551
        %v1570 = vunpack.c.l.b16 %v1530
        %v1571 = vunpack.c.l.b16 %v1531
        %v1572 = vunpack.c.l.b16 %v1532
        %v1573 = vunpack.c.l.b16 %v1533
        %v1574 = vunpack.c.l.b16 %v1534
        %v1575 = vunpack.c.l.b16 %v1535
        %v1576 = vunpack.c.l.b16 %v1536
        %v1577 = vunpack.c.l.b16 %v1537
        %v1578 = vunpack.c.l.b16 %v1538
        %v1579 = vunpack.c.l.b16 %v1539
        %v1580 = vunpack.c.l.b16 %v1540
        %v1581 = vunpack.c.l.b16 %v1541
        %v1582 = vunpack.c.l.b16 %v1542
        %v1583 = vunpack.c.l.b16 %v1543
        %v1584 = vunpack.c.l.b16 %v1544
        %v1585 = vunpack.c.l.b16 %v1545
        %v1586 = vpack.c.b16 %v1571, %v1570
        %v1587 = vpack.c.b16 %v1573, %v1572
        %v1588 = vpack.c.b16 %v1575, %v1574
        %v1589 = vpack.c.b16 %v1577, %v1576
        %v1590 = vpack.c.b16 %v1579, %v1578
        %v1591 = vpack.c.b16 %v1581, %v1580
        %v1592 = vpack.c.b16 %v1583, %v1582
        %v1593 = vpack.c.b16 %v1585, %v1584
        %1602 = vmatprep.subr.bf16.mxu0 0
        %1603 = vmatpush1.bf16.msra.mxu0 %v1586
        %1604 = vmatprep.subr.bf16.mxu0 0
        %1605 = vmatpush1.bf16.msra.mxu0 %v1587
        %1606 = vmatprep.subr.bf16.mxu0 0
        %1607 = vmatpush1.bf16.msra.mxu0 %v1588
        %1608 = vmatprep.subr.bf16.mxu0 0
        %1609 = vmatpush1.bf16.msra.mxu0 %v1589
        %1610 = vmatprep.subr.bf16.mxu0 0
        %1611 = vmatpush1.bf16.msra.mxu0 %v1590
        %1612 = vmatprep.subr.bf16.mxu0 0
        %1613 = vmatpush1.bf16.msra.mxu0 %v1591
        %1614 = vmatprep.subr.bf16.mxu0 0
        %1615 = vmatpush1.bf16.msra.mxu0 %v1592
        %1616 = vmatprep.subr.bf16.mxu0 0
        %1617 = vmatpush1.bf16.msra.mxu0 %v1593
        %1618 = vmatprep.subr.bf16.mxu0 0
        %1619 = vmatpush1.bf16.msra.mxu0 0
        %1620 = vmatprep.subr.bf16.mxu0 0
        %1621 = vmatpush1.bf16.msra.mxu0 0
        %1622 = vmatprep.subr.bf16.mxu0 0
        %1623 = vmatpush1.bf16.msra.mxu0 0
        %1624 = vmatprep.subr.bf16.mxu0 0
        %1625 = vmatpush1.bf16.msra.mxu0 0
        %1626 = vmatprep.subr.bf16.mxu0 0
        %1627 = vmatpush1.bf16.msra.mxu0 0
        %1628 = vmatprep.subr.bf16.mxu0 0
        %1629 = vmatpush1.bf16.msra.mxu0 0
        %1630 = vmatprep.subr.bf16.mxu0 0
        %1631 = vmatpush1.bf16.msra.mxu0 0
        %1632 = vmatprep.subr.bf16.mxu0 0
        %1633 = vmatpush1.bf16.msra.mxu0 0
        %1634 = vmatprep.mubr.bf16.mxu0 0
        %1635 = vmatmul.mubr.bf16.gmra.mrb[0].mxu0 %v1521
        %v1636 = vpop.f32.mrb[0].mxu0
        %v1637 = vadd.f32 %v1552, %v1636
        %v1638 = vpop.f32.mrb[0].mxu0
        %v1639 = vpop.f32.mrb[0].mxu0
        %v1640 = vadd.f32 %v1552, %v1639
        %v1641 = vpop.f32.mrb[0].mxu0
        %1642 = vmatprep.mubr.bf16.mxu0 0
        %1643 = vmatmul.mubr.bf16.gmra.mrb[0].mxu0 %v1522
        %v1644 = vpop.f32.mrb[0].mxu0
        %v1645 = vadd.f32 %v1552, %v1644
        %v1646 = vpop.f32.mrb[0].mxu0
        %v1647 = vpop.f32.mrb[0].mxu0
        %v1648 = vadd.f32 %v1552, %v1647
        %v1649 = vpop.f32.mrb[0].mxu0
        %1650 = vmatprep.mubr.bf16.mxu0 0
        %1651 = vmatmul.mubr.bf16.gmra.mrb[0].mxu0 %v1523
        %v1652 = vpop.f32.mrb[0].mxu0
        %v1653 = vadd.f32 %v1552, %v1652
        %v1654 = vpop.f32.mrb[0].mxu0
        %v1655 = vpop.f32.mrb[0].mxu0
        %v1656 = vadd.f32 %v1552, %v1655
        %v1657 = vpop.f32.mrb[0].mxu0
        %1658 = vmatprep.mubr.bf16.mxu0 0
        %1659 = vmatmul.mubr.bf16.gmra.mrb[0].mxu0 %v1524
        %v1660 = vpop.f32.mrb[0].mxu0
        %v1661 = vadd.f32 %v1552, %v1660
        %v1662 = vpop.f32.mrb[0].mxu0
        %v1663 = vpop.f32.mrb[0].mxu0
        %v1664 = vadd.f32 %v1552, %v1663
        %v1665 = vpop.f32.mrb[0].mxu0
        %1666 = vmatprep.mubr.bf16.mxu0 0
        %1667 = vmatmul.mubr.bf16.gmra.mrb[0].mxu0 %v1525
        %v1668 = vpop.f32.mrb[0].mxu0
        %v1669 = vadd.f32 %v1552, %v1668
        %v1670 = vpop.f32.mrb[0].mxu0
        %v1671 = vpop.f32.mrb[0].mxu0
        %v1672 = vadd.f32 %v1552, %v1671
        %v1673 = vpop.f32.mrb[0].mxu0
        %1674 = vmatprep.mubr.bf16.mxu0 0
        %1675 = vmatmul.mubr.bf16.gmra.mrb[0].mxu0 %v1526
        %v1676 = vpop.f32.mrb[0].mxu0
        %v1677 = vadd.f32 %v1552, %v1676
        %v1678 = vpop.f32.mrb[0].mxu0
        %v1679 = vpop.f32.mrb[0].mxu0
        %v1680 = vadd.f32 %v1552, %v1679
        %v1681 = vpop.f32.mrb[0].mxu0
        %1682 = vmatprep.mubr.bf16.mxu0 0
        %1683 = vmatmul.mubr.bf16.gmra.mrb[0].mxu0 %v1527
        %v1684 = vpop.f32.mrb[0].mxu0
        %v1685 = vadd.f32 %v1552, %v1684
        %v1686 = vpop.f32.mrb[0].mxu0
        %v1687 = vpop.f32.mrb[0].mxu0
        %v1688 = vadd.f32 %v1552, %v1687
        %v1689 = vpop.f32.mrb[0].mxu0
        %1690 = vmatprep.mubr.bf16.mxu0 0
        %1691 = vmatmul.mubr.bf16.gmra.mrb[0].mxu0 %v1528
        %v1692 = vpop.f32.mrb[0].mxu0
        %v1693 = vadd.f32 %v1552, %v1692
        %v1694 = vpop.f32.mrb[0].mxu0
        %v1695 = vpop.f32.mrb[0].mxu0
        %v1696 = vadd.f32 %v1552, %v1695
        %v1697 = vpop.f32.mrb[0].mxu0
        %1698 = vdwg.mxu0
        %v1699 = vmax.f32 %v1637, 0.0
        %v1700 = vmax.f32 %v1640, 0.0
        %v1701 = vmax.f32 %v1645, 0.0
        %v1702 = vmax.f32 %v1648, 0.0
        %v1703 = vmax.f32 %v1653, 0.0
        %v1704 = vmax.f32 %v1656, 0.0
        %v1705 = vmax.f32 %v1661, 0.0
        %v1706 = vmax.f32 %v1664, 0.0
        %v1707 = vmax.f32 %v1669, 0.0
        %v1708 = vmax.f32 %v1672, 0.0
        %v1709 = vmax.f32 %v1677, 0.0
        %v1710 = vmax.f32 %v1680, 0.0
        %v1711 = vmax.f32 %v1685, 0.0
        %v1712 = vmax.f32 %v1688, 0.0
        %v1713 = vmax.f32 %v1693, 0.0
        %v1714 = vmax.f32 %v1696, 0.0
        %v1715 = vpack.c.bf16 %v1700, %v1699
        %v1716 = vpack.c.bf16 %v1702, %v1701
        %v1717 = vpack.c.bf16 %v1704, %v1703
        %v1718 = vpack.c.bf16 %v1706, %v1705
        %v1719 = vpack.c.bf16 %v1708, %v1707
        %v1720 = vpack.c.bf16 %v1710, %v1709
        %v1721 = vpack.c.bf16 %v1712, %v1711
        %v1722 = vpack.c.bf16 %v1714, %v1713
        %s1723 = scalar_lea.vmem [#allocation2], 384
        %v1724 = vld [vmem:[%s1723] sm:$0xf]
        %v1725 = vld [vmem:[%s1723 + $0x4] sm:$0xf]
        %v1726 = vld [vmem:[%s1723 + $0x8] sm:$0xf]
        %v1727 = vld [vmem:[%s1723 + $0xc] sm:$0xf]
        %v1728 = vld [vmem:[%s1723 + $0x10] sm:$0xf]
        %v1729 = vld [vmem:[%s1723 + $0x14] sm:$0xf]
        %v1730 = vld [vmem:[%s1723 + $0x18] sm:$0xf]
        %v1731 = vld [vmem:[%s1723 + $0x1c] sm:$0xf]
        %v1732 = vld [vmem:[%s1723 + $0x20] sm:$0xf]
        %v1733 = vld [vmem:[%s1723 + $0x24] sm:$0xf]
        %v1734 = vld [vmem:[%s1723 + $0x28] sm:$0xf]
        %v1735 = vld [vmem:[%s1723 + $0x2c] sm:$0xf]
        %v1736 = vld [vmem:[%s1723 + $0x30] sm:$0xf]
        %v1737 = vld [vmem:[%s1723 + $0x34] sm:$0xf]
        %v1738 = vld [vmem:[%s1723 + $0x38] sm:$0xf]
        %v1739 = vld [vmem:[%s1723 + $0x3c] sm:$0xf]
        %s1740 = scalar_lea.vmem %s4, 7
        %v1741 = vld [vmem:[%s1740] sm:$0x1]
        %v1743 = vlaneseq
        %v1744 = vshrl.u32 %v1743, 7
        %v1745 = vsub.s32 0, %v1744
        %v1746 = vrot.slane %v1741, %v1745
        %v1764 = vunpack.c.l.b16 %v1724
        %v1765 = vunpack.c.l.b16 %v1725
        %v1766 = vunpack.c.l.b16 %v1726
        %v1767 = vunpack.c.l.b16 %v1727
        %v1768 = vunpack.c.l.b16 %v1728
        %v1769 = vunpack.c.l.b16 %v1729
        %v1770 = vunpack.c.l.b16 %v1730
        %v1771 = vunpack.c.l.b16 %v1731
        %v1772 = vunpack.c.l.b16 %v1732
        %v1773 = vunpack.c.l.b16 %v1733
        %v1774 = vunpack.c.l.b16 %v1734
        %v1775 = vunpack.c.l.b16 %v1735
        %v1776 = vunpack.c.l.b16 %v1736
        %v1777 = vunpack.c.l.b16 %v1737
        %v1778 = vunpack.c.l.b16 %v1738
        %v1779 = vunpack.c.l.b16 %v1739
        %v1780 = vpack.c.b16 %v1765, %v1764
        %v1781 = vpack.c.b16 %v1767, %v1766
        %v1782 = vpack.c.b16 %v1769, %v1768
        %v1783 = vpack.c.b16 %v1771, %v1770
        %v1784 = vpack.c.b16 %v1773, %v1772
        %v1785 = vpack.c.b16 %v1775, %v1774
        %v1786 = vpack.c.b16 %v1777, %v1776
        %v1787 = vpack.c.b16 %v1779, %v1778
        %1796 = vmatprep.subr.bf16.mxu0 0
        %1797 = vmatpush1.bf16.msra.mxu0 %v1780
        %1798 = vmatprep.subr.bf16.mxu0 0
        %1799 = vmatpush1.bf16.msra.mxu0 %v1781
        %1800 = vmatprep.subr.bf16.mxu0 0
        %1801 = vmatpush1.bf16.msra.mxu0 %v1782
        %1802 = vmatprep.subr.bf16.mxu0 0
        %1803 = vmatpush1.bf16.msra.mxu0 %v1783
        %1804 = vmatprep.subr.bf16.mxu0 0
        %1805 = vmatpush1.bf16.msra.mxu0 %v1784
        %1806 = vmatprep.subr.bf16.mxu0 0
        %1807 = vmatpush1.bf16.msra.mxu0 %v1785
        %1808 = vmatprep.subr.bf16.mxu0 0
        %1809 = vmatpush1.bf16.msra.mxu0 %v1786
        %1810 = vmatprep.subr.bf16.mxu0 0
        %1811 = vmatpush1.bf16.msra.mxu0 %v1787
        %1812 = vmatprep.subr.bf16.mxu0 0
        %1813 = vmatpush1.bf16.msra.mxu0 0
        %1814 = vmatprep.subr.bf16.mxu0 0
        %1815 = vmatpush1.bf16.msra.mxu0 0
        %1816 = vmatprep.subr.bf16.mxu0 0
        %1817 = vmatpush1.bf16.msra.mxu0 0
        %1818 = vmatprep.subr.bf16.mxu0 0
        %1819 = vmatpush1.bf16.msra.mxu0 0
        %1820 = vmatprep.subr.bf16.mxu0 0
        %1821 = vmatpush1.bf16.msra.mxu0 0
        %1822 = vmatprep.subr.bf16.mxu0 0
        %1823 = vmatpush1.bf16.msra.mxu0 0
        %1824 = vmatprep.subr.bf16.mxu0 0
        %1825 = vmatpush1.bf16.msra.mxu0 0
        %1826 = vmatprep.subr.bf16.mxu0 0
        %1827 = vmatpush1.bf16.msra.mxu0 0
        %1828 = vmatprep.mubr.bf16.mxu0 0
        %1829 = vmatmul.mubr.bf16.gmra.mrb[0].mxu0 %v1715
        %v1830 = vpop.f32.mrb[0].mxu0
        %v1831 = vadd.f32 %v1746, %v1830
        %v1832 = vpop.f32.mrb[0].mxu0
        %v1833 = vpop.f32.mrb[0].mxu0
        %v1834 = vadd.f32 %v1746, %v1833
        %v1835 = vpop.f32.mrb[0].mxu0
        %1836 = vmatprep.mubr.bf16.mxu0 0
        %1837 = vmatmul.mubr.bf16.gmra.mrb[0].mxu0 %v1716
        %v1838 = vpop.f32.mrb[0].mxu0
        %v1839 = vadd.f32 %v1746, %v1838
        %v1840 = vpop.f32.mrb[0].mxu0
        %v1841 = vpop.f32.mrb[0].mxu0
        %v1842 = vadd.f32 %v1746, %v1841
        %v1843 = vpop.f32.mrb[0].mxu0
        %1844 = vmatprep.mubr.bf16.mxu0 0
        %1845 = vmatmul.mubr.bf16.gmra.mrb[0].mxu0 %v1717
        %v1846 = vpop.f32.mrb[0].mxu0
        %v1847 = vadd.f32 %v1746, %v1846
        %v1848 = vpop.f32.mrb[0].mxu0
        %v1849 = vpop.f32.mrb[0].mxu0
        %v1850 = vadd.f32 %v1746, %v1849
        %v1851 = vpop.f32.mrb[0].mxu0
        %1852 = vmatprep.mubr.bf16.mxu0 0
        %1853 = vmatmul.mubr.bf16.gmra.mrb[0].mxu0 %v1718
        %v1854 = vpop.f32.mrb[0].mxu0
        %v1855 = vadd.f32 %v1746, %v1854
        %v1856 = vpop.f32.mrb[0].mxu0
        %v1857 = vpop.f32.mrb[0].mxu0
        %v1858 = vadd.f32 %v1746, %v1857
        %v1859 = vpop.f32.mrb[0].mxu0
        %1860 = vmatprep.mubr.bf16.mxu0 0
        %1861 = vmatmul.mubr.bf16.gmra.mrb[0].mxu0 %v1719
        %v1862 = vpop.f32.mrb[0].mxu0
        %v1863 = vadd.f32 %v1746, %v1862
        %v1864 = vpop.f32.mrb[0].mxu0
        %v1865 = vpop.f32.mrb[0].mxu0
        %v1866 = vadd.f32 %v1746, %v1865
        %v1867 = vpop.f32.mrb[0].mxu0
        %1868 = vmatprep.mubr.bf16.mxu0 0
        %1869 = vmatmul.mubr.bf16.gmra.mrb[0].mxu0 %v1720
        %v1870 = vpop.f32.mrb[0].mxu0
        %v1871 = vadd.f32 %v1746, %v1870
        %v1872 = vpop.f32.mrb[0].mxu0
        %v1873 = vpop.f32.mrb[0].mxu0
        %v1874 = vadd.f32 %v1746, %v1873
        %v1875 = vpop.f32.mrb[0].mxu0
        %1876 = vmatprep.mubr.bf16.mxu0 0
        %1877 = vmatmul.mubr.bf16.gmra.mrb[0].mxu0 %v1721
        %v1878 = vpop.f32.mrb[0].mxu0
        %v1879 = vadd.f32 %v1746, %v1878
        %v1880 = vpop.f32.mrb[0].mxu0
        %v1881 = vpop.f32.mrb[0].mxu0
        %v1882 = vadd.f32 %v1746, %v1881
        %v1883 = vpop.f32.mrb[0].mxu0
        %1884 = vmatprep.mubr.bf16.mxu0 0
        %1885 = vmatmul.mubr.bf16.gmra.mrb[0].mxu0 %v1722
        %v1886 = vpop.f32.mrb[0].mxu0
        %v1887 = vadd.f32 %v1746, %v1886
        %v1888 = vpop.f32.mrb[0].mxu0
        %v1889 = vpop.f32.mrb[0].mxu0
        %v1890 = vadd.f32 %v1746, %v1889
        %v1891 = vpop.f32.mrb[0].mxu0
        %1892 = vdwg.mxu0
        %v1893 = vmax.f32 %v1831, 0.0
        %v1894 = vmax.f32 %v1834, 0.0
        %v1895 = vmax.f32 %v1839, 0.0
        %v1896 = vmax.f32 %v1842, 0.0
        %v1897 = vmax.f32 %v1847, 0.0
        %v1898 = vmax.f32 %v1850, 0.0
        %v1899 = vmax.f32 %v1855, 0.0
        %v1900 = vmax.f32 %v1858, 0.0
        %v1901 = vmax.f32 %v1863, 0.0
        %v1902 = vmax.f32 %v1866, 0.0
        %v1903 = vmax.f32 %v1871, 0.0
        %v1904 = vmax.f32 %v1874, 0.0
        %v1905 = vmax.f32 %v1879, 0.0
        %v1906 = vmax.f32 %v1882, 0.0
        %v1907 = vmax.f32 %v1887, 0.0
        %v1908 = vmax.f32 %v1890, 0.0
        %v1909 = vpack.c.bf16 %v1894, %v1893
        %v1910 = vpack.c.bf16 %v1896, %v1895
        %v1911 = vpack.c.bf16 %v1898, %v1897
        %v1912 = vpack.c.bf16 %v1900, %v1899
        %v1913 = vpack.c.bf16 %v1902, %v1901
        %v1914 = vpack.c.bf16 %v1904, %v1903
        %v1915 = vpack.c.bf16 %v1906, %v1905
        %v1916 = vpack.c.bf16 %v1908, %v1907
        %v1917 = vld [vmem:[%s3] sm:$0xf]
        %v1918 = vld [vmem:[%s3 + $0x4] sm:$0xf]
        %v1919 = vld [vmem:[%s3 + $0x8] sm:$0xf]
        %v1920 = vld [vmem:[%s3 + $0xc] sm:$0xf]
        %v1921 = vld [vmem:[%s3 + $0x10] sm:$0xf]
        %v1922 = vld [vmem:[%s3 + $0x14] sm:$0xf]
        %v1923 = vld [vmem:[%s3 + $0x18] sm:$0xf]
        %v1924 = vld [vmem:[%s3 + $0x1c] sm:$0xf]
        %v1925 = vld [vmem:[%s3 + $0x20] sm:$0xf]
        %v1926 = vld [vmem:[%s3 + $0x24] sm:$0xf]
        %v1927 = vld [vmem:[%s3 + $0x28] sm:$0xf]
        %v1928 = vld [vmem:[%s3 + $0x2c] sm:$0xf]
        %v1929 = vld [vmem:[%s3 + $0x30] sm:$0xf]
        %v1930 = vld [vmem:[%s3 + $0x34] sm:$0xf]
        %v1931 = vld [vmem:[%s3 + $0x38] sm:$0xf]
        %v1932 = vld [vmem:[%s3 + $0x3c] sm:$0xf]
        %v1933 = vld [vmem:[%s5] sm:$0x1]
        %v1935 = vlaneseq
        %v1936 = vshrl.u32 %v1935, 7
        %v1937 = vsub.s32 0, %v1936
        %v1938 = vrot.slane %v1933, %v1937
        %v1956 = vunpack.c.l.b16 %v1917
        %v1957 = vunpack.c.l.b16 %v1918
        %v1958 = vunpack.c.l.b16 %v1919
        %v1959 = vunpack.c.l.b16 %v1920
        %v1960 = vunpack.c.l.b16 %v1921
        %v1961 = vunpack.c.l.b16 %v1922
        %v1962 = vunpack.c.l.b16 %v1923
        %v1963 = vunpack.c.l.b16 %v1924
        %v1964 = vunpack.c.l.b16 %v1925
        %v1965 = vunpack.c.l.b16 %v1926
        %v1966 = vunpack.c.l.b16 %v1927
        %v1967 = vunpack.c.l.b16 %v1928
        %v1968 = vunpack.c.l.b16 %v1929
        %v1969 = vunpack.c.l.b16 %v1930
        %v1970 = vunpack.c.l.b16 %v1931
        %v1971 = vunpack.c.l.b16 %v1932
        %v1972 = vpack.c.b16 %v1957, %v1956
        %v1973 = vpack.c.b16 %v1959, %v1958
        %v1974 = vpack.c.b16 %v1961, %v1960
        %v1975 = vpack.c.b16 %v1963, %v1962
        %v1976 = vpack.c.b16 %v1965, %v1964
        %v1977 = vpack.c.b16 %v1967, %v1966
        %v1978 = vpack.c.b16 %v1969, %v1968
        %v1979 = vpack.c.b16 %v1971, %v1970
        %1988 = vmatprep.subr.bf16.mxu0 0
        %1989 = vmatpush1.bf16.msra.mxu0 %v1972
        %1990 = vmatprep.subr.bf16.mxu0 0
        %1991 = vmatpush1.bf16.msra.mxu0 %v1973
        %1992 = vmatprep.subr.bf16.mxu0 0
        %1993 = vmatpush1.bf16.msra.mxu0 %v1974
        %1994 = vmatprep.subr.bf16.mxu0 0
        %1995 = vmatpush1.bf16.msra.mxu0 %v1975
        %1996 = vmatprep.subr.bf16.mxu0 0
        %1997 = vmatpush1.bf16.msra.mxu0 %v1976
        %1998 = vmatprep.subr.bf16.mxu0 0
        %1999 = vmatpush1.bf16.msra.mxu0 %v1977
        %2000 = vmatprep.subr.bf16.mxu0 0
        %2001 = vmatpush1.bf16.msra.mxu0 %v1978
        %2002 = vmatprep.subr.bf16.mxu0 0
        %2003 = vmatpush1.bf16.msra.mxu0 %v1979
        %2004 = vmatprep.subr.bf16.mxu0 0
        %2005 = vmatpush1.bf16.msra.mxu0 0
        %2006 = vmatprep.subr.bf16.mxu0 0
        %2007 = vmatpush1.bf16.msra.mxu0 0
        %2008 = vmatprep.subr.bf16.mxu0 0
        %2009 = vmatpush1.bf16.msra.mxu0 0
        %2010 = vmatprep.subr.bf16.mxu0 0
        %2011 = vmatpush1.bf16.msra.mxu0 0
        %2012 = vmatprep.subr.bf16.mxu0 0
        %2013 = vmatpush1.bf16.msra.mxu0 0
        %2014 = vmatprep.subr.bf16.mxu0 0
        %2015 = vmatpush1.bf16.msra.mxu0 0
        %2016 = vmatprep.subr.bf16.mxu0 0
        %2017 = vmatpush1.bf16.msra.mxu0 0
        %2018 = vmatprep.subr.bf16.mxu0 0
        %2019 = vmatpush1.bf16.msra.mxu0 0
        %2020 = vmatprep.mubr.bf16.mxu0 0
        %2021 = vmatmul.mubr.bf16.gmra.mrb[0].mxu0 %v1909
        %v2022 = vpop.f32.mrb[0].mxu0
        %v2023 = vadd.f32 %v1938, %v2022
        %v2024 = vpop.f32.mrb[0].mxu0
        %v2025 = vpop.f32.mrb[0].mxu0
        %v2026 = vadd.f32 %v1938, %v2025
        %v2027 = vpop.f32.mrb[0].mxu0
        %2028 = vmatprep.mubr.bf16.mxu0 0
        %2029 = vmatmul.mubr.bf16.gmra.mrb[0].mxu0 %v1910
        %v2030 = vpop.f32.mrb[0].mxu0
        %v2031 = vadd.f32 %v1938, %v2030
        %v2032 = vpop.f32.mrb[0].mxu0
        %v2033 = vpop.f32.mrb[0].mxu0
        %v2034 = vadd.f32 %v1938, %v2033
        %v2035 = vpop.f32.mrb[0].mxu0
        %2036 = vmatprep.mubr.bf16.mxu0 0
        %2037 = vmatmul.mubr.bf16.gmra.mrb[0].mxu0 %v1911
        %v2038 = vpop.f32.mrb[0].mxu0
        %v2039 = vadd.f32 %v1938, %v2038
        %v2040 = vpop.f32.mrb[0].mxu0
        %v2041 = vpop.f32.mrb[0].mxu0
        %v2042 = vadd.f32 %v1938, %v2041
        %v2043 = vpop.f32.mrb[0].mxu0
        %2044 = vmatprep.mubr.bf16.mxu0 0
        %2045 = vmatmul.mubr.bf16.gmra.mrb[0].mxu0 %v1912
        %v2046 = vpop.f32.mrb[0].mxu0
        %v2047 = vadd.f32 %v1938, %v2046
        %v2048 = vpop.f32.mrb[0].mxu0
        %v2049 = vpop.f32.mrb[0].mxu0
        %v2050 = vadd.f32 %v1938, %v2049
        %v2051 = vpop.f32.mrb[0].mxu0
        %2052 = vmatprep.mubr.bf16.mxu0 0
        %2053 = vmatmul.mubr.bf16.gmra.mrb[0].mxu0 %v1913
        %v2054 = vpop.f32.mrb[0].mxu0
        %v2055 = vadd.f32 %v1938, %v2054
        %v2056 = vpop.f32.mrb[0].mxu0
        %v2057 = vpop.f32.mrb[0].mxu0
        %v2058 = vadd.f32 %v1938, %v2057
        %v2059 = vpop.f32.mrb[0].mxu0
        %2060 = vmatprep.mubr.bf16.mxu0 0
        %2061 = vmatmul.mubr.bf16.gmra.mrb[0].mxu0 %v1914
        %v2062 = vpop.f32.mrb[0].mxu0
        %v2063 = vadd.f32 %v1938, %v2062
        %v2064 = vpop.f32.mrb[0].mxu0
        %v2065 = vpop.f32.mrb[0].mxu0
        %v2066 = vadd.f32 %v1938, %v2065
        %v2067 = vpop.f32.mrb[0].mxu0
        %2068 = vmatprep.mubr.bf16.mxu0 0
        %2069 = vmatmul.mubr.bf16.gmra.mrb[0].mxu0 %v1915
        %v2070 = vpop.f32.mrb[0].mxu0
        %v2071 = vadd.f32 %v1938, %v2070
        %v2072 = vpop.f32.mrb[0].mxu0
        %v2073 = vpop.f32.mrb[0].mxu0
        %v2074 = vadd.f32 %v1938, %v2073
        %v2075 = vpop.f32.mrb[0].mxu0
        %2076 = vmatprep.mubr.bf16.mxu0 0
        %2077 = vmatmul.mubr.bf16.gmra.mrb[0].mxu0 %v1916
        %v2078 = vpop.f32.mrb[0].mxu0
        %v2079 = vadd.f32 %v1938, %v2078
        %v2080 = vpop.f32.mrb[0].mxu0
        %v2081 = vpop.f32.mrb[0].mxu0
        %v2082 = vadd.f32 %v1938, %v2081
        %v2083 = vpop.f32.mrb[0].mxu0
        %2084 = vdwg.mxu0
        %2085 = vst [vmem:[%s260] sm:$0xff] %v2023
        %2086 = vst [vmem:[%s260 + $0x8] sm:$0xff] %v2026
        %2087 = vst [vmem:[%s260 + $0x10] sm:$0xff] %v2031
        %2088 = vst [vmem:[%s260 + $0x18] sm:$0xff] %v2034
        %2089 = vst [vmem:[%s260 + $0x20] sm:$0xff] %v2039
        %2090 = vst [vmem:[%s260 + $0x28] sm:$0xff] %v2042
        %2091 = vst [vmem:[%s260 + $0x30] sm:$0xff] %v2047
        %2092 = vst [vmem:[%s260 + $0x38] sm:$0xff] %v2050
        %2093 = vst [vmem:[%s260 + $0x40] sm:$0xff] %v2055
        %2094 = vst [vmem:[%s260 + $0x48] sm:$0xff] %v2058
        %2095 = vst [vmem:[%s260 + $0x50] sm:$0xff] %v2063
        %2096 = vst [vmem:[%s260 + $0x58] sm:$0xff] %v2066
        %2097 = vst [vmem:[%s260 + $0x60] sm:$0xff] %v2071
        %2098 = vst [vmem:[%s260 + $0x68] sm:$0xff] %v2074
        %2099 = vst [vmem:[%s260 + $0x70] sm:$0xff] %v2079
        %2100 = vst [vmem:[%s260 + $0x78] sm:$0xff] %v2082
        %s2101 = sand.u32 %s160, 1
        %s2102 = scalar_lea.sflag [#allocation4], %s2101
        %s2103 = sand.u32 %s160, 1
        %s2104 = smul.addr %s2103, 128
        %s2105 = scalar_lea.vmem [#allocation5], %s2104
        // Predicated region
        $region49: #{tpu_custom_call.1} parent=43 // pred_check
          %p2106 = pneg %p170
        $region50: #{tpu_custom_call.1} parent=43 // pred_check_branch
          %2108 = sbr.rel (%p2106) target = $region52
        $region51: #{tpu_custom_call.1} parent=43 // pred_region
          %s2109 = smul.u32 16, %s21
          %s2111 = ssub.s32 2048, 2048
          %2112 = vsyncadd %s2102, %s2111
          %s2113 = smul.addr %s2109, 128
          %s2114 = scalar_lea.hbm %s6, %s2113
          %s2115 = sshll.u32 %s2105, 4
          %s2116 = int_to_ptr.vmem [resolvable:$true] %s2115
          %2121 = dma.vmem_to_hbm [thread:$0]  %s2116, 2048, %s2114, %s2102, 128, 128, 8
        $region52: #{tpu_custom_call.1} parent=43 // pred_fallthru
          _
      $region44: #{tpu_custom_call.1} parent=5 // pred_fallthru
        _
      %p2122 = scmp.le.s32.totalorder 2, %s16
      // Predicated region
      $region53: #{tpu_custom_call.1} parent=5 // pred_check
        %p2123 = pneg %p2122
      $region54: #{tpu_custom_call.1} parent=5 // pred_check_branch
        %2125 = sbr.rel (%p2123) target = $region56
      $region55: #{tpu_custom_call.1} parent=5 // pred_region
        %s2126 = ssub.s32 %s16, 2
        // Predicated region
        $region57: #{tpu_custom_call.1} parent=55 // pred_check
          %p2127 = pneg %p176
        $region58: #{tpu_custom_call.1} parent=55 // pred_check_branch
          %2129 = sbr.rel (%p2127) target = $region60
        $region59: #{tpu_custom_call.1} parent=55 // pred_region
          %s2130 = sand.u32 %s161, 1
          %s2131 = scalar_lea.sflag [#allocation4], %s2130
          %s2132 = sand.u32 %s161, 1
          %s2133 = smul.addr %s2132, 128
          %s2134 = scalar_lea.vmem [#allocation5], %s2133
          %2135 = dma.done %s2131, 2048
        $region60: #{tpu_custom_call.1} parent=55 // pred_fallthru
          _
      $region56: #{tpu_custom_call.1} parent=5 // pred_fallthru
        _
    $region6: #{tpu_custom_call.1} parent=1 // loop_footer
      %s20 = sadd.s32 1, %s16
    $region7: #{tpu_custom_call.1} parent=1 // loop_footer_branch
      %15 = sbr.rel target = $region3
    $region8: #{tpu_custom_call.1} parent=1 // loop_exit
      _
    %2136 = vsyncpa [#allocation3], 1
    %s2137 = scalar_lea.sflag [#allocation3], 1
    %2138 = vsyncpa %s2137, 1
    %2139 = vsyncpa [#allocation4], 1
    %s2140 = scalar_lea.sflag [#allocation4], 1
    %2141 = vsyncpa %s2140, 1

// kernel: tpu_custom_call.1
$region0: #{tpu_custom_call.1}
  #allocation0 [shape = 'u32[]', space=smem, size = 0x4, offset = 0x4, fixed_abs, tag = 'smem constant byte address 0x4 - core index']
  #allocation1 [shape = 'u32[144,128]{1,0:T(1,128)}', space=vmem, size = 0x12000, scoped, tag = 'internal scratch']
  %s0 = inlined_call_operand.vmem [shape: f32[256,8], index: 0, kind: input, shape index: {}]
  %s1 = inlined_call_operand.vmem [shape: f32[8,256], index: 1, kind: input, shape index: {}]
  %s2 = inlined_call_operand.hbm [shape: bf16[7,128,128], index: 2, kind: input, shape index: {}]
  %s3 = inlined_call_operand.vmem [shape: bf16[128,128], index: 3, kind: input, shape index: {}]
  %s4 = inlined_call_operand.vmem [shape: f32[8,1,128], index: 4, kind: input, shape index: {}]
  %s5 = inlined_call_operand.vmem [shape: f32[1,128], index: 5, kind: input, shape index: {}]
  %s6 = inlined_call_operand.hbm [shape: f32[256,128], index: 6, kind: output, shape index: {}]
  %s7 = sld [smem:[#allocation0]]
  $region61: #{tpu_custom_call.1} parent=0
    _
  %s9 = ssub.s32 1, %s7
  %s10 = scalar_select 0, %s9, %s7
  $region1: #{tpu_custom_call.1} parent=0
    #allocation2 [shape = 'u8[229376]{0}', space=vmem, size = 0x38000, scoped, tag = 'input window, operand 2, single buffered']
    #allocation3 [shape = 's32[2]{0}', space=sflag, size = 0x8, scoped, tag = 'scoped memory for tpu_custom_call.1']
    #allocation4 [shape = 's32[2]{0}', space=sflag, size = 0x8, scoped, tag = 'scoped memory for tpu_custom_call.1']
    #allocation5 [shape = 'u8[131072]{0}', space=vmem, size = 0x20000, scoped, tag = 'output window, operand 0']
    %11 = vsyncpa [#allocation3], 0
    %12 = vsyncpa [#allocation4], 0
    %s13 = scalar_lea.sflag [#allocation4], 1
    %14 = vsyncpa %s13, 0
    loop: start=0, step=1, limit=4
    $region2: #{tpu_custom_call.1} parent=1 // loop_pre_header
      _
    $region3: #{tpu_custom_call.1} parent=1 // loop_header
      %s16 = sphi 0, %s20
      %p17 = scmp.ge.s32.totalorder %s16, 4
      %s26 = sphi 0, %s28
      %s29 = sphi 0, %s26
      %s30 = sphi 0, %s29
      %s46 = sphi 0, %s30
      %s50 = sphi 0, %s50
      %s52 = sphi 0, %s50
      %s53 = sphi 0, %s52
      %s67 = sphi 0, %s53
      %s71 = sphi 0, %s71
      %s73 = sphi 0, %s71
      %s74 = sphi 0, %s73
      %s88 = sphi 0, %s74
      %s92 = sphi 0, %s92
      %s94 = sphi 0, %s92
      %s95 = sphi 0, %s94
      %s109 = sphi 0, %s95
      %s113 = sphi 0, %s113
      %s115 = sphi 0, %s113
      %s116 = sphi 0, %s115
      %s130 = sphi 0, %s116
      %s134 = sphi 0, %s134
      %s136 = sphi 0, %s134
      %s137 = sphi 0, %s136
      %s151 = sphi 0, %s137
      %s157 = sphi 0, %s159
      %s160 = sphi 0, %s157
      %s161 = sphi 0, %s160
      %s177 = sphi 0, %s161
    $region4: #{tpu_custom_call.1} parent=1 // loop_header_branch
      %19 = sbr.rel (%p17) target = $region8
    $region5: #{tpu_custom_call.1} parent=1 // loop_body
      %s21 = ssub.s32 %s16, 1
      %s22 = ssub.s32 %s16, 2
      %s23 = sadd.s32 %s16, 1
      %s24 = ssub.s32 %s16, %s23
      %p25 = scmp.eq.s32.totalorder %s24, 0
      %s27 = sadd.s32 %s26, 1
      %s28 = scalar_select %p25, %s26, %s27
      %p31 = pneg %p25
      %p32 = scmp.eq.s32.totalorder %s16, 1
      %p33 = por %p31, %p32
      %p34 = scmp.ne.s32.totalorder %s26, %s29
      %p35 = scmp.eq.s32.totalorder %s16, 0
      %p36 = por %p34, %p35
      %p37 = scmp.ne.s32.totalorder %s26, %s29
      %p38 = scmp.eq.s32.totalorder %s21, 1
      %p39 = por %p37, %p38
      %p40 = scmp.ne.s32.totalorder %s29, %s30
      %p41 = scmp.eq.s32.totalorder %s21, 0
      %p42 = por %p40, %p41
      %p43 = scmp.ne.s32.totalorder %s29, %s30
      %p44 = scmp.eq.s32.totalorder %s22, 1
      %p45 = por %p43, %p44
      %p47 = scmp.ne.s32.totalorder %s30, %s46
      %p48 = scmp.eq.s32.totalorder %s22, 0
      %p49 = por %p47, %p48
      %s51 = sadd.s32 %s50, 1
      %p54 = scmp.eq.s32.totalorder %s16, 1
      %p55 = scmp.ne.s32.totalorder %s50, %s52
      %p56 = scmp.eq.s32.totalorder %s16, 0
      %p57 = por %p55, %p56
      %p58 = scmp.ne.s32.totalorder %s50, %s52
      %p59 = scmp.eq.s32.totalorder %s21, 1
      %p60 = por %p58, %p59
      %p61 = scmp.ne.s32.totalorder %s52, %s53
      %p62 = scmp.eq.s32.totalorder %s21, 0
      %p63 = por %p61, %p62
      %p64 = scmp.ne.s32.totalorder %s52, %s53
      %p65 = scmp.eq.s32.totalorder %s22, 1
      %p66 = por %p64, %p65
      %p68 = scmp.ne.s32.totalorder %s53, %s67
      %p69 = scmp.eq.s32.totalorder %s22, 0
      %p70 = por %p68, %p69
      %s72 = sadd.s32 %s71, 1
      %p75 = scmp.eq.s32.totalorder %s16, 1
      %p76 = scmp.ne.s32.totalorder %s71, %s73
      %p77 = scmp.eq.s32.totalorder %s16, 0
      %p78 = por %p76, %p77
      %p79 = scmp.ne.s32.totalorder %s71, %s73
      %p80 = scmp.eq.s32.totalorder %s21, 1
      %p81 = por %p79, %p80
      %p82 = scmp.ne.s32.totalorder %s73, %s74
      %p83 = scmp.eq.s32.totalorder %s21, 0
      %p84 = por %p82, %p83
      %p85 = scmp.ne.s32.totalorder %s73, %s74
      %p86 = scmp.eq.s32.totalorder %s22, 1
      %p87 = por %p85, %p86
      %p89 = scmp.ne.s32.totalorder %s74, %s88
      %p90 = scmp.eq.s32.totalorder %s22, 0
      %p91 = por %p89, %p90
      %s93 = sadd.s32 %s92, 1
      %p96 = scmp.eq.s32.totalorder %s16, 1
      %p97 = scmp.ne.s32.totalorder %s92, %s94
      %p98 = scmp.eq.s32.totalorder %s16, 0
      %p99 = por %p97, %p98
      %p100 = scmp.ne.s32.totalorder %s92, %s94
      %p101 = scmp.eq.s32.totalorder %s21, 1
      %p102 = por %p100, %p101
      %p103 = scmp.ne.s32.totalorder %s94, %s95
      %p104 = scmp.eq.s32.totalorder %s21, 0
      %p105 = por %p103, %p104
      %p106 = scmp.ne.s32.totalorder %s94, %s95
      %p107 = scmp.eq.s32.totalorder %s22, 1
      %p108 = por %p106, %p107
      %p110 = scmp.ne.s32.totalorder %s95, %s109
      %p111 = scmp.eq.s32.totalorder %s22, 0
      %p112 = por %p110, %p111
      %s114 = sadd.s32 %s113, 1
      %p117 = scmp.eq.s32.totalorder %s16, 1
      %p118 = scmp.ne.s32.totalorder %s113, %s115
      %p119 = scmp.eq.s32.totalorder %s16, 0
      %p120 = por %p118, %p119
      %p121 = scmp.ne.s32.totalorder %s113, %s115
      %p122 = scmp.eq.s32.totalorder %s21, 1
      %p123 = por %p121, %p122
      %p124 = scmp.ne.s32.totalorder %s115, %s116
      %p125 = scmp.eq.s32.totalorder %s21, 0
      %p126 = por %p124, %p125
      %p127 = scmp.ne.s32.totalorder %s115, %s116
      %p128 = scmp.eq.s32.totalorder %s22, 1
      %p129 = por %p127, %p128
      %p131 = scmp.ne.s32.totalorder %s116, %s130
      %p132 = scmp.eq.s32.totalorder %s22, 0
      %p133 = por %p131, %p132
      %s135 = sadd.s32 %s134, 1
      %p138 = scmp.eq.s32.totalorder %s16, 1
      %p139 = scmp.ne.s32.totalorder %s134, %s136
      %p140 = scmp.eq.s32.totalorder %s16, 0
      %p141 = por %p139, %p140
      %p142 = scmp.ne.s32.totalorder %s134, %s136
      %p143 = scmp.eq.s32.totalorder %s21, 1
      %p144 = por %p142, %p143
      %p145 = scmp.ne.s32.totalorder %s136, %s137
      %p146 = scmp.eq.s32.totalorder %s21, 0
      %p147 = por %p145, %p146
      %p148 = scmp.ne.s32.totalorder %s136, %s137
      %p149 = scmp.eq.s32.totalorder %s22, 1
      %p150 = por %p148, %p149
      %p152 = scmp.ne.s32.totalorder %s137, %s151
      %p153 = scmp.eq.s32.totalorder %s22, 0
      %p154 = por %p152, %p153
      %s155 = ssub.s32 %s16, %s23
      %p156 = scmp.eq.s32.totalorder %s155, 0
      %s158 = sadd.s32 %s157, 1
      %s159 = scalar_select %p156, %s157, %s158
      %p162 = pneg %p156
      %p163 = scmp.eq.s32.totalorder %s16, 1
      %p164 = por %p162, %p163
      %p165 = scmp.ne.s32.totalorder %s157, %s160
      %p166 = scmp.eq.s32.totalorder %s16, 0
      %p167 = por %p165, %p166
      %p168 = scmp.ne.s32.totalorder %s157, %s160
      %p169 = scmp.eq.s32.totalorder %s21, 1
      %p170 = por %p168, %p169
      %p171 = scmp.ne.s32.totalorder %s160, %s161
      %p172 = scmp.eq.s32.totalorder %s21, 0
      %p173 = por %p171, %p172
      %p174 = scmp.ne.s32.totalorder %s160, %s161
      %p175 = scmp.eq.s32.totalorder %s22, 1
      %p176 = por %p174, %p175
      %p178 = scmp.ne.s32.totalorder %s161, %s177
      %p179 = scmp.eq.s32.totalorder %s22, 0
      %p180 = por %p178, %p179
      %p181 = scmp.le.s32.totalorder 1, %s16
      %p182 = scmp.lt.s32.totalorder %s16, 3
      %p183 = pnand %p181, %p182
      %p184 = pneg %p183
      // Predicated region
      $region9: #{tpu_custom_call.1} parent=5 // pred_check
        _
      $region10: #{tpu_custom_call.1} parent=5 // pred_check_branch
        %186 = sbr.rel (%p183) target = $region12
      $region11: #{tpu_custom_call.1} parent=5 // pred_region
        %s187 = ssub.s32 %s16, 1
        // Predicated region
        $region13: #{tpu_custom_call.1} parent=11 // pred_check
          %p188 = pneg %p63
        $region14: #{tpu_custom_call.1} parent=11 // pred_check_branch
          %190 = sbr.rel (%p188) target = $region16
        $region15: #{tpu_custom_call.1} parent=11 // pred_region
          _
        $region16: #{tpu_custom_call.1} parent=11 // pred_fallthru
          _
        // Predicated region
        $region17: #{tpu_custom_call.1} parent=11 // pred_check
          %p191 = pneg %p84
        $region18: #{tpu_custom_call.1} parent=11 // pred_check_branch
          %193 = sbr.rel (%p191) target = $region20
        $region19: #{tpu_custom_call.1} parent=11 // pred_region
          %s195 = ssub.s32 7168, 7168
          %196 = vsyncadd [#allocation3], %s195
          %s197 = sshll.u32 [#allocation2], 4
          %s198 = int_to_ptr.vmem [resolvable:$true] %s197
          %203 = dma.hbm_to_vmem [thread:$0]  %s2, 7168, %s198, [#allocation3], 64, 64, 4
        $region20: #{tpu_custom_call.1} parent=11 // pred_fallthru
          _
        // Predicated region
        $region21: #{tpu_custom_call.1} parent=11 // pred_check
          %p204 = pneg %p105
        $region22: #{tpu_custom_call.1} parent=11 // pred_check_branch
          %206 = sbr.rel (%p204) target = $region24
        $region23: #{tpu_custom_call.1} parent=11 // pred_region
          _
        $region24: #{tpu_custom_call.1} parent=11 // pred_fallthru
          _
        // Predicated region
        $region25: #{tpu_custom_call.1} parent=11 // pred_check
          %p207 = pneg %p126
        $region26: #{tpu_custom_call.1} parent=11 // pred_check_branch
          %209 = sbr.rel (%p207) target = $region28
        $region27: #{tpu_custom_call.1} parent=11 // pred_region
          _
        $region28: #{tpu_custom_call.1} parent=11 // pred_fallthru
          _
        // Predicated region
        $region29: #{tpu_custom_call.1} parent=11 // pred_check
          %p210 = pneg %p147
        $region30: #{tpu_custom_call.1} parent=11 // pred_check_branch
          %212 = sbr.rel (%p210) target = $region32
        $region31: #{tpu_custom_call.1} parent=11 // pred_region
          _
        $region32: #{tpu_custom_call.1} parent=11 // pred_fallthru
          _
      $region12: #{tpu_custom_call.1} parent=5 // pred_fallthru
        _
      %p213 = scmp.lt.s32.totalorder %s16, 2
      // Predicated region
      $region33: #{tpu_custom_call.1} parent=5 // pred_check
        %p214 = pneg %p213
      $region34: #{tpu_custom_call.1} parent=5 // pred_check_branch
        %216 = sbr.rel (%p214) target = $region36
      $region35: #{tpu_custom_call.1} parent=5 // pred_region
        // Predicated region
        $region37: #{tpu_custom_call.1} parent=35 // pred_check
          %p217 = pneg %p36
        $region38: #{tpu_custom_call.1} parent=35 // pred_check_branch
          %219 = sbr.rel (%p217) target = $region40
        $region39: #{tpu_custom_call.1} parent=35 // pred_region
          %s220 = smul.u32 16, %s16
          %p221 = scmp.lt.s32.totalorder %s220, 31
          %s222 = scalar_select %p221, %s220, 31
          %s223 = smul.addr %s222, 8
          %s224 = scalar_lea.vmem %s0, %s223
          %s225 = smul.u32 16, %s16
        $region40: #{tpu_custom_call.1} parent=35 // pred_fallthru
          _
      $region36: #{tpu_custom_call.1} parent=5 // pred_fallthru
        _
      %p226 = scmp.le.s32.totalorder 1, %s16
      %p227 = scmp.lt.s32.totalorder %s16, 3
      %p228 = pnand %p226, %p227
      %p229 = pneg %p228
      // Predicated region
      $region41: #{tpu_custom_call.1} parent=5 // pred_check
        _
      $region42: #{tpu_custom_call.1} parent=5 // pred_check_branch
        %231 = sbr.rel (%p228) target = $region44
      $region43: #{tpu_custom_call.1} parent=5 // pred_region
        %s232 = ssub.s32 %s16, 1
        // Predicated region
        $region45: #{tpu_custom_call.1} parent=43 // pred_check
          %p233 = pneg %p84
        $region46: #{tpu_custom_call.1} parent=43 // pred_check_branch
          %235 = sbr.rel (%p233) target = $region48
        $region47: #{tpu_custom_call.1} parent=43 // pred_region
          %236 = dma.done [#allocation3], 7168
        $region48: #{tpu_custom_call.1} parent=43 // pred_fallthru
          _
        %s237 = smul.u32 16, %s21
        %p238 = scmp.lt.s32.totalorder %s237, 31
        %s239 = scalar_select %p238, %s237, 31
        %s240 = smul.addr %s239, 8
        %s241 = scalar_lea.vmem %s0, %s240
        %p242 = pneg %p42
        %p243 = pneg %p39
        %p244 = pneg %p63
        %p245 = pneg %p60
        %p246 = pneg %p84
        %p247 = pneg %p81
        %p248 = pneg %p105
        %p249 = pneg %p102
        %p250 = pneg %p126
        %p251 = pneg %p123
        %p252 = pneg %p147
        %p253 = pneg %p144
        %p254 = pneg %p173
        %p255 = pneg %p170
        %s256 = sand.u32 %s160, 1
        %s257 = scalar_lea.sflag [#allocation4], %s256
        %s258 = sand.u32 %s160, 1
        %s259 = smul.addr %s258, 128
        %s260 = scalar_lea.vmem [#allocation5], %s259
        %s261 = smul.u32 16, %s21
        %p262 = scmp.lt.s32.totalorder %s261, 31
        %s263 = scalar_select %p262, %s261, 31
        %s264 = smul.addr %s263, 8
        %s265 = scalar_lea.vmem %s0, %s264
        %s266 = smul.u32 16, %s21
        %s267 = smul.u32 16, %s21
        %v269 = vld [vmem:[%s265] sm:$0xff]
        %v270 = vld [vmem:[%s265 + $0x8] sm:$0xff]
        %v271 = vld [vmem:[%s265 + $0x10] sm:$0xff]
        %v272 = vld [vmem:[%s265 + $0x18] sm:$0xff]
        %v273 = vld [vmem:[%s265 + $0x20] sm:$0xff]
        %v274 = vld [vmem:[%s265 + $0x28] sm:$0xff]
        %v275 = vld [vmem:[%s265 + $0x30] sm:$0xff]
        %v276 = vld [vmem:[%s265 + $0x38] sm:$0xff]
        %v277 = vld [vmem:[%s265 + $0x40] sm:$0xff]
        %v278 = vld [vmem:[%s265 + $0x48] sm:$0xff]
        %v279 = vld [vmem:[%s265 + $0x50] sm:$0xff]
        %v280 = vld [vmem:[%s265 + $0x58] sm:$0xff]
        %v281 = vld [vmem:[%s265 + $0x60] sm:$0xff]
        %v282 = vld [vmem:[%s265 + $0x68] sm:$0xff]
        %v283 = vld [vmem:[%s265 + $0x70] sm:$0xff]
        %v284 = vld [vmem:[%s265 + $0x78] sm:$0xff]
        %v285 = vld [vmem:[%s1] sm:$0xff]
        %v286 = vld [vmem:[%s1 + $0x8] sm:$0xff]
        %vm287 = vcmask 64512
        %v289 = vsel %vm287, %v269, 0
        %v292 = vsel %vm287, %v270, 0
        %v295 = vsel %vm287, %v271, 0
        %v298 = vsel %vm287, %v272, 0
        %v301 = vsel %vm287, %v273, 0
        %v304 = vsel %vm287, %v274, 0
        %v307 = vsel %vm287, %v275, 0
        %v310 = vsel %vm287, %v276, 0
        %v313 = vsel %vm287, %v277, 0
        %v316 = vsel %vm287, %v278, 0
        %v319 = vsel %vm287, %v279, 0
        %v322 = vsel %vm287, %v280, 0
        %v325 = vsel %vm287, %v281, 0
        %v328 = vsel %vm287, %v282, 0
        %v331 = vsel %vm287, %v283, 0
        %v334 = vsel %vm287, %v284, 0
        %336 = vmatprep.subr.mxu0 %v286
        %337 = vmatpush1.msra.mxu0 %v285
        %338 = vmatprep.subr.mxu0 0.0
        %339 = vmatpush1.msra.mxu0 0.0
        %340 = vmatprep.subr.mxu0 0.0
        %341 = vmatpush1.msra.mxu0 0.0
        %342 = vmatprep.subr.mxu0 0.0
        %343 = vmatpush1.msra.mxu0 0.0
        %344 = vmatprep.subr.mxu0 0.0
        %345 = vmatpush1.msra.mxu0 0.0
        %346 = vmatprep.subr.mxu0 0.0
        %347 = vmatpush1.msra.mxu0 0.0
        %348 = vmatprep.subr.mxu0 0.0
        %349 = vmatpush1.msra.mxu0 0.0
        %350 = vmatprep.subr.mxu0 0.0
        %351 = vmatpush1.msra.mxu0 0.0
        %352 = vmatprep.subr.mxu0 0.0
        %353 = vmatpush1.msra.mxu0 0.0
        %354 = vmatprep.subr.mxu0 0.0
        %355 = vmatpush1.msra.mxu0 0.0
        %356 = vmatprep.subr.mxu0 0.0
        %357 = vmatpush1.msra.mxu0 0.0
        %358 = vmatprep.subr.mxu0 0.0
        %359 = vmatpush1.msra.mxu0 0.0
        %360 = vmatprep.subr.mxu0 0.0
        %361 = vmatpush1.msra.mxu0 0.0
        %362 = vmatprep.subr.mxu0 0.0
        %363 = vmatpush1.msra.mxu0 0.0
        %364 = vmatprep.subr.mxu0 0.0
        %365 = vmatpush1.msra.mxu0 0.0
        %366 = vmatprep.subr.mxu0 0.0
        %367 = vmatpush1.msra.mxu0 0.0
        %368 = vmatprep.subr.mxu0 0.0
        %369 = vmatpush1.msra.mxu0 0.0
        %370 = vmatprep.subr.mxu0 0.0
        %371 = vmatpush1.msra.mxu0 0.0
        %372 = vmatprep.subr.mxu0 0.0
        %373 = vmatpush1.msra.mxu0 0.0
        %374 = vmatprep.subr.mxu0 0.0
        %375 = vmatpush1.msra.mxu0 0.0
        %376 = vmatprep.subr.mxu0 0.0
        %377 = vmatpush1.msra.mxu0 0.0
        %378 = vmatprep.subr.mxu0 0.0
        %379 = vmatpush1.msra.mxu0 0.0
        %380 = vmatprep.subr.mxu0 0.0
        %381 = vmatpush1.msra.mxu0 0.0
        %382 = vmatprep.subr.mxu0 0.0
        %383 = vmatpush1.msra.mxu0 0.0
        %384 = vmatprep.subr.mxu0 0.0
        %385 = vmatpush1.msra.mxu0 0.0
        %386 = vmatprep.subr.mxu0 0.0
        %387 = vmatpush1.msra.mxu0 0.0
        %388 = vmatprep.subr.mxu0 0.0
        %389 = vmatpush1.msra.mxu0 0.0
        %390 = vmatprep.subr.mxu0 0.0
        %391 = vmatpush1.msra.mxu0 0.0
        %392 = vmatprep.subr.mxu0 0.0
        %393 = vmatpush1.msra.mxu0 0.0
        %394 = vmatprep.subr.mxu0 0.0
        %395 = vmatpush1.msra.mxu0 0.0
        %396 = vmatprep.subr.mxu0 0.0
        %397 = vmatpush1.msra.mxu0 0.0
        %398 = vmatprep.subr.mxu0 0.0
        %399 = vmatpush1.msra.mxu0 0.0
        %400 = vmatprep.mubr.f32.mxu0 0.0
        %401 = vmatmul.mubr.f32.gmra.mrb[0].mxu0 %v289
        %v402 = vpop.f32.mrb[0].mxu0
        %v403 = vadd.f32 0.0, %v402
        %v404 = vpop.f32.mrb[0].mxu0
        %v405 = vadd.f32 0.0, %v404
        %406 = vmatprep.mubr.f32.mxu0 0.0
        %407 = vmatmul.mubr.f32.gmra.mrb[0].mxu0 %v292
        %v408 = vpop.f32.mrb[0].mxu0
        %v409 = vadd.f32 0.0, %v408
        %v410 = vpop.f32.mrb[0].mxu0
        %v411 = vadd.f32 0.0, %v410
        %412 = vmatprep.mubr.f32.mxu0 0.0
        %413 = vmatmul.mubr.f32.gmra.mrb[0].mxu0 %v295
        %v414 = vpop.f32.mrb[0].mxu0
        %v415 = vadd.f32 0.0, %v414
        %v416 = vpop.f32.mrb[0].mxu0
        %v417 = vadd.f32 0.0, %v416
        %418 = vmatprep.mubr.f32.mxu0 0.0
        %419 = vmatmul.mubr.f32.gmra.mrb[0].mxu0 %v298
        %v420 = vpop.f32.mrb[0].mxu0
        %v421 = vadd.f32 0.0, %v420
        %v422 = vpop.f32.mrb[0].mxu0
        %v423 = vadd.f32 0.0, %v422
        %424 = vmatprep.mubr.f32.mxu0 0.0
        %425 = vmatmul.mubr.f32.gmra.mrb[0].mxu0 %v301
        %v426 = vpop.f32.mrb[0].mxu0
        %v427 = vadd.f32 0.0, %v426
        %v428 = vpop.f32.mrb[0].mxu0
        %v429 = vadd.f32 0.0, %v428
        %430 = vmatprep.mubr.f32.mxu0 0.0
        %431 = vmatmul.mubr.f32.gmra.mrb[0].mxu0 %v304
        %v432 = vpop.f32.mrb[0].mxu0
        %v433 = vadd.f32 0.0, %v432
        %v434 = vpop.f32.mrb[0].mxu0
        %v435 = vadd.f32 0.0, %v434
        %436 = vmatprep.mubr.f32.mxu0 0.0
        %437 = vmatmul.mubr.f32.gmra.mrb[0].mxu0 %v307
        %v438 = vpop.f32.mrb[0].mxu0
        %v439 = vadd.f32 0.0, %v438
        %v440 = vpop.f32.mrb[0].mxu0
        %v441 = vadd.f32 0.0, %v440
        %442 = vmatprep.mubr.f32.mxu0 0.0
        %443 = vmatmul.mubr.f32.gmra.mrb[0].mxu0 %v310
        %v444 = vpop.f32.mrb[0].mxu0
        %v445 = vadd.f32 0.0, %v444
        %v446 = vpop.f32.mrb[0].mxu0
        %v447 = vadd.f32 0.0, %v446
        %448 = vmatprep.mubr.f32.mxu0 0.0
        %449 = vmatmul.mubr.f32.gmra.mrb[0].mxu0 %v313
        %v450 = vpop.f32.mrb[0].mxu0
        %v451 = vadd.f32 0.0, %v450
        %v452 = vpop.f32.mrb[0].mxu0
        %v453 = vadd.f32 0.0, %v452
        %454 = vmatprep.mubr.f32.mxu0 0.0
        %455 = vmatmul.mubr.f32.gmra.mrb[0].mxu0 %v316
        %v456 = vpop.f32.mrb[0].mxu0
        %v457 = vadd.f32 0.0, %v456
        %v458 = vpop.f32.mrb[0].mxu0
        %v459 = vadd.f32 0.0, %v458
        %460 = vmatprep.mubr.f32.mxu0 0.0
        %461 = vmatmul.mubr.f32.gmra.mrb[0].mxu0 %v319
        %v462 = vpop.f32.mrb[0].mxu0
        %v463 = vadd.f32 0.0, %v462
        %v464 = vpop.f32.mrb[0].mxu0
        %v465 = vadd.f32 0.0, %v464
        %466 = vmatprep.mubr.f32.mxu0 0.0
        %467 = vmatmul.mubr.f32.gmra.mrb[0].mxu0 %v322
        %v468 = vpop.f32.mrb[0].mxu0
        %v469 = vadd.f32 0.0, %v468
        %v470 = vpop.f32.mrb[0].mxu0
        %v471 = vadd.f32 0.0, %v470
        %472 = vmatprep.mubr.f32.mxu0 0.0
        %473 = vmatmul.mubr.f32.gmra.mrb[0].mxu0 %v325
        %v474 = vpop.f32.mrb[0].mxu0
        %v475 = vadd.f32 0.0, %v474
        %v476 = vpop.f32.mrb[0].mxu0
        %v477 = vadd.f32 0.0, %v476
        %478 = vmatprep.mubr.f32.mxu0 0.0
        %479 = vmatmul.mubr.f32.gmra.mrb[0].mxu0 %v328
        %v480 = vpop.f32.mrb[0].mxu0
        %v481 = vadd.f32 0.0, %v480
        %v482 = vpop.f32.mrb[0].mxu0
        %v483 = vadd.f32 0.0, %v482
        %484 = vmatprep.mubr.f32.mxu0 0.0
        %485 = vmatmul.mubr.f32.gmra.mrb[0].mxu0 %v331
        %v486 = vpop.f32.mrb[0].mxu0
        %v487 = vadd.f32 0.0, %v486
        %v488 = vpop.f32.mrb[0].mxu0
        %v489 = vadd.f32 0.0, %v488
        %490 = vmatprep.mubr.f32.mxu0 0.0
        %491 = vmatmul.mubr.f32.gmra.mrb[0].mxu0 %v334
        %v492 = vpop.f32.mrb[0].mxu0
        %v493 = vadd.f32 0.0, %v492
        %v494 = vpop.f32.mrb[0].mxu0
        %v495 = vadd.f32 0.0, %v494
        %496 = vdwg.mxu0
        %v497 = vld [vmem:[%s4] sm:$0x1]
        %v499 = vlaneseq
        %v500 = vshrl.u32 %v499, 7
        %v501 = vsub.s32 0, %v500
        %v502 = vrot.slane %v497, %v501
        %v504 = vadd.f32 %v403, %v502
        %v505 = vadd.f32 %v409, %v502
        %v506 = vadd.f32 %v415, %v502
        %v507 = vadd.f32 %v421, %v502
        %v508 = vadd.f32 %v427, %v502
        %v509 = vadd.f32 %v433, %v502
        %v510 = vadd.f32 %v439, %v502
        %v511 = vadd.f32 %v445, %v502
        %v512 = vadd.f32 %v451, %v502
        %v513 = vadd.f32 %v457, %v502
        %v514 = vadd.f32 %v463, %v502
        %v515 = vadd.f32 %v469, %v502
        %v516 = vadd.f32 %v475, %v502
        %v517 = vadd.f32 %v481, %v502
        %v518 = vadd.f32 %v487, %v502
        %v519 = vadd.f32 %v493, %v502
        %v520 = vmax.f32 %v504, 0.0
        %v521 = vmax.f32 %v505, 0.0
        %v522 = vmax.f32 %v506, 0.0
        %v523 = vmax.f32 %v507, 0.0
        %v524 = vmax.f32 %v508, 0.0
        %v525 = vmax.f32 %v509, 0.0
        %v526 = vmax.f32 %v510, 0.0
        %v527 = vmax.f32 %v511, 0.0
        %v528 = vmax.f32 %v512, 0.0
        %v529 = vmax.f32 %v513, 0.0
        %v530 = vmax.f32 %v514, 0.0
        %v531 = vmax.f32 %v515, 0.0
        %v532 = vmax.f32 %v516, 0.0
        %v533 = vmax.f32 %v517, 0.0
        %v534 = vmax.f32 %v518, 0.0
        %v535 = vmax.f32 %v519, 0.0
        %v536 = vpack.c.bf16 %v521, %v520
        %v537 = vpack.c.bf16 %v523, %v522
        %v538 = vpack.c.bf16 %v525, %v524
        %v539 = vpack.c.bf16 %v527, %v526
        %v540 = vpack.c.bf16 %v529, %v528
        %v541 = vpack.c.bf16 %v531, %v530
        %v542 = vpack.c.bf16 %v533, %v532
        %v543 = vpack.c.bf16 %v535, %v534
        %v544 = vld [vmem:[#allocation2] sm:$0xf]
        %v545 = vld [vmem:[#allocation2 + $0x4] sm:$0xf]
        %v546 = vld [vmem:[#allocation2 + $0x8] sm:$0xf]
        %v547 = vld [vmem:[#allocation2 + $0xc] sm:$0xf]
        %v548 = vld [vmem:[#allocation2 + $0x10] sm:$0xf]
        %v549 = vld [vmem:[#allocation2 + $0x14] sm:$0xf]
        %v550 = vld [vmem:[#allocation2 + $0x18] sm:$0xf]
        %v551 = vld [vmem:[#allocation2 + $0x1c] sm:$0xf]
        %v552 = vld [vmem:[#allocation2 + $0x20] sm:$0xf]
        %v553 = vld [vmem:[#allocation2 + $0x24] sm:$0xf]
        %v554 = vld [vmem:[#allocation2 + $0x28] sm:$0xf]
        %v555 = vld [vmem:[#allocation2 + $0x2c] sm:$0xf]
        %v556 = vld [vmem:[#allocation2 + $0x30] sm:$0xf]
        %v557 = vld [vmem:[#allocation2 + $0x34] sm:$0xf]
        %v558 = vld [vmem:[#allocation2 + $0x38] sm:$0xf]
        %v559 = vld [vmem:[#allocation2 + $0x3c] sm:$0xf]
        %s560 = scalar_lea.vmem %s4, 1
        %v561 = vld [vmem:[%s560] sm:$0x1]
        %v563 = vlaneseq
        %v564 = vshrl.u32 %v563, 7
        %v565 = vsub.s32 0, %v564
        %v566 = vrot.slane %v561, %v565
        %v584 = vunpack.c.l.b16 %v544
        %v585 = vunpack.c.l.b16 %v545
        %v586 = vunpack.c.l.b16 %v546
        %v587 = vunpack.c.l.b16 %v547
        %v588 = vunpack.c.l.b16 %v548
        %v589 = vunpack.c.l.b16 %v549
        %v590 = vunpack.c.l.b16 %v550
        %v591 = vunpack.c.l.b16 %v551
        %v592 = vunpack.c.l.b16 %v552
        %v593 = vunpack.c.l.b16 %v553
        %v594 = vunpack.c.l.b16 %v554
        %v595 = vunpack.c.l.b16 %v555
        %v596 = vunpack.c.l.b16 %v556
        %v597 = vunpack.c.l.b16 %v557
        %v598 = vunpack.c.l.b16 %v558
        %v599 = vunpack.c.l.b16 %v559
        %v600 = vpack.c.b16 %v585, %v584
        %v601 = vpack.c.b16 %v587, %v586
        %v602 = vpack.c.b16 %v589, %v588
        %v603 = vpack.c.b16 %v591, %v590
        %v604 = vpack.c.b16 %v593, %v592
        %v605 = vpack.c.b16 %v595, %v594
        %v606 = vpack.c.b16 %v597, %v596
        %v607 = vpack.c.b16 %v599, %v598
        %616 = vmatprep.subr.bf16.mxu0 0
        %617 = vmatpush1.bf16.msra.mxu0 %v600
        %618 = vmatprep.subr.bf16.mxu0 0
        %619 = vmatpush1.bf16.msra.mxu0 %v601
        %620 = vmatprep.subr.bf16.mxu0 0
        %621 = vmatpush1.bf16.msra.mxu0 %v602
        %622 = vmatprep.subr.bf16.mxu0 0
        %623 = vmatpush1.bf16.msra.mxu0 %v603
        %624 = vmatprep.subr.bf16.mxu0 0
        %625 = vmatpush1.bf16.msra.mxu0 %v604
        %626 = vmatprep.subr.bf16.mxu0 0
        %627 = vmatpush1.bf16.msra.mxu0 %v605
        %628 = vmatprep.subr.bf16.mxu0 0
        %629 = vmatpush1.bf16.msra.mxu0 %v606
        %630 = vmatprep.subr.bf16.mxu0 0
        %631 = vmatpush1.bf16.msra.mxu0 %v607
        %632 = vmatprep.subr.bf16.mxu0 0
        %633 = vmatpush1.bf16.msra.mxu0 0
        %634 = vmatprep.subr.bf16.mxu0 0
        %635 = vmatpush1.bf16.msra.mxu0 0
        %636 = vmatprep.subr.bf16.mxu0 0
        %637 = vmatpush1.bf16.msra.mxu0 0
        %638 = vmatprep.subr.bf16.mxu0 0
        %639 = vmatpush1.bf16.msra.mxu0 0
        %640 = vmatprep.subr.bf16.mxu0 0
        %641 = vmatpush1.bf16.msra.mxu0 0
        %642 = vmatprep.subr.bf16.mxu0 0
        %643 = vmatpush1.bf16.msra.mxu0 0
        %644 = vmatprep.subr.bf16.mxu0 0
        %645 = vmatpush1.bf16.msra.mxu0 0
        %646 = vmatprep.subr.bf16.mxu0 0
        %647 = vmatpush1.bf16.msra.mxu0 0
        %648 = vmatprep.mubr.bf16.mxu0 0
        %649 = vmatmul.mubr.bf16.gmra.mrb[0].mxu0 %v536
        %v650 = vpop.f32.mrb[0].mxu0
        %v651 = vadd.f32 %v566, %v650
        %v652 = vpop.f32.mrb[0].mxu0
        %v653 = vpop.f32.mrb[0].mxu0
        %v654 = vadd.f32 %v566, %v653
        %v655 = vpop.f32.mrb[0].mxu0
        %656 = vmatprep.mubr.bf16.mxu0 0
        %657 = vmatmul.mubr.bf16.gmra.mrb[0].mxu0 %v537
        %v658 = vpop.f32.mrb[0].mxu0
        %v659 = vadd.f32 %v566, %v658
        %v660 = vpop.f32.mrb[0].mxu0
        %v661 = vpop.f32.mrb[0].mxu0
        %v662 = vadd.f32 %v566, %v661
        %v663 = vpop.f32.mrb[0].mxu0
        %664 = vmatprep.mubr.bf16.mxu0 0
        %665 = vmatmul.mubr.bf16.gmra.mrb[0].mxu0 %v538
        %v666 = vpop.f32.mrb[0].mxu0
        %v667 = vadd.f32 %v566, %v666
        %v668 = vpop.f32.mrb[0].mxu0
        %v669 = vpop.f32.mrb[0].mxu0
        %v670 = vadd.f32 %v566, %v669
        %v671 = vpop.f32.mrb[0].mxu0
        %672 = vmatprep.mubr.bf16.mxu0 0
        %673 = vmatmul.mubr.bf16.gmra.mrb[0].mxu0 %v539
        %v674 = vpop.f32.mrb[0].mxu0
        %v675 = vadd.f32 %v566, %v674
        %v676 = vpop.f32.mrb[0].mxu0
        %v677 = vpop.f32.mrb[0].mxu0
        %v678 = vadd.f32 %v566, %v677
        %v679 = vpop.f32.mrb[0].mxu0
        %680 = vmatprep.mubr.bf16.mxu0 0
        %681 = vmatmul.mubr.bf16.gmra.mrb[0].mxu0 %v540
        %v682 = vpop.f32.mrb[0].mxu0
        %v683 = vadd.f32 %v566, %v682
        %v684 = vpop.f32.mrb[0].mxu0
        %v685 = vpop.f32.mrb[0].mxu0
        %v686 = vadd.f32 %v566, %v685
        %v687 = vpop.f32.mrb[0].mxu0
        %688 = vmatprep.mubr.bf16.mxu0 0
        %689 = vmatmul.mubr.bf16.gmra.mrb[0].mxu0 %v541
        %v690 = vpop.f32.mrb[0].mxu0
        %v691 = vadd.f32 %v566, %v690
        %v692 = vpop.f32.mrb[0].mxu0
        %v693 = vpop.f32.mrb[0].mxu0
        %v694 = vadd.f32 %v566, %v693
        %v695 = vpop.f32.mrb[0].mxu0
        %696 = vmatprep.mubr.bf16.mxu0 0
        %697 = vmatmul.mubr.bf16.gmra.mrb[0].mxu0 %v542
        %v698 = vpop.f32.mrb[0].mxu0
        %v699 = vadd.f32 %v566, %v698
        %v700 = vpop.f32.mrb[0].mxu0
        %v701 = vpop.f32.mrb[0].mxu0
        %v702 = vadd.f32 %v566, %v701
        %v703 = vpop.f32.mrb[0].mxu0
        %704 = vmatprep.mubr.bf16.mxu0 0
        %705 = vmatmul.mubr.bf16.gmra.mrb[0].mxu0 %v543
        %v706 = vpop.f32.mrb[0].mxu0
        %v707 = vadd.f32 %v566, %v706
        %v708 = vpop.f32.mrb[0].mxu0
        %v709 = vpop.f32.mrb[0].mxu0
        %v710 = vadd.f32 %v566, %v709
        %v711 = vpop.f32.mrb[0].mxu0
        %712 = vdwg.mxu0
        %v713 = vmax.f32 %v651, 0.0
        %v714 = vmax.f32 %v654, 0.0
        %v715 = vmax.f32 %v659, 0.0
        %v716 = vmax.f32 %v662, 0.0
        %v717 = vmax.f32 %v667, 0.0
        %v718 = vmax.f32 %v670, 0.0
        %v719 = vmax.f32 %v675, 0.0
        %v720 = vmax.f32 %v678, 0.0
        %v721 = vmax.f32 %v683, 0.0
        %v722 = vmax.f32 %v686, 0.0
        %v723 = vmax.f32 %v691, 0.0
        %v724 = vmax.f32 %v694, 0.0
        %v725 = vmax.f32 %v699, 0.0
        %v726 = vmax.f32 %v702, 0.0
        %v727 = vmax.f32 %v707, 0.0
        %v728 = vmax.f32 %v710, 0.0
        %v729 = vpack.c.bf16 %v714, %v713
        %v730 = vpack.c.bf16 %v716, %v715
        %v731 = vpack.c.bf16 %v718, %v717
        %v732 = vpack.c.bf16 %v720, %v719
        %v733 = vpack.c.bf16 %v722, %v721
        %v734 = vpack.c.bf16 %v724, %v723
        %v735 = vpack.c.bf16 %v726, %v725
        %v736 = vpack.c.bf16 %v728, %v727
        %s737 = scalar_lea.vmem [#allocation2], 64
        %v738 = vld [vmem:[%s737] sm:$0xf]
        %v739 = vld [vmem:[%s737 + $0x4] sm:$0xf]
        %v740 = vld [vmem:[%s737 + $0x8] sm:$0xf]
        %v741 = vld [vmem:[%s737 + $0xc] sm:$0xf]
        %v742 = vld [vmem:[%s737 + $0x10] sm:$0xf]
        %v743 = vld [vmem:[%s737 + $0x14] sm:$0xf]
        %v744 = vld [vmem:[%s737 + $0x18] sm:$0xf]
        %v745 = vld [vmem:[%s737 + $0x1c] sm:$0xf]
        %v746 = vld [vmem:[%s737 + $0x20] sm:$0xf]
        %v747 = vld [vmem:[%s737 + $0x24] sm:$0xf]
        %v748 = vld [vmem:[%s737 + $0x28] sm:$0xf]
        %v749 = vld [vmem:[%s737 + $0x2c] sm:$0xf]
        %v750 = vld [vmem:[%s737 + $0x30] sm:$0xf]
        %v751 = vld [vmem:[%s737 + $0x34] sm:$0xf]
        %v752 = vld [vmem:[%s737 + $0x38] sm:$0xf]
        %v753 = vld [vmem:[%s737 + $0x3c] sm:$0xf]
        %s754 = scalar_lea.vmem %s4, 2
        %v755 = vld [vmem:[%s754] sm:$0x1]
        %v757 = vlaneseq
        %v758 = vshrl.u32 %v757, 7
        %v759 = vsub.s32 0, %v758
        %v760 = vrot.slane %v755, %v759
        %v778 = vunpack.c.l.b16 %v738
        %v779 = vunpack.c.l.b16 %v739
        %v780 = vunpack.c.l.b16 %v740
        %v781 = vunpack.c.l.b16 %v741
        %v782 = vunpack.c.l.b16 %v742
        %v783 = vunpack.c.l.b16 %v743
        %v784 = vunpack.c.l.b16 %v744
        %v785 = vunpack.c.l.b16 %v745
        %v786 = vunpack.c.l.b16 %v746
        %v787 = vunpack.c.l.b16 %v747
        %v788 = vunpack.c.l.b16 %v748
        %v789 = vunpack.c.l.b16 %v749
        %v790 = vunpack.c.l.b16 %v750
        %v791 = vunpack.c.l.b16 %v751
        %v792 = vunpack.c.l.b16 %v752
        %v793 = vunpack.c.l.b16 %v753
        %v794 = vpack.c.b16 %v779, %v778
        %v795 = vpack.c.b16 %v781, %v780
        %v796 = vpack.c.b16 %v783, %v782
        %v797 = vpack.c.b16 %v785, %v784
        %v798 = vpack.c.b16 %v787, %v786
        %v799 = vpack.c.b16 %v789, %v788
        %v800 = vpack.c.b16 %v791, %v790
        %v801 = vpack.c.b16 %v793, %v792
        %810 = vmatprep.subr.bf16.mxu0 0
        %811 = vmatpush1.bf16.msra.mxu0 %v794
        %812 = vmatprep.subr.bf16.mxu0 0
        %813 = vmatpush1.bf16.msra.mxu0 %v795
        %814 = vmatprep.subr.bf16.mxu0 0
        %815 = vmatpush1.bf16.msra.mxu0 %v796
        %816 = vmatprep.subr.bf16.mxu0 0
        %817 = vmatpush1.bf16.msra.mxu0 %v797
        %818 = vmatprep.subr.bf16.mxu0 0
        %819 = vmatpush1.bf16.msra.mxu0 %v798
        %820 = vmatprep.subr.bf16.mxu0 0
        %821 = vmatpush1.bf16.msra.mxu0 %v799
        %822 = vmatprep.subr.bf16.mxu0 0
        %823 = vmatpush1.bf16.msra.mxu0 %v800
        %824 = vmatprep.subr.bf16.mxu0 0
        %825 = vmatpush1.bf16.msra.mxu0 %v801
        %826 = vmatprep.subr.bf16.mxu0 0
        %827 = vmatpush1.bf16.msra.mxu0 0
        %828 = vmatprep.subr.bf16.mxu0 0
        %829 = vmatpush1.bf16.msra.mxu0 0
        %830 = vmatprep.subr.bf16.mxu0 0
        %831 = vmatpush1.bf16.msra.mxu0 0
        %832 = vmatprep.subr.bf16.mxu0 0
        %833 = vmatpush1.bf16.msra.mxu0 0
        %834 = vmatprep.subr.bf16.mxu0 0
        %835 = vmatpush1.bf16.msra.mxu0 0
        %836 = vmatprep.subr.bf16.mxu0 0
        %837 = vmatpush1.bf16.msra.mxu0 0
        %838 = vmatprep.subr.bf16.mxu0 0
        %839 = vmatpush1.bf16.msra.mxu0 0
        %840 = vmatprep.subr.bf16.mxu0 0
        %841 = vmatpush1.bf16.msra.mxu0 0
        %842 = vmatprep.mubr.bf16.mxu0 0
        %843 = vmatmul.mubr.bf16.gmra.mrb[0].mxu0 %v729
        %v844 = vpop.f32.mrb[0].mxu0
        %v845 = vadd.f32 %v760, %v844
        %v846 = vpop.f32.mrb[0].mxu0
        %v847 = vpop.f32.mrb[0].mxu0
        %v848 = vadd.f32 %v760, %v847
        %v849 = vpop.f32.mrb[0].mxu0
        %850 = vmatprep.mubr.bf16.mxu0 0
        %851 = vmatmul.mubr.bf16.gmra.mrb[0].mxu0 %v730
        %v852 = vpop.f32.mrb[0].mxu0
        %v853 = vadd.f32 %v760, %v852
        %v854 = vpop.f32.mrb[0].mxu0
        %v855 = vpop.f32.mrb[0].mxu0
        %v856 = vadd.f32 %v760, %v855
        %v857 = vpop.f32.mrb[0].mxu0
        %858 = vmatprep.mubr.bf16.mxu0 0
        %859 = vmatmul.mubr.bf16.gmra.mrb[0].mxu0 %v731
        %v860 = vpop.f32.mrb[0].mxu0
        %v861 = vadd.f32 %v760, %v860
        %v862 = vpop.f32.mrb[0].mxu0
        %v863 = vpop.f32.mrb[0].mxu0
        %v864 = vadd.f32 %v760, %v863
        %v865 = vpop.f32.mrb[0].mxu0
        %866 = vmatprep.mubr.bf16.mxu0 0
        %867 = vmatmul.mubr.bf16.gmra.mrb[0].mxu0 %v732
        %v868 = vpop.f32.mrb[0].mxu0
        %v869 = vadd.f32 %v760, %v868
        %v870 = vpop.f32.mrb[0].mxu0
        %v871 = vpop.f32.mrb[0].mxu0
        %v872 = vadd.f32 %v760, %v871
        %v873 = vpop.f32.mrb[0].mxu0
        %874 = vmatprep.mubr.bf16.mxu0 0
        %875 = vmatmul.mubr.bf16.gmra.mrb[0].mxu0 %v733
        %v876 = vpop.f32.mrb[0].mxu0
        %v877 = vadd.f32 %v760, %v876
        %v878 = vpop.f32.mrb[0].mxu0
        %v879 = vpop.f32.mrb[0].mxu0
        %v880 = vadd.f32 %v760, %v879
        %v881 = vpop.f32.mrb[0].mxu0
        %882 = vmatprep.mubr.bf16.mxu0 0
        %883 = vmatmul.mubr.bf16.gmra.mrb[0].mxu0 %v734
        %v884 = vpop.f32.mrb[0].mxu0
        %v885 = vadd.f32 %v760, %v884
        %v886 = vpop.f32.mrb[0].mxu0
        %v887 = vpop.f32.mrb[0].mxu0
        %v888 = vadd.f32 %v760, %v887
        %v889 = vpop.f32.mrb[0].mxu0
        %890 = vmatprep.mubr.bf16.mxu0 0
        %891 = vmatmul.mubr.bf16.gmra.mrb[0].mxu0 %v735
        %v892 = vpop.f32.mrb[0].mxu0
        %v893 = vadd.f32 %v760, %v892
        %v894 = vpop.f32.mrb[0].mxu0
        %v895 = vpop.f32.mrb[0].mxu0
        %v896 = vadd.f32 %v760, %v895
        %v897 = vpop.f32.mrb[0].mxu0
        %898 = vmatprep.mubr.bf16.mxu0 0
        %899 = vmatmul.mubr.bf16.gmra.mrb[0].mxu0 %v736
        %v900 = vpop.f32.mrb[0].mxu0
        %v901 = vadd.f32 %v760, %v900
        %v902 = vpop.f32.mrb[0].mxu0
        %v903 = vpop.f32.mrb[0].mxu0
        %v904 = vadd.f32 %v760, %v903
        %v905 = vpop.f32.mrb[0].mxu0
        %906 = vdwg.mxu0
        %v907 = vmax.f32 %v845, 0.0
        %v908 = vmax.f32 %v848, 0.0
        %v909 = vmax.f32 %v853, 0.0
        %v910 = vmax.f32 %v856, 0.0
        %v911 = vmax.f32 %v861, 0.0
        %v912 = vmax.f32 %v864, 0.0
        %v913 = vmax.f32 %v869, 0.0
        %v914 = vmax.f32 %v872, 0.0
        %v915 = vmax.f32 %v877, 0.0
        %v916 = vmax.f32 %v880, 0.0
        %v917 = vmax.f32 %v885, 0.0
        %v918 = vmax.f32 %v888, 0.0
        %v919 = vmax.f32 %v893, 0.0
        %v920 = vmax.f32 %v896, 0.0
        %v921 = vmax.f32 %v901, 0.0
        %v922 = vmax.f32 %v904, 0.0
        %v923 = vpack.c.bf16 %v908, %v907
        %v924 = vpack.c.bf16 %v910, %v909
        %v925 = vpack.c.bf16 %v912, %v911
        %v926 = vpack.c.bf16 %v914, %v913
        %v927 = vpack.c.bf16 %v916, %v915
        %v928 = vpack.c.bf16 %v918, %v917
        %v929 = vpack.c.bf16 %v920, %v919
        %v930 = vpack.c.bf16 %v922, %v921
        %s931 = scalar_lea.vmem [#allocation2], 128
        %v932 = vld [vmem:[%s931] sm:$0xf]
        %v933 = vld [vmem:[%s931 + $0x4] sm:$0xf]
        %v934 = vld [vmem:[%s931 + $0x8] sm:$0xf]
        %v935 = vld [vmem:[%s931 + $0xc] sm:$0xf]
        %v936 = vld [vmem:[%s931 + $0x10] sm:$0xf]
        %v937 = vld [vmem:[%s931 + $0x14] sm:$0xf]
        %v938 = vld [vmem:[%s931 + $0x18] sm:$0xf]
        %v939 = vld [vmem:[%s931 + $0x1c] sm:$0xf]
        %v940 = vld [vmem:[%s931 + $0x20] sm:$0xf]
        %v941 = vld [vmem:[%s931 + $0x24] sm:$0xf]
        %v942 = vld [vmem:[%s931 + $0x28] sm:$0xf]
        %v943 = vld [vmem:[%s931 + $0x2c] sm:$0xf]
        %v944 = vld [vmem:[%s931 + $0x30] sm:$0xf]
        %v945 = vld [vmem:[%s931 + $0x34] sm:$0xf]
        %v946 = vld [vmem:[%s931 + $0x38] sm:$0xf]
        %v947 = vld [vmem:[%s931 + $0x3c] sm:$0xf]
        %s948 = scalar_lea.vmem %s4, 3
        %v949 = vld [vmem:[%s948] sm:$0x1]
        %v951 = vlaneseq
        %v952 = vshrl.u32 %v951, 7
        %v953 = vsub.s32 0, %v952
        %v954 = vrot.slane %v949, %v953
        %v972 = vunpack.c.l.b16 %v932
        %v973 = vunpack.c.l.b16 %v933
        %v974 = vunpack.c.l.b16 %v934
        %v975 = vunpack.c.l.b16 %v935
        %v976 = vunpack.c.l.b16 %v936
        %v977 = vunpack.c.l.b16 %v937
        %v978 = vunpack.c.l.b16 %v938
        %v979 = vunpack.c.l.b16 %v939
        %v980 = vunpack.c.l.b16 %v940
        %v981 = vunpack.c.l.b16 %v941
        %v982 = vunpack.c.l.b16 %v942
        %v983 = vunpack.c.l.b16 %v943
        %v984 = vunpack.c.l.b16 %v944
        %v985 = vunpack.c.l.b16 %v945
        %v986 = vunpack.c.l.b16 %v946
        %v987 = vunpack.c.l.b16 %v947
        %v988 = vpack.c.b16 %v973, %v972
        %v989 = vpack.c.b16 %v975, %v974
        %v990 = vpack.c.b16 %v977, %v976
        %v991 = vpack.c.b16 %v979, %v978
        %v992 = vpack.c.b16 %v981, %v980
        %v993 = vpack.c.b16 %v983, %v982
        %v994 = vpack.c.b16 %v985, %v984
        %v995 = vpack.c.b16 %v987, %v986
        %1004 = vmatprep.subr.bf16.mxu0 0
        %1005 = vmatpush1.bf16.msra.mxu0 %v988
        %1006 = vmatprep.subr.bf16.mxu0 0
        %1007 = vmatpush1.bf16.msra.mxu0 %v989
        %1008 = vmatprep.subr.bf16.mxu0 0
        %1009 = vmatpush1.bf16.msra.mxu0 %v990
        %1010 = vmatprep.subr.bf16.mxu0 0
        %1011 = vmatpush1.bf16.msra.mxu0 %v991
        %1012 = vmatprep.subr.bf16.mxu0 0
        %1013 = vmatpush1.bf16.msra.mxu0 %v992
        %1014 = vmatprep.subr.bf16.mxu0 0
        %1015 = vmatpush1.bf16.msra.mxu0 %v993
        %1016 = vmatprep.subr.bf16.mxu0 0
        %1017 = vmatpush1.bf16.msra.mxu0 %v994
        %1018 = vmatprep.subr.bf16.mxu0 0
        %1019 = vmatpush1.bf16.msra.mxu0 %v995
        %1020 = vmatprep.subr.bf16.mxu0 0
        %1021 = vmatpush1.bf16.msra.mxu0 0
        %1022 = vmatprep.subr.bf16.mxu0 0
        %1023 = vmatpush1.bf16.msra.mxu0 0
        %1024 = vmatprep.subr.bf16.mxu0 0
        %1025 = vmatpush1.bf16.msra.mxu0 0
        %1026 = vmatprep.subr.bf16.mxu0 0
        %1027 = vmatpush1.bf16.msra.mxu0 0
        %1028 = vmatprep.subr.bf16.mxu0 0
        %1029 = vmatpush1.bf16.msra.mxu0 0
        %1030 = vmatprep.subr.bf16.mxu0 0
        %1031 = vmatpush1.bf16.msra.mxu0 0
        %1032 = vmatprep.subr.bf16.mxu0 0
        %1033 = vmatpush1.bf16.msra.mxu0 0
        %1034 = vmatprep.subr.bf16.mxu0 0
        %1035 = vmatpush1.bf16.msra.mxu0 0
        %1036 = vmatprep.mubr.bf16.mxu0 0
        %1037 = vmatmul.mubr.bf16.gmra.mrb[0].mxu0 %v923
        %v1038 = vpop.f32.mrb[0].mxu0
        %v1039 = vadd.f32 %v954, %v1038
        %v1040 = vpop.f32.mrb[0].mxu0
        %v1041 = vpop.f32.mrb[0].mxu0
        %v1042 = vadd.f32 %v954, %v1041
        %v1043 = vpop.f32.mrb[0].mxu0
        %1044 = vmatprep.mubr.bf16.mxu0 0
        %1045 = vmatmul.mubr.bf16.gmra.mrb[0].mxu0 %v924
        %v1046 = vpop.f32.mrb[0].mxu0
        %v1047 = vadd.f32 %v954, %v1046
        %v1048 = vpop.f32.mrb[0].mxu0
        %v1049 = vpop.f32.mrb[0].mxu0
        %v1050 = vadd.f32 %v954, %v1049
        %v1051 = vpop.f32.mrb[0].mxu0
        %1052 = vmatprep.mubr.bf16.mxu0 0
        %1053 = vmatmul.mubr.bf16.gmra.mrb[0].mxu0 %v925
        %v1054 = vpop.f32.mrb[0].mxu0
        %v1055 = vadd.f32 %v954, %v1054
        %v1056 = vpop.f32.mrb[0].mxu0
        %v1057 = vpop.f32.mrb[0].mxu0
        %v1058 = vadd.f32 %v954, %v1057
        %v1059 = vpop.f32.mrb[0].mxu0
        %1060 = vmatprep.mubr.bf16.mxu0 0
        %1061 = vmatmul.mubr.bf16.gmra.mrb[0].mxu0 %v926
        %v1062 = vpop.f32.mrb[0].mxu0
        %v1063 = vadd.f32 %v954, %v1062
        %v1064 = vpop.f32.mrb[0].mxu0
        %v1065 = vpop.f32.mrb[0].mxu0
        %v1066 = vadd.f32 %v954, %v1065
        %v1067 = vpop.f32.mrb[0].mxu0
        %1068 = vmatprep.mubr.bf16.mxu0 0
        %1069 = vmatmul.mubr.bf16.gmra.mrb[0].mxu0 %v927
        %v1070 = vpop.f32.mrb[0].mxu0
        %v1071 = vadd.f32 %v954, %v1070
        %v1072 = vpop.f32.mrb[0].mxu0
        %v1073 = vpop.f32.mrb[0].mxu0
        %v1074 = vadd.f32 %v954, %v1073
        %v1075 = vpop.f32.mrb[0].mxu0
        %1076 = vmatprep.mubr.bf16.mxu0 0
        %1077 = vmatmul.mubr.bf16.gmra.mrb[0].mxu0 %v928
        %v1078 = vpop.f32.mrb[0].mxu0
        %v1079 = vadd.f32 %v954, %v1078
        %v1080 = vpop.f32.mrb[0].mxu0
        %v1081 = vpop.f32.mrb[0].mxu0
        %v1082 = vadd.f32 %v954, %v1081
        %v1083 = vpop.f32.mrb[0].mxu0
        %1084 = vmatprep.mubr.bf16.mxu0 0
        %1085 = vmatmul.mubr.bf16.gmra.mrb[0].mxu0 %v929
        %v1086 = vpop.f32.mrb[0].mxu0
        %v1087 = vadd.f32 %v954, %v1086
        %v1088 = vpop.f32.mrb[0].mxu0
        %v1089 = vpop.f32.mrb[0].mxu0
        %v1090 = vadd.f32 %v954, %v1089
        %v1091 = vpop.f32.mrb[0].mxu0
        %1092 = vmatprep.mubr.bf16.mxu0 0
        %1093 = vmatmul.mubr.bf16.gmra.mrb[0].mxu0 %v930
        %v1094 = vpop.f32.mrb[0].mxu0
        %v1095 = vadd.f32 %v954, %v1094
        %v1096 = vpop.f32.mrb[0].mxu0
        %v1097 = vpop.f32.mrb[0].mxu0
        %v1098 = vadd.f32 %v954, %v1097
        %v1099 = vpop.f32.mrb[0].mxu0
        %1100 = vdwg.mxu0
        %v1101 = vmax.f32 %v1039, 0.0
        %v1102 = vmax.f32 %v1042, 0.0
        %v1103 = vmax.f32 %v1047, 0.0
        %v1104 = vmax.f32 %v1050, 0.0
        %v1105 = vmax.f32 %v1055, 0.0
        %v1106 = vmax.f32 %v1058, 0.0
        %v1107 = vmax.f32 %v1063, 0.0
        %v1108 = vmax.f32 %v1066, 0.0
        %v1109 = vmax.f32 %v1071, 0.0
        %v1110 = vmax.f32 %v1074, 0.0
        %v1111 = vmax.f32 %v1079, 0.0
        %v1112 = vmax.f32 %v1082, 0.0
        %v1113 = vmax.f32 %v1087, 0.0
        %v1114 = vmax.f32 %v1090, 0.0
        %v1115 = vmax.f32 %v1095, 0.0
        %v1116 = vmax.f32 %v1098, 0.0
        %v1117 = vpack.c.bf16 %v1102, %v1101
        %v1118 = vpack.c.bf16 %v1104, %v1103
        %v1119 = vpack.c.bf16 %v1106, %v1105
        %v1120 = vpack.c.bf16 %v1108, %v1107
        %v1121 = vpack.c.bf16 %v1110, %v1109
        %v1122 = vpack.c.bf16 %v1112, %v1111
        %v1123 = vpack.c.bf16 %v1114, %v1113
        %v1124 = vpack.c.bf16 %v1116, %v1115
        %s1125 = scalar_lea.vmem [#allocation2], 192
        %v1126 = vld [vmem:[%s1125] sm:$0xf]
        %v1127 = vld [vmem:[%s1125 + $0x4] sm:$0xf]
        %v1128 = vld [vmem:[%s1125 + $0x8] sm:$0xf]
        %v1129 = vld [vmem:[%s1125 + $0xc] sm:$0xf]
        %v1130 = vld [vmem:[%s1125 + $0x10] sm:$0xf]
        %v1131 = vld [vmem:[%s1125 + $0x14] sm:$0xf]
        %v1132 = vld [vmem:[%s1125 + $0x18] sm:$0xf]
        %v1133 = vld [vmem:[%s1125 + $0x1c] sm:$0xf]
        %v1134 = vld [vmem:[%s1125 + $0x20] sm:$0xf]
        %v1135 = vld [vmem:[%s1125 + $0x24] sm:$0xf]
        %v1136 = vld [vmem:[%s1125 + $0x28] sm:$0xf]
        %v1137 = vld [vmem:[%s1125 + $0x2c] sm:$0xf]
        %v1138 = vld [vmem:[%s1125 + $0x30] sm:$0xf]
        %v1139 = vld [vmem:[%s1125 + $0x34] sm:$0xf]
        %v1140 = vld [vmem:[%s1125 + $0x38] sm:$0xf]
        %v1141 = vld [vmem:[%s1125 + $0x3c] sm:$0xf]
        %v1158 = vunpack.c.l.b16 %v1126
        %v1159 = vunpack.c.l.b16 %v1127
        %v1160 = vunpack.c.l.b16 %v1128
        %v1161 = vunpack.c.l.b16 %v1129
        %v1162 = vunpack.c.l.b16 %v1130
        %v1163 = vunpack.c.l.b16 %v1131
        %v1164 = vunpack.c.l.b16 %v1132
        %v1165 = vunpack.c.l.b16 %v1133
        %v1166 = vunpack.c.l.b16 %v1134
        %v1167 = vunpack.c.l.b16 %v1135
        %v1168 = vunpack.c.l.b16 %v1136
        %v1169 = vunpack.c.l.b16 %v1137
        %v1170 = vunpack.c.l.b16 %v1138
        %v1171 = vunpack.c.l.b16 %v1139
        %v1172 = vunpack.c.l.b16 %v1140
        %v1173 = vunpack.c.l.b16 %v1141
        %v1174 = vpack.c.b16 %v1159, %v1158
        %v1175 = vpack.c.b16 %v1161, %v1160
        %v1176 = vpack.c.b16 %v1163, %v1162
        %v1177 = vpack.c.b16 %v1165, %v1164
        %v1178 = vpack.c.b16 %v1167, %v1166
        %v1179 = vpack.c.b16 %v1169, %v1168
        %v1180 = vpack.c.b16 %v1171, %v1170
        %v1181 = vpack.c.b16 %v1173, %v1172
        %1190 = vmatprep.subr.bf16.mxu0 0
        %1191 = vmatpush1.bf16.msra.mxu0 %v1174
        %1192 = vmatprep.subr.bf16.mxu0 0
        %1193 = vmatpush1.bf16.msra.mxu0 %v1175
        %1194 = vmatprep.subr.bf16.mxu0 0
        %1195 = vmatpush1.bf16.msra.mxu0 %v1176
        %1196 = vmatprep.subr.bf16.mxu0 0
        %1197 = vmatpush1.bf16.msra.mxu0 %v1177
        %1198 = vmatprep.subr.bf16.mxu0 0
        %1199 = vmatpush1.bf16.msra.mxu0 %v1178
        %1200 = vmatprep.subr.bf16.mxu0 0
        %1201 = vmatpush1.bf16.msra.mxu0 %v1179
        %1202 = vmatprep.subr.bf16.mxu0 0
        %1203 = vmatpush1.bf16.msra.mxu0 %v1180
        %1204 = vmatprep.subr.bf16.mxu0 0
        %1205 = vmatpush1.bf16.msra.mxu0 %v1181
        %1206 = vmatprep.subr.bf16.mxu0 0
        %1207 = vmatpush1.bf16.msra.mxu0 0
        %1208 = vmatprep.subr.bf16.mxu0 0
        %1209 = vmatpush1.bf16.msra.mxu0 0
        %1210 = vmatprep.subr.bf16.mxu0 0
        %1211 = vmatpush1.bf16.msra.mxu0 0
        %1212 = vmatprep.subr.bf16.mxu0 0
        %1213 = vmatpush1.bf16.msra.mxu0 0
        %1214 = vmatprep.subr.bf16.mxu0 0
        %1215 = vmatpush1.bf16.msra.mxu0 0
        %1216 = vmatprep.subr.bf16.mxu0 0
        %1217 = vmatpush1.bf16.msra.mxu0 0
        %1218 = vmatprep.subr.bf16.mxu0 0
        %1219 = vmatpush1.bf16.msra.mxu0 0
        %1220 = vmatprep.subr.bf16.mxu0 0
        %1221 = vmatpush1.bf16.msra.mxu0 0
        %1222 = vmatprep.mubr.bf16.mxu0 0
        %1223 = vmatmul.mubr.bf16.gmra.mrb[0].mxu0 %v1117
        %v1224 = vpop.f32.mrb[0].mxu0
        %v1225 = vadd.f32 %v405, %v1224
        %v1226 = vpop.f32.mrb[0].mxu0
        %v1227 = vpop.f32.mrb[0].mxu0
        %v1228 = vadd.f32 %v411, %v1227
        %v1229 = vpop.f32.mrb[0].mxu0
        %1230 = vmatprep.mubr.bf16.mxu0 0
        %1231 = vmatmul.mubr.bf16.gmra.mrb[0].mxu0 %v1118
        %v1232 = vpop.f32.mrb[0].mxu0
        %v1233 = vadd.f32 %v417, %v1232
        %v1234 = vpop.f32.mrb[0].mxu0
        %v1235 = vpop.f32.mrb[0].mxu0
        %v1236 = vadd.f32 %v423, %v1235
        %v1237 = vpop.f32.mrb[0].mxu0
        %1238 = vmatprep.mubr.bf16.mxu0 0
        %1239 = vmatmul.mubr.bf16.gmra.mrb[0].mxu0 %v1119
        %v1240 = vpop.f32.mrb[0].mxu0
        %v1241 = vadd.f32 %v429, %v1240
        %v1242 = vpop.f32.mrb[0].mxu0
        %v1243 = vpop.f32.mrb[0].mxu0
        %v1244 = vadd.f32 %v435, %v1243
        %v1245 = vpop.f32.mrb[0].mxu0
        %1246 = vmatprep.mubr.bf16.mxu0 0
        %1247 = vmatmul.mubr.bf16.gmra.mrb[0].mxu0 %v1120
        %v1248 = vpop.f32.mrb[0].mxu0
        %v1249 = vadd.f32 %v441, %v1248
        %v1250 = vpop.f32.mrb[0].mxu0
        %v1251 = vpop.f32.mrb[0].mxu0
        %v1252 = vadd.f32 %v447, %v1251
        %v1253 = vpop.f32.mrb[0].mxu0
        %1254 = vmatprep.mubr.bf16.mxu0 0
        %1255 = vmatmul.mubr.bf16.gmra.mrb[0].mxu0 %v1121
        %v1256 = vpop.f32.mrb[0].mxu0
        %v1257 = vadd.f32 %v453, %v1256
        %v1258 = vpop.f32.mrb[0].mxu0
        %v1259 = vpop.f32.mrb[0].mxu0
        %v1260 = vadd.f32 %v459, %v1259
        %v1261 = vpop.f32.mrb[0].mxu0
        %1262 = vmatprep.mubr.bf16.mxu0 0
        %1263 = vmatmul.mubr.bf16.gmra.mrb[0].mxu0 %v1122
        %v1264 = vpop.f32.mrb[0].mxu0
        %v1265 = vadd.f32 %v465, %v1264
        %v1266 = vpop.f32.mrb[0].mxu0
        %v1267 = vpop.f32.mrb[0].mxu0
        %v1268 = vadd.f32 %v471, %v1267
        %v1269 = vpop.f32.mrb[0].mxu0
        %1270 = vmatprep.mubr.bf16.mxu0 0
        %1271 = vmatmul.mubr.bf16.gmra.mrb[0].mxu0 %v1123
        %v1272 = vpop.f32.mrb[0].mxu0
        %v1273 = vadd.f32 %v477, %v1272
        %v1274 = vpop.f32.mrb[0].mxu0
        %v1275 = vpop.f32.mrb[0].mxu0
        %v1276 = vadd.f32 %v483, %v1275
        %v1277 = vpop.f32.mrb[0].mxu0
        %1278 = vmatprep.mubr.bf16.mxu0 0
        %1279 = vmatmul.mubr.bf16.gmra.mrb[0].mxu0 %v1124
        %v1280 = vpop.f32.mrb[0].mxu0
        %v1281 = vadd.f32 %v489, %v1280
        %v1282 = vpop.f32.mrb[0].mxu0
        %v1283 = vpop.f32.mrb[0].mxu0
        %v1284 = vadd.f32 %v495, %v1283
        %v1285 = vpop.f32.mrb[0].mxu0
        %1286 = vdwg.mxu0
        %s1287 = scalar_lea.vmem %s4, 4
        %v1288 = vld [vmem:[%s1287] sm:$0x1]
        %v1290 = vlaneseq
        %v1291 = vshrl.u32 %v1290, 7
        %v1292 = vsub.s32 0, %v1291
        %v1293 = vrot.slane %v1288, %v1292
        %v1295 = vadd.f32 %v1225, %v1293
        %v1296 = vadd.f32 %v1228, %v1293
        %v1297 = vadd.f32 %v1233, %v1293
        %v1298 = vadd.f32 %v1236, %v1293
        %v1299 = vadd.f32 %v1241, %v1293
        %v1300 = vadd.f32 %v1244, %v1293
        %v1301 = vadd.f32 %v1249, %v1293
        %v1302 = vadd.f32 %v1252, %v1293
        %v1303 = vadd.f32 %v1257, %v1293
        %v1304 = vadd.f32 %v1260, %v1293
        %v1305 = vadd.f32 %v1265, %v1293
        %v1306 = vadd.f32 %v1268, %v1293
        %v1307 = vadd.f32 %v1273, %v1293
        %v1308 = vadd.f32 %v1276, %v1293
        %v1309 = vadd.f32 %v1281, %v1293
        %v1310 = vadd.f32 %v1284, %v1293
        %v1311 = vmax.f32 %v1295, 0.0
        %v1312 = vmax.f32 %v1296, 0.0
        %v1313 = vmax.f32 %v1297, 0.0
        %v1314 = vmax.f32 %v1298, 0.0
        %v1315 = vmax.f32 %v1299, 0.0
        %v1316 = vmax.f32 %v1300, 0.0
        %v1317 = vmax.f32 %v1301, 0.0
        %v1318 = vmax.f32 %v1302, 0.0
        %v1319 = vmax.f32 %v1303, 0.0
        %v1320 = vmax.f32 %v1304, 0.0
        %v1321 = vmax.f32 %v1305, 0.0
        %v1322 = vmax.f32 %v1306, 0.0
        %v1323 = vmax.f32 %v1307, 0.0
        %v1324 = vmax.f32 %v1308, 0.0
        %v1325 = vmax.f32 %v1309, 0.0
        %v1326 = vmax.f32 %v1310, 0.0
        %v1327 = vpack.c.bf16 %v1312, %v1311
        %v1328 = vpack.c.bf16 %v1314, %v1313
        %v1329 = vpack.c.bf16 %v1316, %v1315
        %v1330 = vpack.c.bf16 %v1318, %v1317
        %v1331 = vpack.c.bf16 %v1320, %v1319
        %v1332 = vpack.c.bf16 %v1322, %v1321
        %v1333 = vpack.c.bf16 %v1324, %v1323
        %v1334 = vpack.c.bf16 %v1326, %v1325
        %s1335 = scalar_lea.vmem [#allocation2], 256
        %v1336 = vld [vmem:[%s1335] sm:$0xf]
        %v1337 = vld [vmem:[%s1335 + $0x4] sm:$0xf]
        %v1338 = vld [vmem:[%s1335 + $0x8] sm:$0xf]
        %v1339 = vld [vmem:[%s1335 + $0xc] sm:$0xf]
        %v1340 = vld [vmem:[%s1335 + $0x10] sm:$0xf]
        %v1341 = vld [vmem:[%s1335 + $0x14] sm:$0xf]
        %v1342 = vld [vmem:[%s1335 + $0x18] sm:$0xf]
        %v1343 = vld [vmem:[%s1335 + $0x1c] sm:$0xf]
        %v1344 = vld [vmem:[%s1335 + $0x20] sm:$0xf]
        %v1345 = vld [vmem:[%s1335 + $0x24] sm:$0xf]
        %v1346 = vld [vmem:[%s1335 + $0x28] sm:$0xf]
        %v1347 = vld [vmem:[%s1335 + $0x2c] sm:$0xf]
        %v1348 = vld [vmem:[%s1335 + $0x30] sm:$0xf]
        %v1349 = vld [vmem:[%s1335 + $0x34] sm:$0xf]
        %v1350 = vld [vmem:[%s1335 + $0x38] sm:$0xf]
        %v1351 = vld [vmem:[%s1335 + $0x3c] sm:$0xf]
        %s1352 = scalar_lea.vmem %s4, 5
        %v1353 = vld [vmem:[%s1352] sm:$0x1]
        %v1355 = vlaneseq
        %v1356 = vshrl.u32 %v1355, 7
        %v1357 = vsub.s32 0, %v1356
        %v1358 = vrot.slane %v1353, %v1357
        %v1376 = vunpack.c.l.b16 %v1336
        %v1377 = vunpack.c.l.b16 %v1337
        %v1378 = vunpack.c.l.b16 %v1338
        %v1379 = vunpack.c.l.b16 %v1339
        %v1380 = vunpack.c.l.b16 %v1340
        %v1381 = vunpack.c.l.b16 %v1341
        %v1382 = vunpack.c.l.b16 %v1342
        %v1383 = vunpack.c.l.b16 %v1343
        %v1384 = vunpack.c.l.b16 %v1344
        %v1385 = vunpack.c.l.b16 %v1345
        %v1386 = vunpack.c.l.b16 %v1346
        %v1387 = vunpack.c.l.b16 %v1347
        %v1388 = vunpack.c.l.b16 %v1348
        %v1389 = vunpack.c.l.b16 %v1349
        %v1390 = vunpack.c.l.b16 %v1350
        %v1391 = vunpack.c.l.b16 %v1351
        %v1392 = vpack.c.b16 %v1377, %v1376
        %v1393 = vpack.c.b16 %v1379, %v1378
        %v1394 = vpack.c.b16 %v1381, %v1380
        %v1395 = vpack.c.b16 %v1383, %v1382
        %v1396 = vpack.c.b16 %v1385, %v1384
        %v1397 = vpack.c.b16 %v1387, %v1386
        %v1398 = vpack.c.b16 %v1389, %v1388
        %v1399 = vpack.c.b16 %v1391, %v1390
        %1408 = vmatprep.subr.bf16.mxu0 0
        %1409 = vmatpush1.bf16.msra.mxu0 %v1392
        %1410 = vmatprep.subr.bf16.mxu0 0
        %1411 = vmatpush1.bf16.msra.mxu0 %v1393
        %1412 = vmatprep.subr.bf16.mxu0 0
        %1413 = vmatpush1.bf16.msra.mxu0 %v1394
        %1414 = vmatprep.subr.bf16.mxu0 0
        %1415 = vmatpush1.bf16.msra.mxu0 %v1395
        %1416 = vmatprep.subr.bf16.mxu0 0
        %1417 = vmatpush1.bf16.msra.mxu0 %v1396
        %1418 = vmatprep.subr.bf16.mxu0 0
        %1419 = vmatpush1.bf16.msra.mxu0 %v1397
        %1420 = vmatprep.subr.bf16.mxu0 0
        %1421 = vmatpush1.bf16.msra.mxu0 %v1398
        %1422 = vmatprep.subr.bf16.mxu0 0
        %1423 = vmatpush1.bf16.msra.mxu0 %v1399
        %1424 = vmatprep.subr.bf16.mxu0 0
        %1425 = vmatpush1.bf16.msra.mxu0 0
        %1426 = vmatprep.subr.bf16.mxu0 0
        %1427 = vmatpush1.bf16.msra.mxu0 0
        %1428 = vmatprep.subr.bf16.mxu0 0
        %1429 = vmatpush1.bf16.msra.mxu0 0
        %1430 = vmatprep.subr.bf16.mxu0 0
        %1431 = vmatpush1.bf16.msra.mxu0 0
        %1432 = vmatprep.subr.bf16.mxu0 0
        %1433 = vmatpush1.bf16.msra.mxu0 0
        %1434 = vmatprep.subr.bf16.mxu0 0
        %1435 = vmatpush1.bf16.msra.mxu0 0
        %1436 = vmatprep.subr.bf16.mxu0 0
        %1437 = vmatpush1.bf16.msra.mxu0 0
        %1438 = vmatprep.subr.bf16.mxu0 0
        %1439 = vmatpush1.bf16.msra.mxu0 0
        %1440 = vmatprep.mubr.bf16.mxu0 0
        %1441 = vmatmul.mubr.bf16.gmra.mrb[0].mxu0 %v1327
        %v1442 = vpop.f32.mrb[0].mxu0
        %v1443 = vadd.f32 %v1358, %v1442
        %v1444 = vpop.f32.mrb[0].mxu0
        %v1445 = vpop.f32.mrb[0].mxu0
        %v1446 = vadd.f32 %v1358, %v1445
        %v1447 = vpop.f32.mrb[0].mxu0
        %1448 = vmatprep.mubr.bf16.mxu0 0
        %1449 = vmatmul.mubr.bf16.gmra.mrb[0].mxu0 %v1328
        %v1450 = vpop.f32.mrb[0].mxu0
        %v1451 = vadd.f32 %v1358, %v1450
        %v1452 = vpop.f32.mrb[0].mxu0
        %v1453 = vpop.f32.mrb[0].mxu0
        %v1454 = vadd.f32 %v1358, %v1453
        %v1455 = vpop.f32.mrb[0].mxu0
        %1456 = vmatprep.mubr.bf16.mxu0 0
        %1457 = vmatmul.mubr.bf16.gmra.mrb[0].mxu0 %v1329
        %v1458 = vpop.f32.mrb[0].mxu0
        %v1459 = vadd.f32 %v1358, %v1458
        %v1460 = vpop.f32.mrb[0].mxu0
        %v1461 = vpop.f32.mrb[0].mxu0
        %v1462 = vadd.f32 %v1358, %v1461
        %v1463 = vpop.f32.mrb[0].mxu0
        %1464 = vmatprep.mubr.bf16.mxu0 0
        %1465 = vmatmul.mubr.bf16.gmra.mrb[0].mxu0 %v1330
        %v1466 = vpop.f32.mrb[0].mxu0
        %v1467 = vadd.f32 %v1358, %v1466
        %v1468 = vpop.f32.mrb[0].mxu0
        %v1469 = vpop.f32.mrb[0].mxu0
        %v1470 = vadd.f32 %v1358, %v1469
        %v1471 = vpop.f32.mrb[0].mxu0
        %1472 = vmatprep.mubr.bf16.mxu0 0
        %1473 = vmatmul.mubr.bf16.gmra.mrb[0].mxu0 %v1331
        %v1474 = vpop.f32.mrb[0].mxu0
        %v1475 = vadd.f32 %v1358, %v1474
        %v1476 = vpop.f32.mrb[0].mxu0
        %v1477 = vpop.f32.mrb[0].mxu0
        %v1478 = vadd.f32 %v1358, %v1477
        %v1479 = vpop.f32.mrb[0].mxu0
        %1480 = vmatprep.mubr.bf16.mxu0 0
        %1481 = vmatmul.mubr.bf16.gmra.mrb[0].mxu0 %v1332
        %v1482 = vpop.f32.mrb[0].mxu0
        %v1483 = vadd.f32 %v1358, %v1482
        %v1484 = vpop.f32.mrb[0].mxu0
        %v1485 = vpop.f32.mrb[0].mxu0
        %v1486 = vadd.f32 %v1358, %v1485
        %v1487 = vpop.f32.mrb[0].mxu0
        %1488 = vmatprep.mubr.bf16.mxu0 0
        %1489 = vmatmul.mubr.bf16.gmra.mrb[0].mxu0 %v1333
        %v1490 = vpop.f32.mrb[0].mxu0
        %v1491 = vadd.f32 %v1358, %v1490
        %v1492 = vpop.f32.mrb[0].mxu0
        %v1493 = vpop.f32.mrb[0].mxu0
        %v1494 = vadd.f32 %v1358, %v1493
        %v1495 = vpop.f32.mrb[0].mxu0
        %1496 = vmatprep.mubr.bf16.mxu0 0
        %1497 = vmatmul.mubr.bf16.gmra.mrb[0].mxu0 %v1334
        %v1498 = vpop.f32.mrb[0].mxu0
        %v1499 = vadd.f32 %v1358, %v1498
        %v1500 = vpop.f32.mrb[0].mxu0
        %v1501 = vpop.f32.mrb[0].mxu0
        %v1502 = vadd.f32 %v1358, %v1501
        %v1503 = vpop.f32.mrb[0].mxu0
        %1504 = vdwg.mxu0
        %v1505 = vmax.f32 %v1443, 0.0
        %v1506 = vmax.f32 %v1446, 0.0
        %v1507 = vmax.f32 %v1451, 0.0
        %v1508 = vmax.f32 %v1454, 0.0
        %v1509 = vmax.f32 %v1459, 0.0
        %v1510 = vmax.f32 %v1462, 0.0
        %v1511 = vmax.f32 %v1467, 0.0
        %v1512 = vmax.f32 %v1470, 0.0
        %v1513 = vmax.f32 %v1475, 0.0
        %v1514 = vmax.f32 %v1478, 0.0
        %v1515 = vmax.f32 %v1483, 0.0
        %v1516 = vmax.f32 %v1486, 0.0
        %v1517 = vmax.f32 %v1491, 0.0
        %v1518 = vmax.f32 %v1494, 0.0
        %v1519 = vmax.f32 %v1499, 0.0
        %v1520 = vmax.f32 %v1502, 0.0
        %v1521 = vpack.c.bf16 %v1506, %v1505
        %v1522 = vpack.c.bf16 %v1508, %v1507
        %v1523 = vpack.c.bf16 %v1510, %v1509
        %v1524 = vpack.c.bf16 %v1512, %v1511
        %v1525 = vpack.c.bf16 %v1514, %v1513
        %v1526 = vpack.c.bf16 %v1516, %v1515
        %v1527 = vpack.c.bf16 %v1518, %v1517
        %v1528 = vpack.c.bf16 %v1520, %v1519
        %s1529 = scalar_lea.vmem [#allocation2], 320
        %v1530 = vld [vmem:[%s1529] sm:$0xf]
        %v1531 = vld [vmem:[%s1529 + $0x4] sm:$0xf]
        %v1532 = vld [vmem:[%s1529 + $0x8] sm:$0xf]
        %v1533 = vld [vmem:[%s1529 + $0xc] sm:$0xf]
        %v1534 = vld [vmem:[%s1529 + $0x10] sm:$0xf]
        %v1535 = vld [vmem:[%s1529 + $0x14] sm:$0xf]
        %v1536 = vld [vmem:[%s1529 + $0x18] sm:$0xf]
        %v1537 = vld [vmem:[%s1529 + $0x1c] sm:$0xf]
        %v1538 = vld [vmem:[%s1529 + $0x20] sm:$0xf]
        %v1539 = vld [vmem:[%s1529 + $0x24] sm:$0xf]
        %v1540 = vld [vmem:[%s1529 + $0x28] sm:$0xf]
        %v1541 = vld [vmem:[%s1529 + $0x2c] sm:$0xf]
        %v1542 = vld [vmem:[%s1529 + $0x30] sm:$0xf]
        %v1543 = vld [vmem:[%s1529 + $0x34] sm:$0xf]
        %v1544 = vld [vmem:[%s1529 + $0x38] sm:$0xf]
        %v1545 = vld [vmem:[%s1529 + $0x3c] sm:$0xf]
        %s1546 = scalar_lea.vmem %s4, 6
        %v1547 = vld [vmem:[%s1546] sm:$0x1]
        %v1549 = vlaneseq
        %v1550 = vshrl.u32 %v1549, 7
        %v1551 = vsub.s32 0, %v1550
        %v1552 = vrot.slane %v1547, %v1551
        %v1570 = vunpack.c.l.b16 %v1530
        %v1571 = vunpack.c.l.b16 %v1531
        %v1572 = vunpack.c.l.b16 %v1532
        %v1573 = vunpack.c.l.b16 %v1533
        %v1574 = vunpack.c.l.b16 %v1534
        %v1575 = vunpack.c.l.b16 %v1535
        %v1576 = vunpack.c.l.b16 %v1536
        %v1577 = vunpack.c.l.b16 %v1537
        %v1578 = vunpack.c.l.b16 %v1538
        %v1579 = vunpack.c.l.b16 %v1539
        %v1580 = vunpack.c.l.b16 %v1540
        %v1581 = vunpack.c.l.b16 %v1541
        %v1582 = vunpack.c.l.b16 %v1542
        %v1583 = vunpack.c.l.b16 %v1543
        %v1584 = vunpack.c.l.b16 %v1544
        %v1585 = vunpack.c.l.b16 %v1545
        %v1586 = vpack.c.b16 %v1571, %v1570
        %v1587 = vpack.c.b16 %v1573, %v1572
        %v1588 = vpack.c.b16 %v1575, %v1574
        %v1589 = vpack.c.b16 %v1577, %v1576
        %v1590 = vpack.c.b16 %v1579, %v1578
        %v1591 = vpack.c.b16 %v1581, %v1580
        %v1592 = vpack.c.b16 %v1583, %v1582
        %v1593 = vpack.c.b16 %v1585, %v1584
        %1602 = vmatprep.subr.bf16.mxu0 0
        %1603 = vmatpush1.bf16.msra.mxu0 %v1586
        %1604 = vmatprep.subr.bf16.mxu0 0
        %1605 = vmatpush1.bf16.msra.mxu0 %v1587
        %1606 = vmatprep.subr.bf16.mxu0 0
        %1607 = vmatpush1.bf16.msra.mxu0 %v1588
        %1608 = vmatprep.subr.bf16.mxu0 0
        %1609 = vmatpush1.bf16.msra.mxu0 %v1589
        %1610 = vmatprep.subr.bf16.mxu0 0
        %1611 = vmatpush1.bf16.msra.mxu0 %v1590
        %1612 = vmatprep.subr.bf16.mxu0 0
        %1613 = vmatpush1.bf16.msra.mxu0 %v1591
        %1614 = vmatprep.subr.bf16.mxu0 0
        %1615 = vmatpush1.bf16.msra.mxu0 %v1592
        %1616 = vmatprep.subr.bf16.mxu0 0
        %1617 = vmatpush1.bf16.msra.mxu0 %v1593
        %1618 = vmatprep.subr.bf16.mxu0 0
        %1619 = vmatpush1.bf16.msra.mxu0 0
        %1620 = vmatprep.subr.bf16.mxu0 0
        %1621 = vmatpush1.bf16.msra.mxu0 0
        %1622 = vmatprep.subr.bf16.mxu0 0
        %1623 = vmatpush1.bf16.msra.mxu0 0
        %1624 = vmatprep.subr.bf16.mxu0 0
        %1625 = vmatpush1.bf16.msra.mxu0 0
        %1626 = vmatprep.subr.bf16.mxu0 0
        %1627 = vmatpush1.bf16.msra.mxu0 0
        %1628 = vmatprep.subr.bf16.mxu0 0
        %1629 = vmatpush1.bf16.msra.mxu0 0
        %1630 = vmatprep.subr.bf16.mxu0 0
        %1631 = vmatpush1.bf16.msra.mxu0 0
        %1632 = vmatprep.subr.bf16.mxu0 0
        %1633 = vmatpush1.bf16.msra.mxu0 0
        %1634 = vmatprep.mubr.bf16.mxu0 0
        %1635 = vmatmul.mubr.bf16.gmra.mrb[0].mxu0 %v1521
        %v1636 = vpop.f32.mrb[0].mxu0
        %v1637 = vadd.f32 %v1552, %v1636
        %v1638 = vpop.f32.mrb[0].mxu0
        %v1639 = vpop.f32.mrb[0].mxu0
        %v1640 = vadd.f32 %v1552, %v1639
        %v1641 = vpop.f32.mrb[0].mxu0
        %1642 = vmatprep.mubr.bf16.mxu0 0
        %1643 = vmatmul.mubr.bf16.gmra.mrb[0].mxu0 %v1522
        %v1644 = vpop.f32.mrb[0].mxu0
        %v1645 = vadd.f32 %v1552, %v1644
        %v1646 = vpop.f32.mrb[0].mxu0
        %v1647 = vpop.f32.mrb[0].mxu0
        %v1648 = vadd.f32 %v1552, %v1647
        %v1649 = vpop.f32.mrb[0].mxu0
        %1650 = vmatprep.mubr.bf16.mxu0 0
        %1651 = vmatmul.mubr.bf16.gmra.mrb[0].mxu0 %v1523
        %v1652 = vpop.f32.mrb[0].mxu0
        %v1653 = vadd.f32 %v1552, %v1652
        %v1654 = vpop.f32.mrb[0].mxu0
        %v1655 = vpop.f32.mrb[0].mxu0
        %v1656 = vadd.f32 %v1552, %v1655
        %v1657 = vpop.f32.mrb[0].mxu0
        %1658 = vmatprep.mubr.bf16.mxu0 0
        %1659 = vmatmul.mubr.bf16.gmra.mrb[0].mxu0 %v1524
        %v1660 = vpop.f32.mrb[0].mxu0
        %v1661 = vadd.f32 %v1552, %v1660
        %v1662 = vpop.f32.mrb[0].mxu0
        %v1663 = vpop.f32.mrb[0].mxu0
        %v1664 = vadd.f32 %v1552, %v1663
        %v1665 = vpop.f32.mrb[0].mxu0
        %1666 = vmatprep.mubr.bf16.mxu0 0
        %1667 = vmatmul.mubr.bf16.gmra.mrb[0].mxu0 %v1525
        %v1668 = vpop.f32.mrb[0].mxu0
        %v1669 = vadd.f32 %v1552, %v1668
        %v1670 = vpop.f32.mrb[0].mxu0
        %v1671 = vpop.f32.mrb[0].mxu0
        %v1672 = vadd.f32 %v1552, %v1671
        %v1673 = vpop.f32.mrb[0].mxu0
        %1674 = vmatprep.mubr.bf16.mxu0 0
        %1675 = vmatmul.mubr.bf16.gmra.mrb[0].mxu0 %v1526
        %v1676 = vpop.f32.mrb[0].mxu0
        %v1677 = vadd.f32 %v1552, %v1676
        %v1678 = vpop.f32.mrb[0].mxu0
        %v1679 = vpop.f32.mrb[0].mxu0
        %v1680 = vadd.f32 %v1552, %v1679
        %v1681 = vpop.f32.mrb[0].mxu0
        %1682 = vmatprep.mubr.bf16.mxu0 0
        %1683 = vmatmul.mubr.bf16.gmra.mrb[0].mxu0 %v1527
        %v1684 = vpop.f32.mrb[0].mxu0
        %v1685 = vadd.f32 %v1552, %v1684
        %v1686 = vpop.f32.mrb[0].mxu0
        %v1687 = vpop.f32.mrb[0].mxu0
        %v1688 = vadd.f32 %v1552, %v1687
        %v1689 = vpop.f32.mrb[0].mxu0
        %1690 = vmatprep.mubr.bf16.mxu0 0
        %1691 = vmatmul.mubr.bf16.gmra.mrb[0].mxu0 %v1528
        %v1692 = vpop.f32.mrb[0].mxu0
        %v1693 = vadd.f32 %v1552, %v1692
        %v1694 = vpop.f32.mrb[0].mxu0
        %v1695 = vpop.f32.mrb[0].mxu0
        %v1696 = vadd.f32 %v1552, %v1695
        %v1697 = vpop.f32.mrb[0].mxu0
        %1698 = vdwg.mxu0
        %v1699 = vmax.f32 %v1637, 0.0
        %v1700 = vmax.f32 %v1640, 0.0
        %v1701 = vmax.f32 %v1645, 0.0
        %v1702 = vmax.f32 %v1648, 0.0
        %v1703 = vmax.f32 %v1653, 0.0
        %v1704 = vmax.f32 %v1656, 0.0
        %v1705 = vmax.f32 %v1661, 0.0
        %v1706 = vmax.f32 %v1664, 0.0
        %v1707 = vmax.f32 %v1669, 0.0
        %v1708 = vmax.f32 %v1672, 0.0
        %v1709 = vmax.f32 %v1677, 0.0
        %v1710 = vmax.f32 %v1680, 0.0
        %v1711 = vmax.f32 %v1685, 0.0
        %v1712 = vmax.f32 %v1688, 0.0
        %v1713 = vmax.f32 %v1693, 0.0
        %v1714 = vmax.f32 %v1696, 0.0
        %v1715 = vpack.c.bf16 %v1700, %v1699
        %v1716 = vpack.c.bf16 %v1702, %v1701
        %v1717 = vpack.c.bf16 %v1704, %v1703
        %v1718 = vpack.c.bf16 %v1706, %v1705
        %v1719 = vpack.c.bf16 %v1708, %v1707
        %v1720 = vpack.c.bf16 %v1710, %v1709
        %v1721 = vpack.c.bf16 %v1712, %v1711
        %v1722 = vpack.c.bf16 %v1714, %v1713
        %s1723 = scalar_lea.vmem [#allocation2], 384
        %v1724 = vld [vmem:[%s1723] sm:$0xf]
        %v1725 = vld [vmem:[%s1723 + $0x4] sm:$0xf]
        %v1726 = vld [vmem:[%s1723 + $0x8] sm:$0xf]
        %v1727 = vld [vmem:[%s1723 + $0xc] sm:$0xf]
        %v1728 = vld [vmem:[%s1723 + $0x10] sm:$0xf]
        %v1729 = vld [vmem:[%s1723 + $0x14] sm:$0xf]
        %v1730 = vld [vmem:[%s1723 + $0x18] sm:$0xf]
        %v1731 = vld [vmem:[%s1723 + $0x1c] sm:$0xf]
        %v1732 = vld [vmem:[%s1723 + $0x20] sm:$0xf]
        %v1733 = vld [vmem:[%s1723 + $0x24] sm:$0xf]
        %v1734 = vld [vmem:[%s1723 + $0x28] sm:$0xf]
        %v1735 = vld [vmem:[%s1723 + $0x2c] sm:$0xf]
        %v1736 = vld [vmem:[%s1723 + $0x30] sm:$0xf]
        %v1737 = vld [vmem:[%s1723 + $0x34] sm:$0xf]
        %v1738 = vld [vmem:[%s1723 + $0x38] sm:$0xf]
        %v1739 = vld [vmem:[%s1723 + $0x3c] sm:$0xf]
        %s1740 = scalar_lea.vmem %s4, 7
        %v1741 = vld [vmem:[%s1740] sm:$0x1]
        %v1743 = vlaneseq
        %v1744 = vshrl.u32 %v1743, 7
        %v1745 = vsub.s32 0, %v1744
        %v1746 = vrot.slane %v1741, %v1745
        %v1764 = vunpack.c.l.b16 %v1724
        %v1765 = vunpack.c.l.b16 %v1725
        %v1766 = vunpack.c.l.b16 %v1726
        %v1767 = vunpack.c.l.b16 %v1727
        %v1768 = vunpack.c.l.b16 %v1728
        %v1769 = vunpack.c.l.b16 %v1729
        %v1770 = vunpack.c.l.b16 %v1730
        %v1771 = vunpack.c.l.b16 %v1731
        %v1772 = vunpack.c.l.b16 %v1732
        %v1773 = vunpack.c.l.b16 %v1733
        %v1774 = vunpack.c.l.b16 %v1734
        %v1775 = vunpack.c.l.b16 %v1735
        %v1776 = vunpack.c.l.b16 %v1736
        %v1777 = vunpack.c.l.b16 %v1737
        %v1778 = vunpack.c.l.b16 %v1738
        %v1779 = vunpack.c.l.b16 %v1739
        %v1780 = vpack.c.b16 %v1765, %v1764
        %v1781 = vpack.c.b16 %v1767, %v1766
        %v1782 = vpack.c.b16 %v1769, %v1768
        %v1783 = vpack.c.b16 %v1771, %v1770
        %v1784 = vpack.c.b16 %v1773, %v1772
        %v1785 = vpack.c.b16 %v1775, %v1774
        %v1786 = vpack.c.b16 %v1777, %v1776
        %v1787 = vpack.c.b16 %v1779, %v1778
        %1796 = vmatprep.subr.bf16.mxu0 0
        %1797 = vmatpush1.bf16.msra.mxu0 %v1780
        %1798 = vmatprep.subr.bf16.mxu0 0
        %1799 = vmatpush1.bf16.msra.mxu0 %v1781
        %1800 = vmatprep.subr.bf16.mxu0 0
        %1801 = vmatpush1.bf16.msra.mxu0 %v1782
        %1802 = vmatprep.subr.bf16.mxu0 0
        %1803 = vmatpush1.bf16.msra.mxu0 %v1783
        %1804 = vmatprep.subr.bf16.mxu0 0
        %1805 = vmatpush1.bf16.msra.mxu0 %v1784
        %1806 = vmatprep.subr.bf16.mxu0 0
        %1807 = vmatpush1.bf16.msra.mxu0 %v1785
        %1808 = vmatprep.subr.bf16.mxu0 0
        %1809 = vmatpush1.bf16.msra.mxu0 %v1786
        %1810 = vmatprep.subr.bf16.mxu0 0
        %1811 = vmatpush1.bf16.msra.mxu0 %v1787
        %1812 = vmatprep.subr.bf16.mxu0 0
        %1813 = vmatpush1.bf16.msra.mxu0 0
        %1814 = vmatprep.subr.bf16.mxu0 0
        %1815 = vmatpush1.bf16.msra.mxu0 0
        %1816 = vmatprep.subr.bf16.mxu0 0
        %1817 = vmatpush1.bf16.msra.mxu0 0
        %1818 = vmatprep.subr.bf16.mxu0 0
        %1819 = vmatpush1.bf16.msra.mxu0 0
        %1820 = vmatprep.subr.bf16.mxu0 0
        %1821 = vmatpush1.bf16.msra.mxu0 0
        %1822 = vmatprep.subr.bf16.mxu0 0
        %1823 = vmatpush1.bf16.msra.mxu0 0
        %1824 = vmatprep.subr.bf16.mxu0 0
        %1825 = vmatpush1.bf16.msra.mxu0 0
        %1826 = vmatprep.subr.bf16.mxu0 0
        %1827 = vmatpush1.bf16.msra.mxu0 0
        %1828 = vmatprep.mubr.bf16.mxu0 0
        %1829 = vmatmul.mubr.bf16.gmra.mrb[0].mxu0 %v1715
        %v1830 = vpop.f32.mrb[0].mxu0
        %v1831 = vadd.f32 %v1746, %v1830
        %v1832 = vpop.f32.mrb[0].mxu0
        %v1833 = vpop.f32.mrb[0].mxu0
        %v1834 = vadd.f32 %v1746, %v1833
        %v1835 = vpop.f32.mrb[0].mxu0
        %1836 = vmatprep.mubr.bf16.mxu0 0
        %1837 = vmatmul.mubr.bf16.gmra.mrb[0].mxu0 %v1716
        %v1838 = vpop.f32.mrb[0].mxu0
        %v1839 = vadd.f32 %v1746, %v1838
        %v1840 = vpop.f32.mrb[0].mxu0
        %v1841 = vpop.f32.mrb[0].mxu0
        %v1842 = vadd.f32 %v1746, %v1841
        %v1843 = vpop.f32.mrb[0].mxu0
        %1844 = vmatprep.mubr.bf16.mxu0 0
        %1845 = vmatmul.mubr.bf16.gmra.mrb[0].mxu0 %v1717
        %v1846 = vpop.f32.mrb[0].mxu0
        %v1847 = vadd.f32 %v1746, %v1846
        %v1848 = vpop.f32.mrb[0].mxu0
        %v1849 = vpop.f32.mrb[0].mxu0
        %v1850 = vadd.f32 %v1746, %v1849
        %v1851 = vpop.f32.mrb[0].mxu0
        %1852 = vmatprep.mubr.bf16.mxu0 0
        %1853 = vmatmul.mubr.bf16.gmra.mrb[0].mxu0 %v1718
        %v1854 = vpop.f32.mrb[0].mxu0
        %v1855 = vadd.f32 %v1746, %v1854
        %v1856 = vpop.f32.mrb[0].mxu0
        %v1857 = vpop.f32.mrb[0].mxu0
        %v1858 = vadd.f32 %v1746, %v1857
        %v1859 = vpop.f32.mrb[0].mxu0
        %1860 = vmatprep.mubr.bf16.mxu0 0
        %1861 = vmatmul.mubr.bf16.gmra.mrb[0].mxu0 %v1719
        %v1862 = vpop.f32.mrb[0].mxu0
        %v1863 = vadd.f32 %v1746, %v1862
        %v1864 = vpop.f32.mrb[0].mxu0
        %v1865 = vpop.f32.mrb[0].mxu0
        %v1866 = vadd.f32 %v1746, %v1865
        %v1867 = vpop.f32.mrb[0].mxu0
        %1868 = vmatprep.mubr.bf16.mxu0 0
        %1869 = vmatmul.mubr.bf16.gmra.mrb[0].mxu0 %v1720
        %v1870 = vpop.f32.mrb[0].mxu0
        %v1871 = vadd.f32 %v1746, %v1870
        %v1872 = vpop.f32.mrb[0].mxu0
        %v1873 = vpop.f32.mrb[0].mxu0
        %v1874 = vadd.f32 %v1746, %v1873
        %v1875 = vpop.f32.mrb[0].mxu0
        %1876 = vmatprep.mubr.bf16.mxu0 0
        %1877 = vmatmul.mubr.bf16.gmra.mrb[0].mxu0 %v1721
        %v1878 = vpop.f32.mrb[0].mxu0
        %v1879 = vadd.f32 %v1746, %v1878
        %v1880 = vpop.f32.mrb[0].mxu0
        %v1881 = vpop.f32.mrb[0].mxu0
        %v1882 = vadd.f32 %v1746, %v1881
        %v1883 = vpop.f32.mrb[0].mxu0
        %1884 = vmatprep.mubr.bf16.mxu0 0
        %1885 = vmatmul.mubr.bf16.gmra.mrb[0].mxu0 %v1722
        %v1886 = vpop.f32.mrb[0].mxu0
        %v1887 = vadd.f32 %v1746, %v1886
        %v1888 = vpop.f32.mrb[0].mxu0
        %v1889 = vpop.f32.mrb[0].mxu0
        %v1890 = vadd.f32 %v1746, %v1889
        %v1891 = vpop.f32.mrb[0].mxu0
        %1892 = vdwg.mxu0
        %v1893 = vmax.f32 %v1831, 0.0
        %v1894 = vmax.f32 %v1834, 0.0
        %v1895 = vmax.f32 %v1839, 0.0
        %v1896 = vmax.f32 %v1842, 0.0
        %v1897 = vmax.f32 %v1847, 0.0
        %v1898 = vmax.f32 %v1850, 0.0
        %v1899 = vmax.f32 %v1855, 0.0
        %v1900 = vmax.f32 %v1858, 0.0
        %v1901 = vmax.f32 %v1863, 0.0
        %v1902 = vmax.f32 %v1866, 0.0
        %v1903 = vmax.f32 %v1871, 0.0
        %v1904 = vmax.f32 %v1874, 0.0
        %v1905 = vmax.f32 %v1879, 0.0
        %v1906 = vmax.f32 %v1882, 0.0
        %v1907 = vmax.f32 %v1887, 0.0
        %v1908 = vmax.f32 %v1890, 0.0
        %v1909 = vpack.c.bf16 %v1894, %v1893
        %v1910 = vpack.c.bf16 %v1896, %v1895
        %v1911 = vpack.c.bf16 %v1898, %v1897
        %v1912 = vpack.c.bf16 %v1900, %v1899
        %v1913 = vpack.c.bf16 %v1902, %v1901
        %v1914 = vpack.c.bf16 %v1904, %v1903
        %v1915 = vpack.c.bf16 %v1906, %v1905
        %v1916 = vpack.c.bf16 %v1908, %v1907
        %v1917 = vld [vmem:[%s3] sm:$0xf]
        %v1918 = vld [vmem:[%s3 + $0x4] sm:$0xf]
        %v1919 = vld [vmem:[%s3 + $0x8] sm:$0xf]
        %v1920 = vld [vmem:[%s3 + $0xc] sm:$0xf]
        %v1921 = vld [vmem:[%s3 + $0x10] sm:$0xf]
        %v1922 = vld [vmem:[%s3 + $0x14] sm:$0xf]
        %v1923 = vld [vmem:[%s3 + $0x18] sm:$0xf]
        %v1924 = vld [vmem:[%s3 + $0x1c] sm:$0xf]
        %v1925 = vld [vmem:[%s3 + $0x20] sm:$0xf]
        %v1926 = vld [vmem:[%s3 + $0x24] sm:$0xf]
        %v1927 = vld [vmem:[%s3 + $0x28] sm:$0xf]
        %v1928 = vld [vmem:[%s3 + $0x2c] sm:$0xf]
        %v1929 = vld [vmem:[%s3 + $0x30] sm:$0xf]
        %v1930 = vld [vmem:[%s3 + $0x34] sm:$0xf]
        %v1931 = vld [vmem:[%s3 + $0x38] sm:$0xf]
        %v1932 = vld [vmem:[%s3 + $0x3c] sm:$0xf]
        %v1933 = vld [vmem:[%s5] sm:$0x1]
        %v1935 = vlaneseq
        %v1936 = vshrl.u32 %v1935, 7
        %v1937 = vsub.s32 0, %v1936
        %v1938 = vrot.slane %v1933, %v1937
        %v1956 = vunpack.c.l.b16 %v1917
        %v1957 = vunpack.c.l.b16 %v1918
        %v1958 = vunpack.c.l.b16 %v1919
        %v1959 = vunpack.c.l.b16 %v1920
        %v1960 = vunpack.c.l.b16 %v1921
        %v1961 = vunpack.c.l.b16 %v1922
        %v1962 = vunpack.c.l.b16 %v1923
        %v1963 = vunpack.c.l.b16 %v1924
        %v1964 = vunpack.c.l.b16 %v1925
        %v1965 = vunpack.c.l.b16 %v1926
        %v1966 = vunpack.c.l.b16 %v1927
        %v1967 = vunpack.c.l.b16 %v1928
        %v1968 = vunpack.c.l.b16 %v1929
        %v1969 = vunpack.c.l.b16 %v1930
        %v1970 = vunpack.c.l.b16 %v1931
        %v1971 = vunpack.c.l.b16 %v1932
        %v1972 = vpack.c.b16 %v1957, %v1956
        %v1973 = vpack.c.b16 %v1959, %v1958
        %v1974 = vpack.c.b16 %v1961, %v1960
        %v1975 = vpack.c.b16 %v1963, %v1962
        %v1976 = vpack.c.b16 %v1965, %v1964
        %v1977 = vpack.c.b16 %v1967, %v1966
        %v1978 = vpack.c.b16 %v1969, %v1968
        %v1979 = vpack.c.b16 %v1971, %v1970
        %1988 = vmatprep.subr.bf16.mxu0 0
        %1989 = vmatpush1.bf16.msra.mxu0 %v1972
        %1990 = vmatprep.subr.bf16.mxu0 0
        %1991 = vmatpush1.bf16.msra.mxu0 %v1973
        %1992 = vmatprep.subr.bf16.mxu0 0
        %1993 = vmatpush1.bf16.msra.mxu0 %v1974
        %1994 = vmatprep.subr.bf16.mxu0 0
        %1995 = vmatpush1.bf16.msra.mxu0 %v1975
        %1996 = vmatprep.subr.bf16.mxu0 0
        %1997 = vmatpush1.bf16.msra.mxu0 %v1976
        %1998 = vmatprep.subr.bf16.mxu0 0
        %1999 = vmatpush1.bf16.msra.mxu0 %v1977
        %2000 = vmatprep.subr.bf16.mxu0 0
        %2001 = vmatpush1.bf16.msra.mxu0 %v1978
        %2002 = vmatprep.subr.bf16.mxu0 0
        %2003 = vmatpush1.bf16.msra.mxu0 %v1979
        %2004 = vmatprep.subr.bf16.mxu0 0
        %2005 = vmatpush1.bf16.msra.mxu0 0
        %2006 = vmatprep.subr.bf16.mxu0 0
        %2007 = vmatpush1.bf16.msra.mxu0 0
        %2008 = vmatprep.subr.bf16.mxu0 0
        %2009 = vmatpush1.bf16.msra.mxu0 0
        %2010 = vmatprep.subr.bf16.mxu0 0
        %2011 = vmatpush1.bf16.msra.mxu0 0
        %2012 = vmatprep.subr.bf16.mxu0 0
        %2013 = vmatpush1.bf16.msra.mxu0 0
        %2014 = vmatprep.subr.bf16.mxu0 0
        %2015 = vmatpush1.bf16.msra.mxu0 0
        %2016 = vmatprep.subr.bf16.mxu0 0
        %2017 = vmatpush1.bf16.msra.mxu0 0
        %2018 = vmatprep.subr.bf16.mxu0 0
        %2019 = vmatpush1.bf16.msra.mxu0 0
        %2020 = vmatprep.mubr.bf16.mxu0 0
        %2021 = vmatmul.mubr.bf16.gmra.mrb[0].mxu0 %v1909
        %v2022 = vpop.f32.mrb[0].mxu0
        %v2023 = vadd.f32 %v1938, %v2022
        %v2024 = vpop.f32.mrb[0].mxu0
        %v2025 = vpop.f32.mrb[0].mxu0
        %v2026 = vadd.f32 %v1938, %v2025
        %v2027 = vpop.f32.mrb[0].mxu0
        %2028 = vmatprep.mubr.bf16.mxu0 0
        %2029 = vmatmul.mubr.bf16.gmra.mrb[0].mxu0 %v1910
        %v2030 = vpop.f32.mrb[0].mxu0
        %v2031 = vadd.f32 %v1938, %v2030
        %v2032 = vpop.f32.mrb[0].mxu0
        %v2033 = vpop.f32.mrb[0].mxu0
        %v2034 = vadd.f32 %v1938, %v2033
        %v2035 = vpop.f32.mrb[0].mxu0
        %2036 = vmatprep.mubr.bf16.mxu0 0
        %2037 = vmatmul.mubr.bf16.gmra.mrb[0].mxu0 %v1911
        %v2038 = vpop.f32.mrb[0].mxu0
        %v2039 = vadd.f32 %v1938, %v2038
        %v2040 = vpop.f32.mrb[0].mxu0
        %v2041 = vpop.f32.mrb[0].mxu0
        %v2042 = vadd.f32 %v1938, %v2041
        %v2043 = vpop.f32.mrb[0].mxu0
        %2044 = vmatprep.mubr.bf16.mxu0 0
        %2045 = vmatmul.mubr.bf16.gmra.mrb[0].mxu0 %v1912
        %v2046 = vpop.f32.mrb[0].mxu0
        %v2047 = vadd.f32 %v1938, %v2046
        %v2048 = vpop.f32.mrb[0].mxu0
        %v2049 = vpop.f32.mrb[0].mxu0
        %v2050 = vadd.f32 %v1938, %v2049
        %v2051 = vpop.f32.mrb[0].mxu0
        %2052 = vmatprep.mubr.bf16.mxu0 0
        %2053 = vmatmul.mubr.bf16.gmra.mrb[0].mxu0 %v1913
        %v2054 = vpop.f32.mrb[0].mxu0
        %v2055 = vadd.f32 %v1938, %v2054
        %v2056 = vpop.f32.mrb[0].mxu0
        %v2057 = vpop.f32.mrb[0].mxu0
        %v2058 = vadd.f32 %v1938, %v2057
        %v2059 = vpop.f32.mrb[0].mxu0
        %2060 = vmatprep.mubr.bf16.mxu0 0
        %2061 = vmatmul.mubr.bf16.gmra.mrb[0].mxu0 %v1914
        %v2062 = vpop.f32.mrb[0].mxu0
        %v2063 = vadd.f32 %v1938, %v2062
        %v2064 = vpop.f32.mrb[0].mxu0
        %v2065 = vpop.f32.mrb[0].mxu0
        %v2066 = vadd.f32 %v1938, %v2065
        %v2067 = vpop.f32.mrb[0].mxu0
        %2068 = vmatprep.mubr.bf16.mxu0 0
        %2069 = vmatmul.mubr.bf16.gmra.mrb[0].mxu0 %v1915
        %v2070 = vpop.f32.mrb[0].mxu0
        %v2071 = vadd.f32 %v1938, %v2070
        %v2072 = vpop.f32.mrb[0].mxu0
        %v2073 = vpop.f32.mrb[0].mxu0
        %v2074 = vadd.f32 %v1938, %v2073
        %v2075 = vpop.f32.mrb[0].mxu0
        %2076 = vmatprep.mubr.bf16.mxu0 0
        %2077 = vmatmul.mubr.bf16.gmra.mrb[0].mxu0 %v1916
        %v2078 = vpop.f32.mrb[0].mxu0
        %v2079 = vadd.f32 %v1938, %v2078
        %v2080 = vpop.f32.mrb[0].mxu0
        %v2081 = vpop.f32.mrb[0].mxu0
        %v2082 = vadd.f32 %v1938, %v2081
        %v2083 = vpop.f32.mrb[0].mxu0
        %2084 = vdwg.mxu0
        %2085 = vst [vmem:[%s260] sm:$0xff] %v2023
        %2086 = vst [vmem:[%s260 + $0x8] sm:$0xff] %v2026
        %2087 = vst [vmem:[%s260 + $0x10] sm:$0xff] %v2031
        %2088 = vst [vmem:[%s260 + $0x18] sm:$0xff] %v2034
        %2089 = vst [vmem:[%s260 + $0x20] sm:$0xff] %v2039
        %2090 = vst [vmem:[%s260 + $0x28] sm:$0xff] %v2042
        %2091 = vst [vmem:[%s260 + $0x30] sm:$0xff] %v2047
        %2092 = vst [vmem:[%s260 + $0x38] sm:$0xff] %v2050
        %2093 = vst [vmem:[%s260 + $0x40] sm:$0xff] %v2055
        %2094 = vst [vmem:[%s260 + $0x48] sm:$0xff] %v2058
        %2095 = vst [vmem:[%s260 + $0x50] sm:$0xff] %v2063
        %2096 = vst [vmem:[%s260 + $0x58] sm:$0xff] %v2066
        %2097 = vst [vmem:[%s260 + $0x60] sm:$0xff] %v2071
        %2098 = vst [vmem:[%s260 + $0x68] sm:$0xff] %v2074
        %2099 = vst [vmem:[%s260 + $0x70] sm:$0xff] %v2079
        %2100 = vst [vmem:[%s260 + $0x78] sm:$0xff] %v2082
        %s2101 = sand.u32 %s160, 1
        %s2102 = scalar_lea.sflag [#allocation4], %s2101
        %s2103 = sand.u32 %s160, 1
        %s2104 = smul.addr %s2103, 128
        %s2105 = scalar_lea.vmem [#allocation5], %s2104
        // Predicated region
        $region49: #{tpu_custom_call.1} parent=43 // pred_check
          %p2106 = pneg %p170
        $region50: #{tpu_custom_call.1} parent=43 // pred_check_branch
          %2108 = sbr.rel (%p2106) target = $region52
        $region51: #{tpu_custom_call.1} parent=43 // pred_region
          %s2109 = smul.u32 16, %s21
          %s2111 = ssub.s32 2048, 2048
          %2112 = vsyncadd %s2102, %s2111
          %s2113 = smul.addr %s2109, 128
          %s2114 = scalar_lea.hbm %s6, %s2113
          %s2115 = sshll.u32 %s2105, 4
          %s2116 = int_to_ptr.vmem [resolvable:$true] %s2115
          %2121 = dma.vmem_to_hbm [thread:$0]  %s2116, 2048, %s2114, %s2102, 128, 128, 8
        $region52: #{tpu_custom_call.1} parent=43 // pred_fallthru
          _
      $region44: #{tpu_custom_call.1} parent=5 // pred_fallthru
        _
      %p2122 = scmp.le.s32.totalorder 2, %s16
      // Predicated region
      $region53: #{tpu_custom_call.1} parent=5 // pred_check
        %p2123 = pneg %p2122
      $region54: #{tpu_custom_call.1} parent=5 // pred_check_branch
        %2125 = sbr.rel (%p2123) target = $region56
      $region55: #{tpu_custom_call.1} parent=5 // pred_region
        %s2126 = ssub.s32 %s16, 2
        // Predicated region
        $region57: #{tpu_custom_call.1} parent=55 // pred_check
          %p2127 = pneg %p176
        $region58: #{tpu_custom_call.1} parent=55 // pred_check_branch
          %2129 = sbr.rel (%p2127) target = $region60
        $region59: #{tpu_custom_call.1} parent=55 // pred_region
          %s2130 = sand.u32 %s161, 1
          %s2131 = scalar_lea.sflag [#allocation4], %s2130
          %s2132 = sand.u32 %s161, 1
          %s2133 = smul.addr %s2132, 128
          %s2134 = scalar_lea.vmem [#allocation5], %s2133
          %2135 = dma.done %s2131, 2048
        $region60: #{tpu_custom_call.1} parent=55 // pred_fallthru
          _
      $region56: #{tpu_custom_call.1} parent=5 // pred_fallthru
        _
    $region6: #{tpu_custom_call.1} parent=1 // loop_footer
      %s20 = sadd.s32 1, %s16
    $region7: #{tpu_custom_call.1} parent=1 // loop_footer_branch
      %15 = sbr.rel target = $region3
    $region8: #{tpu_custom_call.1} parent=1 // loop_exit
      _
    %2136 = vsyncpa [#allocation3], 1
    %s2137 = scalar_lea.sflag [#allocation3], 1
    %2138 = vsyncpa %s2137, 1
    %2139 = vsyncpa [#allocation4], 1
    %s2140 = scalar_lea.sflag [#allocation4], 1
    %2141 = vsyncpa %s2140, 1

</llo_original>
